<compile_context>
chip_gen: v6e
topology: v6e:2x2x1
jax: 0.10.0
libtpu: 0.0.40
codegen_flags: <defaults>
</compile_context>

<pallas_src>
import functools

import jax
import jax.numpy as jnp
from jax.experimental import pallas as pl
from jax.experimental.pallas import tpu as pltpu


def _round_up(v, m):
    return ((v + m - 1) // m) * m


def _fused_kernel(x_ref, *refs, filter_sizes, seq_len, W, W1, F_pad):
    """Fused: for each fs branch relu(conv1)->relu(conv2)->masked max-pool,
    then concat features and FC, all in VMEM.

    x_ref:  (TB, S_pad, E) bf16, sequence zero-padded to S_pad = W1 + P
    per branch: w1 (fs*E, F_pad) bf16, b1 (1, F_pad) f32,
                w2 (fs*F_pad, F_pad) bf16, b2 (1, F_pad) f32
    w_fc: (nb*F_pad, C_pad) bf16, b_fc: (1, C_pad) f32
    out_ref: (TB, C_pad) f32
    """
    branch_refs = refs[:-3]
    w_fc_ref, b_fc_ref, out_ref = refs[-3], refs[-2], refs[-1]

    # Load once; slice in f32 (sublane slices at arbitrary offsets).
    x = x_ref[...].astype(jnp.float32)          # (TB, S_pad, E)
    TB, _, E = x.shape

    pooled = []
    for i, fs in enumerate(filter_sizes):
        w1 = branch_refs[4 * i + 0][...]        # (fs*E, F_pad)     bf16
        b1 = branch_refs[4 * i + 1][...]        # (1, F_pad)        f32
        w2 = branch_refs[4 * i + 2][...]        # (fs*F_pad, F_pad) bf16
        b2 = branch_refs[4 * i + 3][...]        # (1, F_pad)        f32

        # ---- conv1 as ONE matmul: unfold (TB, W1, fs*E) -> (TB*W1, fs*E).
        x1 = jnp.concatenate([x[:, k:k + W1, :] for k in range(fs)], axis=-1)
        x1 = x1.reshape(TB * W1, fs * E).astype(jnp.bfloat16)
        h1 = jnp.dot(x1, w1, preferred_element_type=jnp.float32)
        h1 = jnp.maximum(h1 + b1, 0.0).reshape(TB, W1, F_pad)   # relu(conv1)

        # ---- conv2 as ONE matmul: unfold (TB, W, fs*F_pad) -> (TB*W, fs*F_pad).
        x2 = jnp.concatenate([h1[:, k:k + W, :] for k in range(fs)], axis=-1)
        x2 = x2.reshape(TB * W, fs * F_pad).astype(jnp.bfloat16)
        h2 = jnp.dot(x2, w2, preferred_element_type=jnp.float32)
        h2 = jnp.maximum(h2 + b2, 0.0).reshape(TB, W, F_pad)    # relu(conv2)

        # ---- global max pool over the valid positions only.
        # Valid conv2 length L2 = S - 2*(fs-1); positions beyond it were computed
        # from zero-padded tails.  ReLU outputs are >= 0, so zero-filling the
        # invalid positions leaves the max unchanged.
        L2 = seq_len - 2 * (fs - 1)
        t_idx = jax.lax.broadcasted_iota(jnp.int32, (TB, W, F_pad), 1)
        h2 = jnp.where(t_idx < L2, h2, 0.0)
        pooled.append(jnp.max(h2, axis=1))                      # (TB, F_pad)

    # ---- concat features + FC, still in VMEM.
    feat = jnp.concatenate(pooled, axis=-1).astype(jnp.bfloat16)  # (TB, nb*F_pad)
    out_ref[...] = (
        jnp.dot(feat, w_fc_ref[...], preferred_element_type=jnp.float32)
        + b_fc_ref[...])


def _prepare_params(params, filter_sizes, E, F, C, F_pad, C_pad):
    """Host-side prep: fold per-tap conv weights into single matmul weights,
    zero-pad the filter/class dims to 128 lanes, cast matmul weights to bf16."""
    prepped = []
    for i, fs in enumerate(filter_sizes):
        w1, b1, w2, b2 = params["branches"][i]
        # w1: (fs, E, F) -> (fs*E, F_pad); row index = k*E + e.
        w1c = jnp.zeros((fs * E, F_pad), jnp.float32).at[:, :F].set(
            w1.reshape(fs * E, F))
        b1p = jnp.zeros((1, F_pad), jnp.float32).at[:, :F].set(b1)
        # w2: (fs, F, F) -> (fs*F_pad, F_pad); row index = k*F_pad + f.
        w2p = jnp.zeros((fs, F_pad, F_pad), jnp.float32).at[:, :F, :F].set(w2)
        w2c = w2p.reshape(fs * F_pad, F_pad)
        b2p = jnp.zeros((1, F_pad), jnp.float32).at[:, :F].set(b2)
        prepped += [w1c.astype(jnp.bfloat16), b1p, w2c.astype(jnp.bfloat16), b2p]

    w_fc, b_fc = params["fc"]
    nb = len(filter_sizes)
    w_fc_p = jnp.zeros((nb * F_pad, C_pad), jnp.float32)
    for i in range(nb):
        w_fc_p = w_fc_p.at[i * F_pad:i * F_pad + F, :C].set(
            w_fc[i * F:(i + 1) * F, :])
    b_fc_p = jnp.zeros((1, C_pad), jnp.float32).at[:, :C].set(b_fc)
    prepped += [w_fc_p.astype(jnp.bfloat16), b_fc_p]
    return prepped


def fasttext_cnn_forward(x, params, filter_sizes, *, block_b=8):
    """Pallas implementation of FastTextCNN.forward (eval mode)."""
    B, S, E = x.shape
    F = params["branches"][0][0].shape[-1]
    C = params["fc"][0].shape[-1]
    F_pad = _round_up(F, 128)
    C_pad = _round_up(C, 128)

    P = max(filter_sizes) - 1
    W = _round_up(S, 8)           # conv2 positions computed per tile (>= every L2)
    W1 = _round_up(W + P, 8)      # conv1 positions computed per tile (>= W + fs - 1)
    S_pad = W1 + P                # input length needed by the conv1 unfold

    TB = block_b if (B % block_b == 0) else B

    # One-time host-side prep: zero-pad sequence + bf16 cast (halves x DMA),
    # fold conv taps into single matmul weights.
    x_prep = jnp.pad(x, ((0, 0), (0, S_pad - S), (0, 0))).astype(jnp.bfloat16)
    weights = _prepare_params(params, filter_sizes, E, F, C, F_pad, C_pad)

    kern = functools.partial(
        _fused_kernel, filter_sizes=tuple(filter_sizes),
        seq_len=S, W=W, W1=W1, F_pad=F_pad)

    in_specs = [pl.BlockSpec((TB, S_pad, E), lambda b: (b, 0, 0))]
    in_specs += [pl.BlockSpec(w.shape, lambda b: (0, 0)) for w in weights]

    out = pl.pallas_call(
        kern,
        grid=(B // TB,),
        in_specs=in_specs,
        out_specs=pl.BlockSpec((TB, C_pad), lambda b: (b, 0)),
        out_shape=jax.ShapeDtypeStruct((B, C_pad), jnp.float32),
        compiler_params=pltpu.CompilerParams(
            dimension_semantics=("parallel",),
            vmem_limit_bytes=32 * 1024 * 1024),
    )(x_prep, *weights)

    # TODO(synk): nn.Dropout is identity in eval mode; stochastic training-mode
    # dropout is intentionally not emulated.
    return out[:, :C]


def init_params(key, embedding_dim, num_filters, filter_sizes, num_classes):
    """Deterministic synthetic parameters matching FastTextCNN.__init__ shapes."""
    branches = []
    for fs in filter_sizes:
        key, k1, k2, k3, k4 = jax.random.split(key, 5)
        # Conv2d(1, F, (fs, E)).weight (F,1,fs,E) stored as (fs, E, F)
        w1 = 0.1 * jax.random.normal(k1, (fs, embedding_dim, num_filters), jnp.float32)
        b1 = 0.1 * jax.random.normal(k2, (1, num_filters), jnp.float32)
        # Conv2d(F, F, (fs, 1)).weight (F,F,fs,1) stored as (fs, F_in, F_out)
        w2 = 0.1 * jax.random.normal(k3, (fs, num_filters, num_filters), jnp.float32)
        b2 = 0.1 * jax.random.normal(k4, (1, num_filters), jnp.float32)
        branches.append((w1, b1, w2, b2))
    key, kf1, kf2 = jax.random.split(key, 3)
    w_fc = 0.1 * jax.random.normal(
        kf1, (len(filter_sizes) * num_filters, num_classes), jnp.float32)
    b_fc = 0.1 * jax.random.normal(kf2, (1, num_classes), jnp.float32)
    return {"branches": branches, "fc": (w_fc, b_fc)}


def _reference_forward(x, params, filter_sizes, matmul_dtype=jnp.float32):
    """Pure-JAX reference.  matmul_dtype=bfloat16 emulates the kernel's
    bf16-operand / f32-accumulate matmuls."""
    B, S, _ = x.shape
    xc = x.astype(matmul_dtype)
    pooled = []
    for i, fs in enumerate(filter_sizes):
        w1, b1, w2, b2 = params["branches"][i]
        L1 = S - fs + 1
        h1 = sum(jnp.einsum("bse,ef->bsf", xc[:, k:k + L1, :],
                            w1[k].astype(matmul_dtype),
                            preferred_element_type=jnp.float32)
                 for k in range(fs))
        h1 = jax.nn.relu(h1 + b1)
        h1c = h1.astype(matmul_dtype)
        L2 = L1 - fs + 1
        h2 = sum(jnp.einsum("bsf,fg->bsg", h1c[:, k:k + L2, :],
                            w2[k].astype(matmul_dtype),
                            preferred_element_type=jnp.float32)
                 for k in range(fs))
        h2 = jax.nn.relu(h2 + b2)
        pooled.append(jnp.max(h2, axis=1))
    feat = jnp.concatenate(pooled, axis=1)
    w_fc, b_fc = params["fc"]
    return (jnp.dot(feat.astype(matmul_dtype), w_fc.astype(matmul_dtype),
                    preferred_element_type=jnp.float32) + b_fc)


if __name__ == "__main__":
    # Small, shape-consistent configuration (batch tiled 2 grid steps of 8).
    batch = 16
    seq_len = 16
    embedding_dim = 64
    num_filters = 8
    filter_sizes = (2, 3, 4)
    num_classes = 4

    key = jax.random.PRNGKey(0)
    key, kx, kp = jax.random.split(key, 3)
    x = jax.random.normal(kx, (batch, seq_len, embedding_dim), jnp.float32)
    params = init_params(kp, embedding_dim, num_filters, filter_sizes, num_classes)

    fwd = jax.jit(functools.partial(fasttext_cnn_forward, filter_sizes=filter_sizes))
    logits = jax.block_until_ready(fwd(x, params))

    assert logits.shape == (batch, num_classes)

    # Strict check against a reference that uses the same bf16 matmul operands.
    ref_bf16 = _reference_forward(x, params, filter_sizes, matmul_dtype=jnp.bfloat16)
    assert jnp.allclose(logits, ref_bf16, atol=1e-2, rtol=1e-2), (
        float(jnp.max(jnp.abs(logits - ref_bf16))))
    # Loose sanity check against the pure-f32 reference.
    ref_f32 = _reference_forward(x, params, filter_sizes, matmul_dtype=jnp.float32)
    assert jnp.allclose(logits, ref_f32, atol=5e-2, rtol=5e-2), (
        float(jnp.max(jnp.abs(logits - ref_f32))))

    print("KERNEL_OK")
</pallas_src>

<mosaic_0001>
module attributes {stable_mosaic.version = 11 : i64} {
  func.func @_fused_kernel(%arg0: i32, %arg1: memref<8x27x64xbf16, #tpu.memory_space<vmem>>, %arg2: memref<128x128xbf16, #tpu.memory_space<vmem>>, %arg3: memref<1x128xf32, #tpu.memory_space<vmem>>, %arg4: memref<256x128xbf16, #tpu.memory_space<vmem>>, %arg5: memref<1x128xf32, #tpu.memory_space<vmem>>, %arg6: memref<192x128xbf16, #tpu.memory_space<vmem>>, %arg7: memref<1x128xf32, #tpu.memory_space<vmem>>, %arg8: memref<384x128xbf16, #tpu.memory_space<vmem>>, %arg9: memref<1x128xf32, #tpu.memory_space<vmem>>, %arg10: memref<256x128xbf16, #tpu.memory_space<vmem>>, %arg11: memref<1x128xf32, #tpu.memory_space<vmem>>, %arg12: memref<512x128xbf16, #tpu.memory_space<vmem>>, %arg13: memref<1x128xf32, #tpu.memory_space<vmem>>, %arg14: memref<384x128xbf16, #tpu.memory_space<vmem>>, %arg15: memref<1x128xf32, #tpu.memory_space<vmem>>, %arg16: memref<8x128xf32, #tpu.memory_space<vmem>>) attributes {dimension_semantics = [#tpu.dimension_semantics<parallel>], iteration_bounds = array<i64: 2>, scalar_prefetch = 0 : i64, scratch_operands = 0 : i64, tpu.core_type = #tpu.core_type<tc>, window_params = [{transform_indices = @transform_0, window_bounds = array<i64: 8, 27, 64>}, {pipeline_mode = #tpu.pipeline_mode<synchronous>, transform_indices = @transform_1, window_bounds = array<i64: 128, 128>}, {pipeline_mode = #tpu.pipeline_mode<synchronous>, transform_indices = @transform_2, window_bounds = array<i64: 1, 128>}, {pipeline_mode = #tpu.pipeline_mode<synchronous>, transform_indices = @transform_3, window_bounds = array<i64: 256, 128>}, {pipeline_mode = #tpu.pipeline_mode<synchronous>, transform_indices = @transform_4, window_bounds = array<i64: 1, 128>}, {pipeline_mode = #tpu.pipeline_mode<synchronous>, transform_indices = @transform_5, window_bounds = array<i64: 192, 128>}, {pipeline_mode = #tpu.pipeline_mode<synchronous>, transform_indices = @transform_6, window_bounds = array<i64: 1, 128>}, {pipeline_mode = #tpu.pipeline_mode<synchronous>, transform_indices = @transform_7, window_bounds = array<i64: 384, 128>}, {pipeline_mode = #tpu.pipeline_mode<synchronous>, transform_indices = @transform_8, window_bounds = array<i64: 1, 128>}, {pipeline_mode = #tpu.pipeline_mode<synchronous>, transform_indices = @transform_9, window_bounds = array<i64: 256, 128>}, {pipeline_mode = #tpu.pipeline_mode<synchronous>, transform_indices = @transform_10, window_bounds = array<i64: 1, 128>}, {pipeline_mode = #tpu.pipeline_mode<synchronous>, transform_indices = @transform_11, window_bounds = array<i64: 512, 128>}, {pipeline_mode = #tpu.pipeline_mode<synchronous>, transform_indices = @transform_12, window_bounds = array<i64: 1, 128>}, {pipeline_mode = #tpu.pipeline_mode<synchronous>, transform_indices = @transform_13, window_bounds = array<i64: 384, 128>}, {pipeline_mode = #tpu.pipeline_mode<synchronous>, transform_indices = @transform_14, window_bounds = array<i64: 1, 128>}, {transform_indices = @transform_15, window_bounds = array<i64: 8, 128>}]} {
    %c0 = arith.constant 0 : index
    %c0_0 = arith.constant 0 : index
    %c0_1 = arith.constant 0 : index
    %0 = vector.load %arg1[%c0, %c0_0, %c0_1] : memref<8x27x64xbf16, #tpu.memory_space<vmem>>, vector<8x27x64xbf16>
    %1 = arith.extf %0 : vector<8x27x64xbf16> to vector<8x27x64xf32>
    %c0_2 = arith.constant 0 : index
    %c0_3 = arith.constant 0 : index
    %2 = vector.load %arg2[%c0_2, %c0_3] : memref<128x128xbf16, #tpu.memory_space<vmem>>, vector<128x128xbf16>
    %c0_4 = arith.constant 0 : index
    %c0_5 = arith.constant 0 : index
    %3 = vector.load %arg3[%c0_4, %c0_5] : memref<1x128xf32, #tpu.memory_space<vmem>>, vector<1x128xf32>
    %c0_6 = arith.constant 0 : index
    %c0_7 = arith.constant 0 : index
    %4 = vector.load %arg4[%c0_6, %c0_7] : memref<256x128xbf16, #tpu.memory_space<vmem>>, vector<256x128xbf16>
    %c0_8 = arith.constant 0 : index
    %c0_9 = arith.constant 0 : index
    %5 = vector.load %arg5[%c0_8, %c0_9] : memref<1x128xf32, #tpu.memory_space<vmem>>, vector<1x128xf32>
    %6 = vector.extract_strided_slice %1 {offsets = [0, 0, 0], sizes = [8, 24, 64], strides = [1, 1, 1]} : vector<8x27x64xf32> to vector<8x24x64xf32>
    %7 = vector.extract_strided_slice %1 {offsets = [0, 1, 0], sizes = [8, 24, 64], strides = [1, 1, 1]} : vector<8x27x64xf32> to vector<8x24x64xf32>
    %8 = tpu.concatenate %6, %7 in 2 : vector<8x24x64xf32>, vector<8x24x64xf32> -> vector<8x24x128xf32>
    %9 = vector.shape_cast %8 : vector<8x24x128xf32> to vector<192x128xf32>
    %10 = arith.truncf %9 : vector<192x128xf32> to vector<192x128xbf16>
    %cst = arith.constant dense<0.000000e+00> : vector<192x128xf32>
    %11 = tpu.matmul %10, %2, %cst {dimension_numbers = #tpu.dot_dimension_numbers<[1], [0], [0], [1], [0, 0, 1, 1], [], []>} : vector<192x128xbf16>, vector<128x128xbf16>, vector<192x128xf32> -> vector<192x128xf32>
    %12 = vector.broadcast %3 : vector<1x128xf32> to vector<192x128xf32>
    %13 = arith.addf %11, %12 : vector<192x128xf32>
    %cst_10 = arith.constant 0.000000e+00 : f32
    %14 = vector.broadcast %cst_10 : f32 to vector<192x128xf32>
    %15 = arith.maximumf %13, %14 : vector<192x128xf32>
    %16 = vector.shape_cast %15 : vector<192x128xf32> to vector<8x24x128xf32>
    %17 = vector.extract_strided_slice %16 {offsets = [0, 0, 0], sizes = [8, 16, 128], strides = [1, 1, 1]} : vector<8x24x128xf32> to vector<8x16x128xf32>
    %18 = vector.extract_strided_slice %16 {offsets = [0, 1, 0], sizes = [8, 16, 128], strides = [1, 1, 1]} : vector<8x24x128xf32> to vector<8x16x128xf32>
    %19 = tpu.concatenate %17, %18 in 2 : vector<8x16x128xf32>, vector<8x16x128xf32> -> vector<8x16x256xf32>
    %20 = vector.shape_cast %19 : vector<8x16x256xf32> to vector<128x256xf32>
    %21 = arith.truncf %20 : vector<128x256xf32> to vector<128x256xbf16>
    %cst_11 = arith.constant dense<0.000000e+00> : vector<128x128xf32>
    %22 = tpu.matmul %21, %4, %cst_11 {dimension_numbers = #tpu.dot_dimension_numbers<[1], [0], [0], [1], [0, 0, 1, 1], [], []>} : vector<128x256xbf16>, vector<256x128xbf16>, vector<128x128xf32> -> vector<128x128xf32>
    %23 = vector.broadcast %5 : vector<1x128xf32> to vector<128x128xf32>
    %24 = arith.addf %22, %23 : vector<128x128xf32>
    %cst_12 = arith.constant 0.000000e+00 : f32
    %25 = vector.broadcast %cst_12 : f32 to vector<128x128xf32>
    %26 = arith.maximumf %24, %25 : vector<128x128xf32>
    %27 = vector.shape_cast %26 : vector<128x128xf32> to vector<8x16x128xf32>
    %28 = tpu.iota {dimensions = array<i32: 1>} : vector<8x16x128xi32>
    %c14_i32 = arith.constant 14 : i32
    %29 = vector.broadcast %c14_i32 : i32 to vector<8x16x128xi32>
    %30 = arith.cmpi slt, %28, %29 : vector<8x16x128xi32>
    %cst_13 = arith.constant 0.000000e+00 : f32
    %31 = vector.broadcast %cst_13 : f32 to vector<8x16x128xf32>
    %32 = arith.select %30, %27, %31 : vector<8x16x128xi1>, vector<8x16x128xf32>
    %cst_14 = arith.constant dense<0xFF800000> : vector<8x128xf32>
    %33 = vector.multi_reduction <maximumf>, %32, %cst_14 [1] : vector<8x16x128xf32> to vector<8x128xf32>
    %c0_15 = arith.constant 0 : index
    %c0_16 = arith.constant 0 : index
    %34 = vector.load %arg6[%c0_15, %c0_16] : memref<192x128xbf16, #tpu.memory_space<vmem>>, vector<192x128xbf16>
    %c0_17 = arith.constant 0 : index
    %c0_18 = arith.constant 0 : index
    %35 = vector.load %arg7[%c0_17, %c0_18] : memref<1x128xf32, #tpu.memory_space<vmem>>, vector<1x128xf32>
    %c0_19 = arith.constant 0 : index
    %c0_20 = arith.constant 0 : index
    %36 = vector.load %arg8[%c0_19, %c0_20] : memref<384x128xbf16, #tpu.memory_space<vmem>>, vector<384x128xbf16>
    %c0_21 = arith.constant 0 : index
    %c0_22 = arith.constant 0 : index
    %37 = vector.load %arg9[%c0_21, %c0_22] : memref<1x128xf32, #tpu.memory_space<vmem>>, vector<1x128xf32>
    %38 = vector.extract_strided_slice %1 {offsets = [0, 0, 0], sizes = [8, 24, 64], strides = [1, 1, 1]} : vector<8x27x64xf32> to vector<8x24x64xf32>
    %39 = vector.extract_strided_slice %1 {offsets = [0, 1, 0], sizes = [8, 24, 64], strides = [1, 1, 1]} : vector<8x27x64xf32> to vector<8x24x64xf32>
    %40 = vector.extract_strided_slice %1 {offsets = [0, 2, 0], sizes = [8, 24, 64], strides = [1, 1, 1]} : vector<8x27x64xf32> to vector<8x24x64xf32>
    %41 = tpu.concatenate %38, %39, %40 in 2 : vector<8x24x64xf32>, vector<8x24x64xf32>, vector<8x24x64xf32> -> vector<8x24x192xf32>
    %42 = vector.shape_cast %41 : vector<8x24x192xf32> to vector<192x192xf32>
    %43 = arith.truncf %42 : vector<192x192xf32> to vector<192x192xbf16>
    %cst_23 = arith.constant dense<0.000000e+00> : vector<192x128xf32>
    %44 = tpu.matmul %43, %34, %cst_23 {dimension_numbers = #tpu.dot_dimension_numbers<[1], [0], [0], [1], [0, 0, 1, 1], [], []>} : vector<192x192xbf16>, vector<192x128xbf16>, vector<192x128xf32> -> vector<192x128xf32>
    %45 = vector.broadcast %35 : vector<1x128xf32> to vector<192x128xf32>
    %46 = arith.addf %44, %45 : vector<192x128xf32>
    %cst_24 = arith.constant 0.000000e+00 : f32
    %47 = vector.broadcast %cst_24 : f32 to vector<192x128xf32>
    %48 = arith.maximumf %46, %47 : vector<192x128xf32>
    %49 = vector.shape_cast %48 : vector<192x128xf32> to vector<8x24x128xf32>
    %50 = vector.extract_strided_slice %49 {offsets = [0, 0, 0], sizes = [8, 16, 128], strides = [1, 1, 1]} : vector<8x24x128xf32> to vector<8x16x128xf32>
    %51 = vector.extract_strided_slice %49 {offsets = [0, 1, 0], sizes = [8, 16, 128], strides = [1, 1, 1]} : vector<8x24x128xf32> to vector<8x16x128xf32>
    %52 = vector.extract_strided_slice %49 {offsets = [0, 2, 0], sizes = [8, 16, 128], strides = [1, 1, 1]} : vector<8x24x128xf32> to vector<8x16x128xf32>
    %53 = tpu.concatenate %50, %51, %52 in 2 : vector<8x16x128xf32>, vector<8x16x128xf32>, vector<8x16x128xf32> -> vector<8x16x384xf32>
    %54 = vector.shape_cast %53 : vector<8x16x384xf32> to vector<128x384xf32>
    %55 = arith.truncf %54 : vector<128x384xf32> to vector<128x384xbf16>
    %cst_25 = arith.constant dense<0.000000e+00> : vector<128x128xf32>
    %56 = tpu.matmul %55, %36, %cst_25 {dimension_numbers = #tpu.dot_dimension_numbers<[1], [0], [0], [1], [0, 0, 1, 1], [], []>} : vector<128x384xbf16>, vector<384x128xbf16>, vector<128x128xf32> -> vector<128x128xf32>
    %57 = vector.broadcast %37 : vector<1x128xf32> to vector<128x128xf32>
    %58 = arith.addf %56, %57 : vector<128x128xf32>
    %cst_26 = arith.constant 0.000000e+00 : f32
    %59 = vector.broadcast %cst_26 : f32 to vector<128x128xf32>
    %60 = arith.maximumf %58, %59 : vector<128x128xf32>
    %61 = vector.shape_cast %60 : vector<128x128xf32> to vector<8x16x128xf32>
    %62 = tpu.iota {dimensions = array<i32: 1>} : vector<8x16x128xi32>
    %c12_i32 = arith.constant 12 : i32
    %63 = vector.broadcast %c12_i32 : i32 to vector<8x16x128xi32>
    %64 = arith.cmpi slt, %62, %63 : vector<8x16x128xi32>
    %cst_27 = arith.constant 0.000000e+00 : f32
    %65 = vector.broadcast %cst_27 : f32 to vector<8x16x128xf32>
    %66 = arith.select %64, %61, %65 : vector<8x16x128xi1>, vector<8x16x128xf32>
    %cst_28 = arith.constant dense<0xFF800000> : vector<8x128xf32>
    %67 = vector.multi_reduction <maximumf>, %66, %cst_28 [1] : vector<8x16x128xf32> to vector<8x128xf32>
    %c0_29 = arith.constant 0 : index
    %c0_30 = arith.constant 0 : index
    %68 = vector.load %arg10[%c0_29, %c0_30] : memref<256x128xbf16, #tpu.memory_space<vmem>>, vector<256x128xbf16>
    %c0_31 = arith.constant 0 : index
    %c0_32 = arith.constant 0 : index
    %69 = vector.load %arg11[%c0_31, %c0_32] : memref<1x128xf32, #tpu.memory_space<vmem>>, vector<1x128xf32>
    %c0_33 = arith.constant 0 : index
    %c0_34 = arith.constant 0 : index
    %70 = vector.load %arg12[%c0_33, %c0_34] : memref<512x128xbf16, #tpu.memory_space<vmem>>, vector<512x128xbf16>
    %c0_35 = arith.constant 0 : index
    %c0_36 = arith.constant 0 : index
    %71 = vector.load %arg13[%c0_35, %c0_36] : memref<1x128xf32, #tpu.memory_space<vmem>>, vector<1x128xf32>
    %72 = vector.extract_strided_slice %1 {offsets = [0, 0, 0], sizes = [8, 24, 64], strides = [1, 1, 1]} : vector<8x27x64xf32> to vector<8x24x64xf32>
    %73 = vector.extract_strided_slice %1 {offsets = [0, 1, 0], sizes = [8, 24, 64], strides = [1, 1, 1]} : vector<8x27x64xf32> to vector<8x24x64xf32>
    %74 = vector.extract_strided_slice %1 {offsets = [0, 2, 0], sizes = [8, 24, 64], strides = [1, 1, 1]} : vector<8x27x64xf32> to vector<8x24x64xf32>
    %75 = vector.extract_strided_slice %1 {offsets = [0, 3, 0], sizes = [8, 24, 64], strides = [1, 1, 1]} : vector<8x27x64xf32> to vector<8x24x64xf32>
    %76 = tpu.concatenate %72, %73, %74, %75 in 2 : vector<8x24x64xf32>, vector<8x24x64xf32>, vector<8x24x64xf32>, vector<8x24x64xf32> -> vector<8x24x256xf32>
    %77 = vector.shape_cast %76 : vector<8x24x256xf32> to vector<192x256xf32>
    %78 = arith.truncf %77 : vector<192x256xf32> to vector<192x256xbf16>
    %cst_37 = arith.constant dense<0.000000e+00> : vector<192x128xf32>
    %79 = tpu.matmul %78, %68, %cst_37 {dimension_numbers = #tpu.dot_dimension_numbers<[1], [0], [0], [1], [0, 0, 1, 1], [], []>} : vector<192x256xbf16>, vector<256x128xbf16>, vector<192x128xf32> -> vector<192x128xf32>
    %80 = vector.broadcast %69 : vector<1x128xf32> to vector<192x128xf32>
    %81 = arith.addf %79, %80 : vector<192x128xf32>
    %cst_38 = arith.constant 0.000000e+00 : f32
    %82 = vector.broadcast %cst_38 : f32 to vector<192x128xf32>
    %83 = arith.maximumf %81, %82 : vector<192x128xf32>
    %84 = vector.shape_cast %83 : vector<192x128xf32> to vector<8x24x128xf32>
    %85 = vector.extract_strided_slice %84 {offsets = [0, 0, 0], sizes = [8, 16, 128], strides = [1, 1, 1]} : vector<8x24x128xf32> to vector<8x16x128xf32>
    %86 = vector.extract_strided_slice %84 {offsets = [0, 1, 0], sizes = [8, 16, 128], strides = [1, 1, 1]} : vector<8x24x128xf32> to vector<8x16x128xf32>
    %87 = vector.extract_strided_slice %84 {offsets = [0, 2, 0], sizes = [8, 16, 128], strides = [1, 1, 1]} : vector<8x24x128xf32> to vector<8x16x128xf32>
    %88 = vector.extract_strided_slice %84 {offsets = [0, 3, 0], sizes = [8, 16, 128], strides = [1, 1, 1]} : vector<8x24x128xf32> to vector<8x16x128xf32>
    %89 = tpu.concatenate %85, %86, %87, %88 in 2 : vector<8x16x128xf32>, vector<8x16x128xf32>, vector<8x16x128xf32>, vector<8x16x128xf32> -> vector<8x16x512xf32>
    %90 = vector.shape_cast %89 : vector<8x16x512xf32> to vector<128x512xf32>
    %91 = arith.truncf %90 : vector<128x512xf32> to vector<128x512xbf16>
    %cst_39 = arith.constant dense<0.000000e+00> : vector<128x128xf32>
    %92 = tpu.matmul %91, %70, %cst_39 {dimension_numbers = #tpu.dot_dimension_numbers<[1], [0], [0], [1], [0, 0, 1, 1], [], []>} : vector<128x512xbf16>, vector<512x128xbf16>, vector<128x128xf32> -> vector<128x128xf32>
    %93 = vector.broadcast %71 : vector<1x128xf32> to vector<128x128xf32>
    %94 = arith.addf %92, %93 : vector<128x128xf32>
    %cst_40 = arith.constant 0.000000e+00 : f32
    %95 = vector.broadcast %cst_40 : f32 to vector<128x128xf32>
    %96 = arith.maximumf %94, %95 : vector<128x128xf32>
    %97 = vector.shape_cast %96 : vector<128x128xf32> to vector<8x16x128xf32>
    %98 = tpu.iota {dimensions = array<i32: 1>} : vector<8x16x128xi32>
    %c10_i32 = arith.constant 10 : i32
    %99 = vector.broadcast %c10_i32 : i32 to vector<8x16x128xi32>
    %100 = arith.cmpi slt, %98, %99 : vector<8x16x128xi32>
    %cst_41 = arith.constant 0.000000e+00 : f32
    %101 = vector.broadcast %cst_41 : f32 to vector<8x16x128xf32>
    %102 = arith.select %100, %97, %101 : vector<8x16x128xi1>, vector<8x16x128xf32>
    %cst_42 = arith.constant dense<0xFF800000> : vector<8x128xf32>
    %103 = vector.multi_reduction <maximumf>, %102, %cst_42 [1] : vector<8x16x128xf32> to vector<8x128xf32>
    %104 = tpu.concatenate %33, %67, %103 in 1 : vector<8x128xf32>, vector<8x128xf32>, vector<8x128xf32> -> vector<8x384xf32>
    %105 = arith.truncf %104 : vector<8x384xf32> to vector<8x384xbf16>
    %c0_43 = arith.constant 0 : index
    %c0_44 = arith.constant 0 : index
    %106 = vector.load %arg14[%c0_43, %c0_44] : memref<384x128xbf16, #tpu.memory_space<vmem>>, vector<384x128xbf16>
    %cst_45 = arith.constant dense<0.000000e+00> : vector<8x128xf32>
    %107 = tpu.matmul %105, %106, %cst_45 {dimension_numbers = #tpu.dot_dimension_numbers<[1], [0], [0], [1], [0, 0, 1, 1], [], []>} : vector<8x384xbf16>, vector<384x128xbf16>, vector<8x128xf32> -> vector<8x128xf32>
    %c0_46 = arith.constant 0 : index
    %c0_47 = arith.constant 0 : index
    %108 = vector.load %arg15[%c0_46, %c0_47] : memref<1x128xf32, #tpu.memory_space<vmem>>, vector<1x128xf32>
    %109 = vector.broadcast %108 : vector<1x128xf32> to vector<8x128xf32>
    %110 = arith.addf %107, %109 : vector<8x128xf32>
    %c0_48 = arith.constant 0 : index
    %c0_49 = arith.constant 0 : index
    %111 = vector.load %arg16[%c0_48, %c0_49] : memref<8x128xf32, #tpu.memory_space<vmem>>, vector<8x128xf32>
    tpu.vector_store %arg16[%c0_48, %c0_49], %110 {strides = array<i32>} : memref<8x128xf32, #tpu.memory_space<vmem>>, vector<8x128xf32>,
    return
  }
  func.func @transform_0(%arg0: i32) -> (i32, i32, i32) {
    %c0_i32 = arith.constant 0 : i32
    %c0_i32_0 = arith.constant 0 : i32
    %c0_i32_1 = arith.constant 0 : i32
    return %arg0, %c0_i32, %c0_i32_0 : i32, i32, i32
  }
  func.func @transform_1(%arg0: i32) -> (i32, i32) {
    %c0_i32 = arith.constant 0 : i32
    %c0_i32_0 = arith.constant 0 : i32
    %c0_i32_1 = arith.constant 0 : i32
    return %c0_i32, %c0_i32_0 : i32, i32
  }
  func.func @transform_2(%arg0: i32) -> (i32, i32) {
    %c0_i32 = arith.constant 0 : i32
    %c0_i32_0 = arith.constant 0 : i32
    %c0_i32_1 = arith.constant 0 : i32
    return %c0_i32, %c0_i32_0 : i32, i32
  }
  func.func @transform_3(%arg0: i32) -> (i32, i32) {
    %c0_i32 = arith.constant 0 : i32
    %c0_i32_0 = arith.constant 0 : i32
    %c0_i32_1 = arith.constant 0 : i32
    return %c0_i32, %c0_i32_0 : i32, i32
  }
  func.func @transform_4(%arg0: i32) -> (i32, i32) {
    %c0_i32 = arith.constant 0 : i32
    %c0_i32_0 = arith.constant 0 : i32
    %c0_i32_1 = arith.constant 0 : i32
    return %c0_i32, %c0_i32_0 : i32, i32
  }
  func.func @transform_5(%arg0: i32) -> (i32, i32) {
    %c0_i32 = arith.constant 0 : i32
    %c0_i32_0 = arith.constant 0 : i32
    %c0_i32_1 = arith.constant 0 : i32
    return %c0_i32, %c0_i32_0 : i32, i32
  }
  func.func @transform_6(%arg0: i32) -> (i32, i32) {
    %c0_i32 = arith.constant 0 : i32
    %c0_i32_0 = arith.constant 0 : i32
    %c0_i32_1 = arith.constant 0 : i32
    return %c0_i32, %c0_i32_0 : i32, i32
  }
  func.func @transform_7(%arg0: i32) -> (i32, i32) {
    %c0_i32 = arith.constant 0 : i32
    %c0_i32_0 = arith.constant 0 : i32
    %c0_i32_1 = arith.constant 0 : i32
    return %c0_i32, %c0_i32_0 : i32, i32
  }
  func.func @transform_8(%arg0: i32) -> (i32, i32) {
    %c0_i32 = arith.constant 0 : i32
    %c0_i32_0 = arith.constant 0 : i32
    %c0_i32_1 = arith.constant 0 : i32
    return %c0_i32, %c0_i32_0 : i32, i32
  }
  func.func @transform_9(%arg0: i32) -> (i32, i32) {
    %c0_i32 = arith.constant 0 : i32
    %c0_i32_0 = arith.constant 0 : i32
    %c0_i32_1 = arith.constant 0 : i32
    return %c0_i32, %c0_i32_0 : i32, i32
  }
  func.func @transform_10(%arg0: i32) -> (i32, i32) {
    %c0_i32 = arith.constant 0 : i32
    %c0_i32_0 = arith.constant 0 : i32
    %c0_i32_1 = arith.constant 0 : i32
    return %c0_i32, %c0_i32_0 : i32, i32
  }
  func.func @transform_11(%arg0: i32) -> (i32, i32) {
    %c0_i32 = arith.constant 0 : i32
    %c0_i32_0 = arith.constant 0 : i32
    %c0_i32_1 = arith.constant 0 : i32
    return %c0_i32, %c0_i32_0 : i32, i32
  }
  func.func @transform_12(%arg0: i32) -> (i32, i32) {
    %c0_i32 = arith.constant 0 : i32
    %c0_i32_0 = arith.constant 0 : i32
    %c0_i32_1 = arith.constant 0 : i32
    return %c0_i32, %c0_i32_0 : i32, i32
  }
  func.func @transform_13(%arg0: i32) -> (i32, i32) {
    %c0_i32 = arith.constant 0 : i32
    %c0_i32_0 = arith.constant 0 : i32
    %c0_i32_1 = arith.constant 0 : i32
    return %c0_i32, %c0_i32_0 : i32, i32
  }
  func.func @transform_14(%arg0: i32) -> (i32, i32) {
    %c0_i32 = arith.constant 0 : i32
    %c0_i32_0 = arith.constant 0 : i32
    %c0_i32_1 = arith.constant 0 : i32
    return %c0_i32, %c0_i32_0 : i32, i32
  }
  func.func @transform_15(%arg0: i32) -> (i32, i32) {
    %c0_i32 = arith.constant 0 : i32
    %c0_i32_0 = arith.constant 0 : i32
    return %arg0, %c0_i32 : i32, i32
  }
}

</mosaic_0001>

<llo_original>
// kernel: fasttext_cnn_forward.1
$region0: #{fasttext_cnn_forward.1}
  #allocation0 [shape = 'u32[]', space=smem, size = 0x4, offset = 0x4, fixed_abs, tag = 'smem constant byte address 0x4 - core index']
  #allocation1 [shape = 'u32[144,128]{1,0:T(1,128)}', space=vmem, size = 0x12000, scoped, tag = 'internal scratch']
  %s0 = inlined_call_operand.vmem [shape: bf16[16,27,64], index: 0, kind: input, shape index: {}]
  %s1 = inlined_call_operand.vmem [shape: bf16[128,128], index: 1, kind: input, shape index: {}]
  %s2 = inlined_call_operand.vmem [shape: f32[1,128], index: 2, kind: input, shape index: {}]
  %s3 = inlined_call_operand.vmem [shape: bf16[256,128], index: 3, kind: input, shape index: {}]
  %s4 = inlined_call_operand.vmem [shape: f32[1,128], index: 4, kind: input, shape index: {}]
  %s5 = inlined_call_operand.vmem [shape: bf16[192,128], index: 5, kind: input, shape index: {}]
  %s6 = inlined_call_operand.vmem [shape: f32[1,128], index: 6, kind: input, shape index: {}]
  %s7 = inlined_call_operand.vmem [shape: bf16[384,128], index: 7, kind: input, shape index: {}]
  %s8 = inlined_call_operand.vmem [shape: f32[1,128], index: 8, kind: input, shape index: {}]
  %s9 = inlined_call_operand.vmem [shape: bf16[256,128], index: 9, kind: input, shape index: {}]
  %s10 = inlined_call_operand.vmem [shape: f32[1,128], index: 10, kind: input, shape index: {}]
  %s11 = inlined_call_operand.vmem [shape: bf16[512,128], index: 11, kind: input, shape index: {}]
  %s12 = inlined_call_operand.vmem [shape: f32[1,128], index: 12, kind: input, shape index: {}]
  %s13 = inlined_call_operand.vmem [shape: bf16[384,128], index: 13, kind: input, shape index: {}]
  %s14 = inlined_call_operand.vmem [shape: f32[1,128], index: 14, kind: input, shape index: {}]
  %s15 = inlined_call_operand.vmem [shape: f32[16,128], index: 15, kind: output, shape index: {}]
  %s16 = sld [smem:[#allocation0]]
  $region93: #{fasttext_cnn_forward.1} parent=0
    _
  %s18 = ssub.s32 1, %s16
  %s19 = scalar_select 0, %s18, %s16
  loop: start=0, step=1, limit=4
  $region2: #{fasttext_cnn_forward.1} parent=0 // loop_pre_header
    _
  $region3: #{fasttext_cnn_forward.1} parent=0 // loop_header
    %s21 = sphi 0, %s25
    %p22 = scmp.ge.s32.totalorder %s21, 4
    %s31 = sphi 0, %s33
    %s34 = sphi 0, %s31
    %s35 = sphi 0, %s34
    %s51 = sphi 0, %s35
    %s55 = sphi 0, %s55
    %s57 = sphi 0, %s55
    %s58 = sphi 0, %s57
    %s72 = sphi 0, %s58
    %s76 = sphi 0, %s76
    %s78 = sphi 0, %s76
    %s79 = sphi 0, %s78
    %s93 = sphi 0, %s79
    %s97 = sphi 0, %s97
    %s99 = sphi 0, %s97
    %s100 = sphi 0, %s99
    %s114 = sphi 0, %s100
    %s118 = sphi 0, %s118
    %s120 = sphi 0, %s118
    %s121 = sphi 0, %s120
    %s135 = sphi 0, %s121
    %s139 = sphi 0, %s139
    %s141 = sphi 0, %s139
    %s142 = sphi 0, %s141
    %s156 = sphi 0, %s142
    %s160 = sphi 0, %s160
    %s162 = sphi 0, %s160
    %s163 = sphi 0, %s162
    %s177 = sphi 0, %s163
    %s181 = sphi 0, %s181
    %s183 = sphi 0, %s181
    %s184 = sphi 0, %s183
    %s198 = sphi 0, %s184
    %s202 = sphi 0, %s202
    %s204 = sphi 0, %s202
    %s205 = sphi 0, %s204
    %s219 = sphi 0, %s205
    %s223 = sphi 0, %s223
    %s225 = sphi 0, %s223
    %s226 = sphi 0, %s225
    %s240 = sphi 0, %s226
    %s244 = sphi 0, %s244
    %s246 = sphi 0, %s244
    %s247 = sphi 0, %s246
    %s261 = sphi 0, %s247
    %s265 = sphi 0, %s265
    %s267 = sphi 0, %s265
    %s268 = sphi 0, %s267
    %s282 = sphi 0, %s268
    %s286 = sphi 0, %s286
    %s288 = sphi 0, %s286
    %s289 = sphi 0, %s288
    %s303 = sphi 0, %s289
    %s307 = sphi 0, %s307
    %s309 = sphi 0, %s307
    %s310 = sphi 0, %s309
    %s324 = sphi 0, %s310
    %s328 = sphi 0, %s328
    %s330 = sphi 0, %s328
    %s331 = sphi 0, %s330
    %s345 = sphi 0, %s331
    %s351 = sphi 0, %s353
    %s354 = sphi 0, %s351
    %s355 = sphi 0, %s354
    %s371 = sphi 0, %s355
  $region4: #{fasttext_cnn_forward.1} parent=0 // loop_header_branch
    %24 = sbr.rel (%p22) target = $region8
  $region5: #{fasttext_cnn_forward.1} parent=0 // loop_body
    %s26 = ssub.s32 %s21, 1
    %s27 = ssub.s32 %s21, 2
    %s28 = sadd.s32 %s21, 1
    %s29 = ssub.s32 %s21, %s28
    %p30 = scmp.eq.s32.totalorder %s29, 0
    %s32 = sadd.s32 %s31, 1
    %s33 = scalar_select %p30, %s31, %s32
    %p36 = pneg %p30
    %p37 = scmp.eq.s32.totalorder %s21, 1
    %p38 = por %p36, %p37
    %p39 = scmp.ne.s32.totalorder %s31, %s34
    %p40 = scmp.eq.s32.totalorder %s21, 0
    %p41 = por %p39, %p40
    %p42 = scmp.ne.s32.totalorder %s31, %s34
    %p43 = scmp.eq.s32.totalorder %s26, 1
    %p44 = por %p42, %p43
    %p45 = scmp.ne.s32.totalorder %s34, %s35
    %p46 = scmp.eq.s32.totalorder %s26, 0
    %p47 = por %p45, %p46
    %p48 = scmp.ne.s32.totalorder %s34, %s35
    %p49 = scmp.eq.s32.totalorder %s27, 1
    %p50 = por %p48, %p49
    %p52 = scmp.ne.s32.totalorder %s35, %s51
    %p53 = scmp.eq.s32.totalorder %s27, 0
    %p54 = por %p52, %p53
    %s56 = sadd.s32 %s55, 1
    %p59 = scmp.eq.s32.totalorder %s21, 1
    %p60 = scmp.ne.s32.totalorder %s55, %s57
    %p61 = scmp.eq.s32.totalorder %s21, 0
    %p62 = por %p60, %p61
    %p63 = scmp.ne.s32.totalorder %s55, %s57
    %p64 = scmp.eq.s32.totalorder %s26, 1
    %p65 = por %p63, %p64
    %p66 = scmp.ne.s32.totalorder %s57, %s58
    %p67 = scmp.eq.s32.totalorder %s26, 0
    %p68 = por %p66, %p67
    %p69 = scmp.ne.s32.totalorder %s57, %s58
    %p70 = scmp.eq.s32.totalorder %s27, 1
    %p71 = por %p69, %p70
    %p73 = scmp.ne.s32.totalorder %s58, %s72
    %p74 = scmp.eq.s32.totalorder %s27, 0
    %p75 = por %p73, %p74
    %s77 = sadd.s32 %s76, 1
    %p80 = scmp.eq.s32.totalorder %s21, 1
    %p81 = scmp.ne.s32.totalorder %s76, %s78
    %p82 = scmp.eq.s32.totalorder %s21, 0
    %p83 = por %p81, %p82
    %p84 = scmp.ne.s32.totalorder %s76, %s78
    %p85 = scmp.eq.s32.totalorder %s26, 1
    %p86 = por %p84, %p85
    %p87 = scmp.ne.s32.totalorder %s78, %s79
    %p88 = scmp.eq.s32.totalorder %s26, 0
    %p89 = por %p87, %p88
    %p90 = scmp.ne.s32.totalorder %s78, %s79
    %p91 = scmp.eq.s32.totalorder %s27, 1
    %p92 = por %p90, %p91
    %p94 = scmp.ne.s32.totalorder %s79, %s93
    %p95 = scmp.eq.s32.totalorder %s27, 0
    %p96 = por %p94, %p95
    %s98 = sadd.s32 %s97, 1
    %p101 = scmp.eq.s32.totalorder %s21, 1
    %p102 = scmp.ne.s32.totalorder %s97, %s99
    %p103 = scmp.eq.s32.totalorder %s21, 0
    %p104 = por %p102, %p103
    %p105 = scmp.ne.s32.totalorder %s97, %s99
    %p106 = scmp.eq.s32.totalorder %s26, 1
    %p107 = por %p105, %p106
    %p108 = scmp.ne.s32.totalorder %s99, %s100
    %p109 = scmp.eq.s32.totalorder %s26, 0
    %p110 = por %p108, %p109
    %p111 = scmp.ne.s32.totalorder %s99, %s100
    %p112 = scmp.eq.s32.totalorder %s27, 1
    %p113 = por %p111, %p112
    %p115 = scmp.ne.s32.totalorder %s100, %s114
    %p116 = scmp.eq.s32.totalorder %s27, 0
    %p117 = por %p115, %p116
    %s119 = sadd.s32 %s118, 1
    %p122 = scmp.eq.s32.totalorder %s21, 1
    %p123 = scmp.ne.s32.totalorder %s118, %s120
    %p124 = scmp.eq.s32.totalorder %s21, 0
    %p125 = por %p123, %p124
    %p126 = scmp.ne.s32.totalorder %s118, %s120
    %p127 = scmp.eq.s32.totalorder %s26, 1
    %p128 = por %p126, %p127
    %p129 = scmp.ne.s32.totalorder %s120, %s121
    %p130 = scmp.eq.s32.totalorder %s26, 0
    %p131 = por %p129, %p130
    %p132 = scmp.ne.s32.totalorder %s120, %s121
    %p133 = scmp.eq.s32.totalorder %s27, 1
    %p134 = por %p132, %p133
    %p136 = scmp.ne.s32.totalorder %s121, %s135
    %p137 = scmp.eq.s32.totalorder %s27, 0
    %p138 = por %p136, %p137
    %s140 = sadd.s32 %s139, 1
    %p143 = scmp.eq.s32.totalorder %s21, 1
    %p144 = scmp.ne.s32.totalorder %s139, %s141
    %p145 = scmp.eq.s32.totalorder %s21, 0
    %p146 = por %p144, %p145
    %p147 = scmp.ne.s32.totalorder %s139, %s141
    %p148 = scmp.eq.s32.totalorder %s26, 1
    %p149 = por %p147, %p148
    %p150 = scmp.ne.s32.totalorder %s141, %s142
    %p151 = scmp.eq.s32.totalorder %s26, 0
    %p152 = por %p150, %p151
    %p153 = scmp.ne.s32.totalorder %s141, %s142
    %p154 = scmp.eq.s32.totalorder %s27, 1
    %p155 = por %p153, %p154
    %p157 = scmp.ne.s32.totalorder %s142, %s156
    %p158 = scmp.eq.s32.totalorder %s27, 0
    %p159 = por %p157, %p158
    %s161 = sadd.s32 %s160, 1
    %p164 = scmp.eq.s32.totalorder %s21, 1
    %p165 = scmp.ne.s32.totalorder %s160, %s162
    %p166 = scmp.eq.s32.totalorder %s21, 0
    %p167 = por %p165, %p166
    %p168 = scmp.ne.s32.totalorder %s160, %s162
    %p169 = scmp.eq.s32.totalorder %s26, 1
    %p170 = por %p168, %p169
    %p171 = scmp.ne.s32.totalorder %s162, %s163
    %p172 = scmp.eq.s32.totalorder %s26, 0
    %p173 = por %p171, %p172
    %p174 = scmp.ne.s32.totalorder %s162, %s163
    %p175 = scmp.eq.s32.totalorder %s27, 1
    %p176 = por %p174, %p175
    %p178 = scmp.ne.s32.totalorder %s163, %s177
    %p179 = scmp.eq.s32.totalorder %s27, 0
    %p180 = por %p178, %p179
    %s182 = sadd.s32 %s181, 1
    %p185 = scmp.eq.s32.totalorder %s21, 1
    %p186 = scmp.ne.s32.totalorder %s181, %s183
    %p187 = scmp.eq.s32.totalorder %s21, 0
    %p188 = por %p186, %p187
    %p189 = scmp.ne.s32.totalorder %s181, %s183
    %p190 = scmp.eq.s32.totalorder %s26, 1
    %p191 = por %p189, %p190
    %p192 = scmp.ne.s32.totalorder %s183, %s184
    %p193 = scmp.eq.s32.totalorder %s26, 0
    %p194 = por %p192, %p193
    %p195 = scmp.ne.s32.totalorder %s183, %s184
    %p196 = scmp.eq.s32.totalorder %s27, 1
    %p197 = por %p195, %p196
    %p199 = scmp.ne.s32.totalorder %s184, %s198
    %p200 = scmp.eq.s32.totalorder %s27, 0
    %p201 = por %p199, %p200
    %s203 = sadd.s32 %s202, 1
    %p206 = scmp.eq.s32.totalorder %s21, 1
    %p207 = scmp.ne.s32.totalorder %s202, %s204
    %p208 = scmp.eq.s32.totalorder %s21, 0
    %p209 = por %p207, %p208
    %p210 = scmp.ne.s32.totalorder %s202, %s204
    %p211 = scmp.eq.s32.totalorder %s26, 1
    %p212 = por %p210, %p211
    %p213 = scmp.ne.s32.totalorder %s204, %s205
    %p214 = scmp.eq.s32.totalorder %s26, 0
    %p215 = por %p213, %p214
    %p216 = scmp.ne.s32.totalorder %s204, %s205
    %p217 = scmp.eq.s32.totalorder %s27, 1
    %p218 = por %p216, %p217
    %p220 = scmp.ne.s32.totalorder %s205, %s219
    %p221 = scmp.eq.s32.totalorder %s27, 0
    %p222 = por %p220, %p221
    %s224 = sadd.s32 %s223, 1
    %p227 = scmp.eq.s32.totalorder %s21, 1
    %p228 = scmp.ne.s32.totalorder %s223, %s225
    %p229 = scmp.eq.s32.totalorder %s21, 0
    %p230 = por %p228, %p229
    %p231 = scmp.ne.s32.totalorder %s223, %s225
    %p232 = scmp.eq.s32.totalorder %s26, 1
    %p233 = por %p231, %p232
    %p234 = scmp.ne.s32.totalorder %s225, %s226
    %p235 = scmp.eq.s32.totalorder %s26, 0
    %p236 = por %p234, %p235
    %p237 = scmp.ne.s32.totalorder %s225, %s226
    %p238 = scmp.eq.s32.totalorder %s27, 1
    %p239 = por %p237, %p238
    %p241 = scmp.ne.s32.totalorder %s226, %s240
    %p242 = scmp.eq.s32.totalorder %s27, 0
    %p243 = por %p241, %p242
    %s245 = sadd.s32 %s244, 1
    %p248 = scmp.eq.s32.totalorder %s21, 1
    %p249 = scmp.ne.s32.totalorder %s244, %s246
    %p250 = scmp.eq.s32.totalorder %s21, 0
    %p251 = por %p249, %p250
    %p252 = scmp.ne.s32.totalorder %s244, %s246
    %p253 = scmp.eq.s32.totalorder %s26, 1
    %p254 = por %p252, %p253
    %p255 = scmp.ne.s32.totalorder %s246, %s247
    %p256 = scmp.eq.s32.totalorder %s26, 0
    %p257 = por %p255, %p256
    %p258 = scmp.ne.s32.totalorder %s246, %s247
    %p259 = scmp.eq.s32.totalorder %s27, 1
    %p260 = por %p258, %p259
    %p262 = scmp.ne.s32.totalorder %s247, %s261
    %p263 = scmp.eq.s32.totalorder %s27, 0
    %p264 = por %p262, %p263
    %s266 = sadd.s32 %s265, 1
    %p269 = scmp.eq.s32.totalorder %s21, 1
    %p270 = scmp.ne.s32.totalorder %s265, %s267
    %p271 = scmp.eq.s32.totalorder %s21, 0
    %p272 = por %p270, %p271
    %p273 = scmp.ne.s32.totalorder %s265, %s267
    %p274 = scmp.eq.s32.totalorder %s26, 1
    %p275 = por %p273, %p274
    %p276 = scmp.ne.s32.totalorder %s267, %s268
    %p277 = scmp.eq.s32.totalorder %s26, 0
    %p278 = por %p276, %p277
    %p279 = scmp.ne.s32.totalorder %s267, %s268
    %p280 = scmp.eq.s32.totalorder %s27, 1
    %p281 = por %p279, %p280
    %p283 = scmp.ne.s32.totalorder %s268, %s282
    %p284 = scmp.eq.s32.totalorder %s27, 0
    %p285 = por %p283, %p284
    %s287 = sadd.s32 %s286, 1
    %p290 = scmp.eq.s32.totalorder %s21, 1
    %p291 = scmp.ne.s32.totalorder %s286, %s288
    %p292 = scmp.eq.s32.totalorder %s21, 0
    %p293 = por %p291, %p292
    %p294 = scmp.ne.s32.totalorder %s286, %s288
    %p295 = scmp.eq.s32.totalorder %s26, 1
    %p296 = por %p294, %p295
    %p297 = scmp.ne.s32.totalorder %s288, %s289
    %p298 = scmp.eq.s32.totalorder %s26, 0
    %p299 = por %p297, %p298
    %p300 = scmp.ne.s32.totalorder %s288, %s289
    %p301 = scmp.eq.s32.totalorder %s27, 1
    %p302 = por %p300, %p301
    %p304 = scmp.ne.s32.totalorder %s289, %s303
    %p305 = scmp.eq.s32.totalorder %s27, 0
    %p306 = por %p304, %p305
    %s308 = sadd.s32 %s307, 1
    %p311 = scmp.eq.s32.totalorder %s21, 1
    %p312 = scmp.ne.s32.totalorder %s307, %s309
    %p313 = scmp.eq.s32.totalorder %s21, 0
    %p314 = por %p312, %p313
    %p315 = scmp.ne.s32.totalorder %s307, %s309
    %p316 = scmp.eq.s32.totalorder %s26, 1
    %p317 = por %p315, %p316
    %p318 = scmp.ne.s32.totalorder %s309, %s310
    %p319 = scmp.eq.s32.totalorder %s26, 0
    %p320 = por %p318, %p319
    %p321 = scmp.ne.s32.totalorder %s309, %s310
    %p322 = scmp.eq.s32.totalorder %s27, 1
    %p323 = por %p321, %p322
    %p325 = scmp.ne.s32.totalorder %s310, %s324
    %p326 = scmp.eq.s32.totalorder %s27, 0
    %p327 = por %p325, %p326
    %s329 = sadd.s32 %s328, 1
    %p332 = scmp.eq.s32.totalorder %s21, 1
    %p333 = scmp.ne.s32.totalorder %s328, %s330
    %p334 = scmp.eq.s32.totalorder %s21, 0
    %p335 = por %p333, %p334
    %p336 = scmp.ne.s32.totalorder %s328, %s330
    %p337 = scmp.eq.s32.totalorder %s26, 1
    %p338 = por %p336, %p337
    %p339 = scmp.ne.s32.totalorder %s330, %s331
    %p340 = scmp.eq.s32.totalorder %s26, 0
    %p341 = por %p339, %p340
    %p342 = scmp.ne.s32.totalorder %s330, %s331
    %p343 = scmp.eq.s32.totalorder %s27, 1
    %p344 = por %p342, %p343
    %p346 = scmp.ne.s32.totalorder %s331, %s345
    %p347 = scmp.eq.s32.totalorder %s27, 0
    %p348 = por %p346, %p347
    %s349 = ssub.s32 %s21, %s28
    %p350 = scmp.eq.s32.totalorder %s349, 0
    %s352 = sadd.s32 %s351, 1
    %s353 = scalar_select %p350, %s351, %s352
    %p356 = pneg %p350
    %p357 = scmp.eq.s32.totalorder %s21, 1
    %p358 = por %p356, %p357
    %p359 = scmp.ne.s32.totalorder %s351, %s354
    %p360 = scmp.eq.s32.totalorder %s21, 0
    %p361 = por %p359, %p360
    %p362 = scmp.ne.s32.totalorder %s351, %s354
    %p363 = scmp.eq.s32.totalorder %s26, 1
    %p364 = por %p362, %p363
    %p365 = scmp.ne.s32.totalorder %s354, %s355
    %p366 = scmp.eq.s32.totalorder %s26, 0
    %p367 = por %p365, %p366
    %p368 = scmp.ne.s32.totalorder %s354, %s355
    %p369 = scmp.eq.s32.totalorder %s27, 1
    %p370 = por %p368, %p369
    %p372 = scmp.ne.s32.totalorder %s355, %s371
    %p373 = scmp.eq.s32.totalorder %s27, 0
    %p374 = por %p372, %p373
    %p375 = scmp.le.s32.totalorder 1, %s21
    %p376 = scmp.lt.s32.totalorder %s21, 3
    %p377 = pnand %p375, %p376
    %p378 = pneg %p377
    // Predicated region
    $region9: #{fasttext_cnn_forward.1} parent=5 // pred_check
      _
    $region10: #{fasttext_cnn_forward.1} parent=5 // pred_check_branch
      %380 = sbr.rel (%p377) target = $region12
    $region11: #{fasttext_cnn_forward.1} parent=5 // pred_region
      %s381 = ssub.s32 %s21, 1
      // Predicated region
      $region13: #{fasttext_cnn_forward.1} parent=11 // pred_check
        %p382 = pneg %p68
      $region14: #{fasttext_cnn_forward.1} parent=11 // pred_check_branch
        %384 = sbr.rel (%p382) target = $region16
      $region15: #{fasttext_cnn_forward.1} parent=11 // pred_region
        _
      $region16: #{fasttext_cnn_forward.1} parent=11 // pred_fallthru
        _
      // Predicated region
      $region17: #{fasttext_cnn_forward.1} parent=11 // pred_check
        %p385 = pneg %p89
      $region18: #{fasttext_cnn_forward.1} parent=11 // pred_check_branch
        %387 = sbr.rel (%p385) target = $region20
      $region19: #{fasttext_cnn_forward.1} parent=11 // pred_region
        _
      $region20: #{fasttext_cnn_forward.1} parent=11 // pred_fallthru
        _
      // Predicated region
      $region21: #{fasttext_cnn_forward.1} parent=11 // pred_check
        %p388 = pneg %p110
      $region22: #{fasttext_cnn_forward.1} parent=11 // pred_check_branch
        %390 = sbr.rel (%p388) target = $region24
      $region23: #{fasttext_cnn_forward.1} parent=11 // pred_region
        _
      $region24: #{fasttext_cnn_forward.1} parent=11 // pred_fallthru
        _
      // Predicated region
      $region25: #{fasttext_cnn_forward.1} parent=11 // pred_check
        %p391 = pneg %p131
      $region26: #{fasttext_cnn_forward.1} parent=11 // pred_check_branch
        %393 = sbr.rel (%p391) target = $region28
      $region27: #{fasttext_cnn_forward.1} parent=11 // pred_region
        _
      $region28: #{fasttext_cnn_forward.1} parent=11 // pred_fallthru
        _
      // Predicated region
      $region29: #{fasttext_cnn_forward.1} parent=11 // pred_check
        %p394 = pneg %p152
      $region30: #{fasttext_cnn_forward.1} parent=11 // pred_check_branch
        %396 = sbr.rel (%p394) target = $region32
      $region31: #{fasttext_cnn_forward.1} parent=11 // pred_region
        _
      $region32: #{fasttext_cnn_forward.1} parent=11 // pred_fallthru
        _
      // Predicated region
      $region33: #{fasttext_cnn_forward.1} parent=11 // pred_check
        %p397 = pneg %p173
      $region34: #{fasttext_cnn_forward.1} parent=11 // pred_check_branch
        %399 = sbr.rel (%p397) target = $region36
      $region35: #{fasttext_cnn_forward.1} parent=11 // pred_region
        _
      $region36: #{fasttext_cnn_forward.1} parent=11 // pred_fallthru
        _
      // Predicated region
      $region37: #{fasttext_cnn_forward.1} parent=11 // pred_check
        %p400 = pneg %p194
      $region38: #{fasttext_cnn_forward.1} parent=11 // pred_check_branch
        %402 = sbr.rel (%p400) target = $region40
      $region39: #{fasttext_cnn_forward.1} parent=11 // pred_region
        _
      $region40: #{fasttext_cnn_forward.1} parent=11 // pred_fallthru
        _
      // Predicated region
      $region41: #{fasttext_cnn_forward.1} parent=11 // pred_check
        %p403 = pneg %p215
      $region42: #{fasttext_cnn_forward.1} parent=11 // pred_check_branch
        %405 = sbr.rel (%p403) target = $region44
      $region43: #{fasttext_cnn_forward.1} parent=11 // pred_region
        _
      $region44: #{fasttext_cnn_forward.1} parent=11 // pred_fallthru
        _
      // Predicated region
      $region45: #{fasttext_cnn_forward.1} parent=11 // pred_check
        %p406 = pneg %p236
      $region46: #{fasttext_cnn_forward.1} parent=11 // pred_check_branch
        %408 = sbr.rel (%p406) target = $region48
      $region47: #{fasttext_cnn_forward.1} parent=11 // pred_region
        _
      $region48: #{fasttext_cnn_forward.1} parent=11 // pred_fallthru
        _
      // Predicated region
      $region49: #{fasttext_cnn_forward.1} parent=11 // pred_check
        %p409 = pneg %p257
      $region50: #{fasttext_cnn_forward.1} parent=11 // pred_check_branch
        %411 = sbr.rel (%p409) target = $region52
      $region51: #{fasttext_cnn_forward.1} parent=11 // pred_region
        _
      $region52: #{fasttext_cnn_forward.1} parent=11 // pred_fallthru
        _
      // Predicated region
      $region53: #{fasttext_cnn_forward.1} parent=11 // pred_check
        %p412 = pneg %p278
      $region54: #{fasttext_cnn_forward.1} parent=11 // pred_check_branch
        %414 = sbr.rel (%p412) target = $region56
      $region55: #{fasttext_cnn_forward.1} parent=11 // pred_region
        _
      $region56: #{fasttext_cnn_forward.1} parent=11 // pred_fallthru
        _
      // Predicated region
      $region57: #{fasttext_cnn_forward.1} parent=11 // pred_check
        %p415 = pneg %p299
      $region58: #{fasttext_cnn_forward.1} parent=11 // pred_check_branch
        %417 = sbr.rel (%p415) target = $region60
      $region59: #{fasttext_cnn_forward.1} parent=11 // pred_region
        _
      $region60: #{fasttext_cnn_forward.1} parent=11 // pred_fallthru
        _
      // Predicated region
      $region61: #{fasttext_cnn_forward.1} parent=11 // pred_check
        %p418 = pneg %p320
      $region62: #{fasttext_cnn_forward.1} parent=11 // pred_check_branch
        %420 = sbr.rel (%p418) target = $region64
      $region63: #{fasttext_cnn_forward.1} parent=11 // pred_region
        _
      $region64: #{fasttext_cnn_forward.1} parent=11 // pred_fallthru
        _
      // Predicated region
      $region65: #{fasttext_cnn_forward.1} parent=11 // pred_check
        %p421 = pneg %p341
      $region66: #{fasttext_cnn_forward.1} parent=11 // pred_check_branch
        %423 = sbr.rel (%p421) target = $region68
      $region67: #{fasttext_cnn_forward.1} parent=11 // pred_region
        _
      $region68: #{fasttext_cnn_forward.1} parent=11 // pred_fallthru
        _
    $region12: #{fasttext_cnn_forward.1} parent=5 // pred_fallthru
      _
    %p424 = scmp.lt.s32.totalorder %s21, 2
    // Predicated region
    $region69: #{fasttext_cnn_forward.1} parent=5 // pred_check
      %p425 = pneg %p424
    $region70: #{fasttext_cnn_forward.1} parent=5 // pred_check_branch
      %427 = sbr.rel (%p425) target = $region72
    $region71: #{fasttext_cnn_forward.1} parent=5 // pred_region
      // Predicated region
      $region73: #{fasttext_cnn_forward.1} parent=71 // pred_check
        %p428 = pneg %p41
      $region74: #{fasttext_cnn_forward.1} parent=71 // pred_check_branch
        %430 = sbr.rel (%p428) target = $region76
      $region75: #{fasttext_cnn_forward.1} parent=71 // pred_region
        %s431 = smul.u32 8, %s21
        %p432 = scmp.lt.s32.totalorder %s431, 15
        %s433 = scalar_select %p432, %s431, 15
        %s434 = smul.addr %s433, 4
        %s435 = smul.addr %s434, 4
        %s436 = scalar_lea.vmem %s0, %s435
        %s437 = smul.u32 8, %s21
      $region76: #{fasttext_cnn_forward.1} parent=71 // pred_fallthru
        _
    $region72: #{fasttext_cnn_forward.1} parent=5 // pred_fallthru
      _
    %p438 = scmp.le.s32.totalorder 1, %s21
    %p439 = scmp.lt.s32.totalorder %s21, 3
    %p440 = pnand %p438, %p439
    %p441 = pneg %p440
    // Predicated region
    $region77: #{fasttext_cnn_forward.1} parent=5 // pred_check
      _
    $region78: #{fasttext_cnn_forward.1} parent=5 // pred_check_branch
      %443 = sbr.rel (%p440) target = $region80
    $region79: #{fasttext_cnn_forward.1} parent=5 // pred_region
      %s444 = ssub.s32 %s21, 1
      %s445 = smul.u32 8, %s26
      %p446 = scmp.lt.s32.totalorder %s445, 15
      %s447 = scalar_select %p446, %s445, 15
      %s448 = smul.addr %s447, 4
      %s449 = smul.addr %s448, 4
      %s450 = scalar_lea.vmem %s0, %s449
      %p451 = pneg %p47
      %p452 = pneg %p44
      %p453 = pneg %p68
      %p454 = pneg %p65
      %p455 = pneg %p89
      %p456 = pneg %p86
      %p457 = pneg %p110
      %p458 = pneg %p107
      %p459 = pneg %p131
      %p460 = pneg %p128
      %p461 = pneg %p152
      %p462 = pneg %p149
      %p463 = pneg %p173
      %p464 = pneg %p170
      %p465 = pneg %p194
      %p466 = pneg %p191
      %p467 = pneg %p215
      %p468 = pneg %p212
      %p469 = pneg %p236
      %p470 = pneg %p233
      %p471 = pneg %p257
      %p472 = pneg %p254
      %p473 = pneg %p278
      %p474 = pneg %p275
      %p475 = pneg %p299
      %p476 = pneg %p296
      %p477 = pneg %p320
      %p478 = pneg %p317
      %p479 = pneg %p341
      %p480 = pneg %p338
      %p481 = pneg %p367
      %p482 = pneg %p364
      %p483 = scmp.lt.s32.totalorder %s26, 1
      %s484 = scalar_select %p483, %s26, 1
      %s485 = smul.addr %s484, 8
      %s486 = scalar_lea.vmem %s15, %s485
      %s487 = smul.u32 8, %s26
      %p488 = scmp.lt.s32.totalorder %s487, 15
      %s489 = scalar_select %p488, %s487, 15
      %s490 = smul.addr %s489, 4
      %s491 = smul.addr %s490, 4
      %s492 = scalar_lea.vmem %s0, %s491
      %s493 = smul.u32 8, %s26
      %p494 = scmp.lt.s32.totalorder %s26, 1
      %s495 = scalar_select %p494, %s26, 1
      %s496 = smul.addr %s495, 8
      %s497 = scalar_lea.vmem %s15, %s496
      %v499 = vld [vmem:[%s492] sm:$0xf]
      %v500 = vld [vmem:[%s492 + $0x4] sm:$0xf]
      %v501 = vld [vmem:[%s492 + $0x8] sm:$0xf]
      %v502 = vld [vmem:[%s492 + $0xc] sm:$0x3]
      %v503 = vld [vmem:[%s492 + $0x10] sm:$0xf]
      %v504 = vld [vmem:[%s492 + $0x14] sm:$0xf]
      %v505 = vld [vmem:[%s492 + $0x18] sm:$0xf]
      %v506 = vld [vmem:[%s492 + $0x1c] sm:$0x3]
      %v507 = vld [vmem:[%s492 + $0x20] sm:$0xf]
      %v508 = vld [vmem:[%s492 + $0x24] sm:$0xf]
      %v509 = vld [vmem:[%s492 + $0x28] sm:$0xf]
      %v510 = vld [vmem:[%s492 + $0x2c] sm:$0x3]
      %v511 = vld [vmem:[%s492 + $0x30] sm:$0xf]
      %v512 = vld [vmem:[%s492 + $0x34] sm:$0xf]
      %v513 = vld [vmem:[%s492 + $0x38] sm:$0xf]
      %v514 = vld [vmem:[%s492 + $0x3c] sm:$0x3]
      %v515 = vld [vmem:[%s492 + $0x40] sm:$0xf]
      %v516 = vld [vmem:[%s492 + $0x44] sm:$0xf]
      %v517 = vld [vmem:[%s492 + $0x48] sm:$0xf]
      %v518 = vld [vmem:[%s492 + $0x4c] sm:$0x3]
      %v519 = vld [vmem:[%s492 + $0x50] sm:$0xf]
      %v520 = vld [vmem:[%s492 + $0x54] sm:$0xf]
      %v521 = vld [vmem:[%s492 + $0x58] sm:$0xf]
      %v522 = vld [vmem:[%s492 + $0x5c] sm:$0x3]
      %v523 = vld [vmem:[%s492 + $0x60] sm:$0xf]
      %v524 = vld [vmem:[%s492 + $0x64] sm:$0xf]
      %v525 = vld [vmem:[%s492 + $0x68] sm:$0xf]
      %v526 = vld [vmem:[%s492 + $0x6c] sm:$0x3]
      %v527 = vld [vmem:[%s492 + $0x70] sm:$0xf]
      %v528 = vld [vmem:[%s492 + $0x74] sm:$0xf]
      %v529 = vld [vmem:[%s492 + $0x78] sm:$0xf]
      %v530 = vld [vmem:[%s492 + $0x7c] sm:$0x3]
      %v531 = vunpack.c.l.bf16 %v499
      %v532 = vunpack.c.l.bf16 %v500
      %v533 = vunpack.c.l.bf16 %v501
      %v534 = vunpack.c.l.bf16 %v502
      %v535 = vunpack.c.l.bf16 %v503
      %v536 = vunpack.c.l.bf16 %v504
      %v537 = vunpack.c.l.bf16 %v505
      %v538 = vunpack.c.l.bf16 %v506
      %v539 = vunpack.c.l.bf16 %v507
      %v540 = vunpack.c.l.bf16 %v508
      %v541 = vunpack.c.l.bf16 %v509
      %v542 = vunpack.c.l.bf16 %v510
      %v543 = vunpack.c.l.bf16 %v511
      %v544 = vunpack.c.l.bf16 %v512
      %v545 = vunpack.c.l.bf16 %v513
      %v546 = vunpack.c.l.bf16 %v514
      %v547 = vunpack.c.l.bf16 %v515
      %v548 = vunpack.c.l.bf16 %v516
      %v549 = vunpack.c.l.bf16 %v517
      %v550 = vunpack.c.l.bf16 %v518
      %v551 = vunpack.c.l.bf16 %v519
      %v552 = vunpack.c.l.bf16 %v520
      %v553 = vunpack.c.l.bf16 %v521
      %v554 = vunpack.c.l.bf16 %v522
      %v555 = vunpack.c.l.bf16 %v523
      %v556 = vunpack.c.l.bf16 %v524
      %v557 = vunpack.c.l.bf16 %v525
      %v558 = vunpack.c.l.bf16 %v526
      %v559 = vunpack.c.l.bf16 %v527
      %v560 = vunpack.c.l.bf16 %v528
      %v561 = vunpack.c.l.bf16 %v529
      %v562 = vunpack.c.l.bf16 %v530
      %v563 = vld [vmem:[%s1] sm:$0xf]
      %v564 = vld [vmem:[%s1 + $0x4] sm:$0xf]
      %v565 = vld [vmem:[%s1 + $0x8] sm:$0xf]
      %v566 = vld [vmem:[%s1 + $0xc] sm:$0xf]
      %v567 = vld [vmem:[%s1 + $0x10] sm:$0xf]
      %v568 = vld [vmem:[%s1 + $0x14] sm:$0xf]
      %v569 = vld [vmem:[%s1 + $0x18] sm:$0xf]
      %v570 = vld [vmem:[%s1 + $0x1c] sm:$0xf]
      %v571 = vld [vmem:[%s1 + $0x20] sm:$0xf]
      %v572 = vld [vmem:[%s1 + $0x24] sm:$0xf]
      %v573 = vld [vmem:[%s1 + $0x28] sm:$0xf]
      %v574 = vld [vmem:[%s1 + $0x2c] sm:$0xf]
      %v575 = vld [vmem:[%s1 + $0x30] sm:$0xf]
      %v576 = vld [vmem:[%s1 + $0x34] sm:$0xf]
      %v577 = vld [vmem:[%s1 + $0x38] sm:$0xf]
      %v578 = vld [vmem:[%s1 + $0x3c] sm:$0xf]
      %v579 = vld [vmem:[%s2] sm:$0x1]
      %v580 = vld [vmem:[%s3] sm:$0xf]
      %v581 = vld [vmem:[%s3 + $0x4] sm:$0xf]
      %v582 = vld [vmem:[%s3 + $0x8] sm:$0xf]
      %v583 = vld [vmem:[%s3 + $0xc] sm:$0xf]
      %v584 = vld [vmem:[%s3 + $0x10] sm:$0xf]
      %v585 = vld [vmem:[%s3 + $0x14] sm:$0xf]
      %v586 = vld [vmem:[%s3 + $0x18] sm:$0xf]
      %v587 = vld [vmem:[%s3 + $0x1c] sm:$0xf]
      %v588 = vld [vmem:[%s3 + $0x20] sm:$0xf]
      %v589 = vld [vmem:[%s3 + $0x24] sm:$0xf]
      %v590 = vld [vmem:[%s3 + $0x28] sm:$0xf]
      %v591 = vld [vmem:[%s3 + $0x2c] sm:$0xf]
      %v592 = vld [vmem:[%s3 + $0x30] sm:$0xf]
      %v593 = vld [vmem:[%s3 + $0x34] sm:$0xf]
      %v594 = vld [vmem:[%s3 + $0x38] sm:$0xf]
      %v595 = vld [vmem:[%s3 + $0x3c] sm:$0xf]
      %v596 = vld [vmem:[%s3 + $0x40] sm:$0xf]
      %v597 = vld [vmem:[%s3 + $0x44] sm:$0xf]
      %v598 = vld [vmem:[%s3 + $0x48] sm:$0xf]
      %v599 = vld [vmem:[%s3 + $0x4c] sm:$0xf]
      %v600 = vld [vmem:[%s3 + $0x50] sm:$0xf]
      %v601 = vld [vmem:[%s3 + $0x54] sm:$0xf]
      %v602 = vld [vmem:[%s3 + $0x58] sm:$0xf]
      %v603 = vld [vmem:[%s3 + $0x5c] sm:$0xf]
      %v604 = vld [vmem:[%s3 + $0x60] sm:$0xf]
      %v605 = vld [vmem:[%s3 + $0x64] sm:$0xf]
      %v606 = vld [vmem:[%s3 + $0x68] sm:$0xf]
      %v607 = vld [vmem:[%s3 + $0x6c] sm:$0xf]
      %v608 = vld [vmem:[%s3 + $0x70] sm:$0xf]
      %v609 = vld [vmem:[%s3 + $0x74] sm:$0xf]
      %v610 = vld [vmem:[%s3 + $0x78] sm:$0xf]
      %v611 = vld [vmem:[%s3 + $0x7c] sm:$0xf]
      %v612 = vld [vmem:[%s4] sm:$0x1]
      %vm645 = vcmask 1046528
      %v646 = vrot.slane %v531, 1
      %v647 = vrot.slane %v532, 1
      %v648 = vsel %vm645, %v646, %v647
      %v649 = vrot.slane %v533, 1
      %v650 = vsel %vm645, %v647, %v649
      %v651 = vrot.slane %v534, 1
      %v652 = vsel %vm645, %v649, %v651
      %v653 = vrot.slane %v535, 1
      %v654 = vrot.slane %v536, 1
      %v655 = vsel %vm645, %v653, %v654
      %v656 = vrot.slane %v537, 1
      %v657 = vsel %vm645, %v654, %v656
      %v658 = vrot.slane %v538, 1
      %v659 = vsel %vm645, %v656, %v658
      %v660 = vrot.slane %v539, 1
      %v661 = vrot.slane %v540, 1
      %v662 = vsel %vm645, %v660, %v661
      %v663 = vrot.slane %v541, 1
      %v664 = vsel %vm645, %v661, %v663
      %v665 = vrot.slane %v542, 1
      %v666 = vsel %vm645, %v663, %v665
      %v667 = vrot.slane %v543, 1
      %v668 = vrot.slane %v544, 1
      %v669 = vsel %vm645, %v667, %v668
      %v670 = vrot.slane %v545, 1
      %v671 = vsel %vm645, %v668, %v670
      %v672 = vrot.slane %v546, 1
      %v673 = vsel %vm645, %v670, %v672
      %v674 = vrot.slane %v547, 1
      %v675 = vrot.slane %v548, 1
      %v676 = vsel %vm645, %v674, %v675
      %v677 = vrot.slane %v549, 1
      %v678 = vsel %vm645, %v675, %v677
      %v679 = vrot.slane %v550, 1
      %v680 = vsel %vm645, %v677, %v679
      %v681 = vrot.slane %v551, 1
      %v682 = vrot.slane %v552, 1
      %v683 = vsel %vm645, %v681, %v682
      %v684 = vrot.slane %v553, 1
      %v685 = vsel %vm645, %v682, %v684
      %v686 = vrot.slane %v554, 1
      %v687 = vsel %vm645, %v684, %v686
      %v688 = vrot.slane %v555, 1
      %v689 = vrot.slane %v556, 1
      %v690 = vsel %vm645, %v688, %v689
      %v691 = vrot.slane %v557, 1
      %v692 = vsel %vm645, %v689, %v691
      %v693 = vrot.slane %v558, 1
      %v694 = vsel %vm645, %v691, %v693
      %v695 = vrot.slane %v559, 1
      %v696 = vrot.slane %v560, 1
      %v697 = vsel %vm645, %v695, %v696
      %v698 = vrot.slane %v561, 1
      %v699 = vsel %vm645, %v696, %v698
      %v700 = vrot.slane %v562, 1
      %v701 = vsel %vm645, %v698, %v700
      %702 = vrot.lane.b32.xlu0 %v648, 64
      %v703 = vpop.permute.xlu0 %702
      %704 = vrot.lane.b32.xlu0 %v650, 64
      %v705 = vpop.permute.xlu0 %704
      %706 = vrot.lane.b32.xlu0 %v652, 64
      %v707 = vpop.permute.xlu0 %706
      %708 = vrot.lane.b32.xlu0 %v655, 64
      %v709 = vpop.permute.xlu0 %708
      %710 = vrot.lane.b32.xlu0 %v657, 64
      %v711 = vpop.permute.xlu0 %710
      %712 = vrot.lane.b32.xlu0 %v659, 64
      %v713 = vpop.permute.xlu0 %712
      %714 = vrot.lane.b32.xlu0 %v662, 64
      %v715 = vpop.permute.xlu0 %714
      %716 = vrot.lane.b32.xlu0 %v664, 64
      %v717 = vpop.permute.xlu0 %716
      %718 = vrot.lane.b32.xlu0 %v666, 64
      %v719 = vpop.permute.xlu0 %718
      %720 = vrot.lane.b32.xlu0 %v669, 64
      %v721 = vpop.permute.xlu0 %720
      %722 = vrot.lane.b32.xlu0 %v671, 64
      %v723 = vpop.permute.xlu0 %722
      %724 = vrot.lane.b32.xlu0 %v673, 64
      %v725 = vpop.permute.xlu0 %724
      %726 = vrot.lane.b32.xlu0 %v676, 64
      %v727 = vpop.permute.xlu0 %726
      %728 = vrot.lane.b32.xlu0 %v678, 64
      %v729 = vpop.permute.xlu0 %728
      %730 = vrot.lane.b32.xlu0 %v680, 64
      %v731 = vpop.permute.xlu0 %730
      %732 = vrot.lane.b32.xlu0 %v683, 64
      %v733 = vpop.permute.xlu0 %732
      %734 = vrot.lane.b32.xlu0 %v685, 64
      %v735 = vpop.permute.xlu0 %734
      %736 = vrot.lane.b32.xlu0 %v687, 64
      %v737 = vpop.permute.xlu0 %736
      %738 = vrot.lane.b32.xlu0 %v690, 64
      %v739 = vpop.permute.xlu0 %738
      %740 = vrot.lane.b32.xlu0 %v692, 64
      %v741 = vpop.permute.xlu0 %740
      %742 = vrot.lane.b32.xlu0 %v694, 64
      %v743 = vpop.permute.xlu0 %742
      %744 = vrot.lane.b32.xlu0 %v697, 64
      %v745 = vpop.permute.xlu0 %744
      %746 = vrot.lane.b32.xlu0 %v699, 64
      %v747 = vpop.permute.xlu0 %746
      %748 = vrot.lane.b32.xlu0 %v701, 64
      %v749 = vpop.permute.xlu0 %748
      %vm774 = vcmask 523264
      %v775 = vsel %vm774, %v531, %v703
      %v776 = vsel %vm774, %v532, %v705
      %v777 = vsel %vm774, %v533, %v707
      %v778 = vsel %vm774, %v535, %v709
      %v779 = vsel %vm774, %v536, %v711
      %v780 = vsel %vm774, %v537, %v713
      %v781 = vsel %vm774, %v539, %v715
      %v782 = vsel %vm774, %v540, %v717
      %v783 = vsel %vm774, %v541, %v719
      %v784 = vsel %vm774, %v543, %v721
      %v785 = vsel %vm774, %v544, %v723
      %v786 = vsel %vm774, %v545, %v725
      %v787 = vsel %vm774, %v547, %v727
      %v788 = vsel %vm774, %v548, %v729
      %v789 = vsel %vm774, %v549, %v731
      %v790 = vsel %vm774, %v551, %v733
      %v791 = vsel %vm774, %v552, %v735
      %v792 = vsel %vm774, %v553, %v737
      %v793 = vsel %vm774, %v555, %v739
      %v794 = vsel %vm774, %v556, %v741
      %v795 = vsel %vm774, %v557, %v743
      %v796 = vsel %vm774, %v559, %v745
      %v797 = vsel %vm774, %v560, %v747
      %v798 = vsel %vm774, %v561, %v749
      %v799 = vpack.c.bf16 %v776, %v775
      %v800 = vpack.c.bf16 %v778, %v777
      %v801 = vpack.c.bf16 %v780, %v779
      %v802 = vpack.c.bf16 %v782, %v781
      %v803 = vpack.c.bf16 %v784, %v783
      %v804 = vpack.c.bf16 %v786, %v785
      %v805 = vpack.c.bf16 %v788, %v787
      %v806 = vpack.c.bf16 %v790, %v789
      %v807 = vpack.c.bf16 %v792, %v791
      %v808 = vpack.c.bf16 %v794, %v793
      %v809 = vpack.c.bf16 %v796, %v795
      %v810 = vpack.c.bf16 %v798, %v797
      %v812 = vlaneseq
      %v813 = vshrl.u32 %v812, 7
      %v814 = vsub.s32 0, %v813
      %v815 = vrot.slane %v579, %v814
      %v833 = vunpack.c.l.b16 %v563
      %v834 = vunpack.c.l.b16 %v564
      %v835 = vunpack.c.l.b16 %v565
      %v836 = vunpack.c.l.b16 %v566
      %v837 = vunpack.c.l.b16 %v567
      %v838 = vunpack.c.l.b16 %v568
      %v839 = vunpack.c.l.b16 %v569
      %v840 = vunpack.c.l.b16 %v570
      %v841 = vunpack.c.l.b16 %v571
      %v842 = vunpack.c.l.b16 %v572
      %v843 = vunpack.c.l.b16 %v573
      %v844 = vunpack.c.l.b16 %v574
      %v845 = vunpack.c.l.b16 %v575
      %v846 = vunpack.c.l.b16 %v576
      %v847 = vunpack.c.l.b16 %v577
      %v848 = vunpack.c.l.b16 %v578
      %v849 = vpack.c.b16 %v834, %v833
      %v850 = vpack.c.b16 %v836, %v835
      %v851 = vpack.c.b16 %v838, %v837
      %v852 = vpack.c.b16 %v840, %v839
      %v853 = vpack.c.b16 %v842, %v841
      %v854 = vpack.c.b16 %v844, %v843
      %v855 = vpack.c.b16 %v846, %v845
      %v856 = vpack.c.b16 %v848, %v847
      %865 = vmatprep.subr.bf16.mxu0 0
      %866 = vmatpush1.bf16.msra.mxu0 %v856
      %867 = vmatprep.subr.bf16.mxu0 0
      %868 = vmatpush1.bf16.msra.mxu0 %v855
      %869 = vmatprep.subr.bf16.mxu0 0
      %870 = vmatpush1.bf16.msra.mxu0 %v854
      %871 = vmatprep.subr.bf16.mxu0 0
      %872 = vmatpush1.bf16.msra.mxu0 %v853
      %873 = vmatprep.subr.bf16.mxu0 0
      %874 = vmatpush1.bf16.msra.mxu0 %v852
      %875 = vmatprep.subr.bf16.mxu0 0
      %876 = vmatpush1.bf16.msra.mxu0 %v851
      %877 = vmatprep.subr.bf16.mxu0 0
      %878 = vmatpush1.bf16.msra.mxu0 %v850
      %879 = vmatprep.subr.bf16.mxu0 0
      %880 = vmatpush1.bf16.msra.mxu0 %v849
      %881 = vmatprep.subr.bf16.mxu0 0
      %882 = vmatpush2.bf16.msra.mxu0 0
      %883 = vmatprep.subr.bf16.mxu0 0
      %884 = vmatpush2.bf16.msra.mxu0 0
      %885 = vmatprep.subr.bf16.mxu0 0
      %886 = vmatpush2.bf16.msra.mxu0 0
      %887 = vmatprep.subr.bf16.mxu0 0
      %888 = vmatpush2.bf16.msra.mxu0 0
      %889 = vmatprep.subr.bf16.mxu0 0
      %890 = vmatpush2.bf16.msra.mxu0 0
      %891 = vmatprep.subr.bf16.mxu0 0
      %892 = vmatpush2.bf16.msra.mxu0 0
      %893 = vmatprep.subr.bf16.mxu0 0
      %894 = vmatpush2.bf16.msra.mxu0 0
      %895 = vmatprep.subr.bf16.mxu0 0
      %896 = vmatpush2.bf16.msra.mxu0 0
      %897 = vmatprep.mubr.bf16.mxu0 0
      %898 = vmatmul.mubr.bf16.gmra.mxu0 %v799
      %v899 = vpop.f32.mrf.mxu0
      %v900 = vadd.f32 %v815, %v899
      %v901 = vpop.f32.mrf.mxu0
      %v902 = vpop.f32.mrf.mxu0
      %v903 = vadd.f32 %v815, %v902
      %v904 = vpop.f32.mrf.mxu0
      %905 = vmatprep.mubr.bf16.mxu0 0
      %906 = vmatmul.mubr.bf16.gmra.mxu0 %v800
      %v907 = vpop.f32.mrf.mxu0
      %v908 = vadd.f32 %v815, %v907
      %v909 = vpop.f32.mrf.mxu0
      %v910 = vpop.f32.mrf.mxu0
      %v911 = vadd.f32 %v815, %v910
      %v912 = vpop.f32.mrf.mxu0
      %913 = vmatprep.mubr.bf16.mxu0 0
      %914 = vmatmul.mubr.bf16.gmra.mxu0 %v801
      %v915 = vpop.f32.mrf.mxu0
      %v916 = vadd.f32 %v815, %v915
      %v917 = vpop.f32.mrf.mxu0
      %v918 = vpop.f32.mrf.mxu0
      %v919 = vadd.f32 %v815, %v918
      %v920 = vpop.f32.mrf.mxu0
      %921 = vmatprep.mubr.bf16.mxu0 0
      %922 = vmatmul.mubr.bf16.gmra.mxu0 %v802
      %v923 = vpop.f32.mrf.mxu0
      %v924 = vadd.f32 %v815, %v923
      %v925 = vpop.f32.mrf.mxu0
      %v926 = vpop.f32.mrf.mxu0
      %v927 = vadd.f32 %v815, %v926
      %v928 = vpop.f32.mrf.mxu0
      %929 = vmatprep.mubr.bf16.mxu0 0
      %930 = vmatmul.mubr.bf16.gmra.mxu0 %v803
      %v931 = vpop.f32.mrf.mxu0
      %v932 = vadd.f32 %v815, %v931
      %v933 = vpop.f32.mrf.mxu0
      %v934 = vpop.f32.mrf.mxu0
      %v935 = vadd.f32 %v815, %v934
      %v936 = vpop.f32.mrf.mxu0
      %937 = vmatprep.mubr.bf16.mxu0 0
      %938 = vmatmul.mubr.bf16.gmra.mxu0 %v804
      %v939 = vpop.f32.mrf.mxu0
      %v940 = vadd.f32 %v815, %v939
      %v941 = vpop.f32.mrf.mxu0
      %v942 = vpop.f32.mrf.mxu0
      %v943 = vadd.f32 %v815, %v942
      %v944 = vpop.f32.mrf.mxu0
      %945 = vmatprep.mubr.bf16.mxu0 0
      %946 = vmatmul.mubr.bf16.gmra.mxu0 %v805
      %v947 = vpop.f32.mrf.mxu0
      %v948 = vadd.f32 %v815, %v947
      %v949 = vpop.f32.mrf.mxu0
      %v950 = vpop.f32.mrf.mxu0
      %v951 = vadd.f32 %v815, %v950
      %v952 = vpop.f32.mrf.mxu0
      %953 = vmatprep.mubr.bf16.mxu0 0
      %954 = vmatmul.mubr.bf16.gmra.mxu0 %v806
      %v955 = vpop.f32.mrf.mxu0
      %v956 = vadd.f32 %v815, %v955
      %v957 = vpop.f32.mrf.mxu0
      %v958 = vpop.f32.mrf.mxu0
      %v959 = vadd.f32 %v815, %v958
      %v960 = vpop.f32.mrf.mxu0
      %961 = vmatprep.mubr.bf16.mxu0 0
      %962 = vmatmul.mubr.bf16.gmra.mxu0 %v807
      %v963 = vpop.f32.mrf.mxu0
      %v964 = vadd.f32 %v815, %v963
      %v965 = vpop.f32.mrf.mxu0
      %v966 = vpop.f32.mrf.mxu0
      %v967 = vadd.f32 %v815, %v966
      %v968 = vpop.f32.mrf.mxu0
      %969 = vmatprep.mubr.bf16.mxu0 0
      %970 = vmatmul.mubr.bf16.gmra.mxu0 %v808
      %v971 = vpop.f32.mrf.mxu0
      %v972 = vadd.f32 %v815, %v971
      %v973 = vpop.f32.mrf.mxu0
      %v974 = vpop.f32.mrf.mxu0
      %v975 = vadd.f32 %v815, %v974
      %v976 = vpop.f32.mrf.mxu0
      %977 = vmatprep.mubr.bf16.mxu0 0
      %978 = vmatmul.mubr.bf16.gmra.mxu0 %v809
      %v979 = vpop.f32.mrf.mxu0
      %v980 = vadd.f32 %v815, %v979
      %v981 = vpop.f32.mrf.mxu0
      %v982 = vpop.f32.mrf.mxu0
      %v983 = vadd.f32 %v815, %v982
      %v984 = vpop.f32.mrf.mxu0
      %985 = vmatprep.mubr.bf16.mxu0 0
      %986 = vmatmul.mubr.bf16.gmra.mxu0 %v810
      %v987 = vpop.f32.mrf.mxu0
      %v988 = vadd.f32 %v815, %v987
      %v989 = vpop.f32.mrf.mxu0
      %v990 = vpop.f32.mrf.mxu0
      %v991 = vadd.f32 %v815, %v990
      %v992 = vpop.f32.mrf.mxu0
      %993 = vdwg.mxu0
      %v994 = vmax.f32 %v900, 0.0
      %v995 = vmax.f32 %v903, 0.0
      %v996 = vmax.f32 %v908, 0.0
      %v997 = vmax.f32 %v911, 0.0
      %v998 = vmax.f32 %v916, 0.0
      %v999 = vmax.f32 %v919, 0.0
      %v1000 = vmax.f32 %v924, 0.0
      %v1001 = vmax.f32 %v927, 0.0
      %v1002 = vmax.f32 %v932, 0.0
      %v1003 = vmax.f32 %v935, 0.0
      %v1004 = vmax.f32 %v940, 0.0
      %v1005 = vmax.f32 %v943, 0.0
      %v1006 = vmax.f32 %v948, 0.0
      %v1007 = vmax.f32 %v951, 0.0
      %v1008 = vmax.f32 %v956, 0.0
      %v1009 = vmax.f32 %v959, 0.0
      %v1010 = vmax.f32 %v964, 0.0
      %v1011 = vmax.f32 %v967, 0.0
      %v1012 = vmax.f32 %v972, 0.0
      %v1013 = vmax.f32 %v975, 0.0
      %v1014 = vmax.f32 %v980, 0.0
      %v1015 = vmax.f32 %v983, 0.0
      %v1016 = vmax.f32 %v988, 0.0
      %v1017 = vmax.f32 %v991, 0.0
      %v1042 = vrot.slane %v994, 1
      %v1043 = vrot.slane %v995, 1
      %v1044 = vsel %vm645, %v1042, %v1043
      %v1045 = vrot.slane %v996, 1
      %v1046 = vsel %vm645, %v1043, %v1045
      %v1047 = vrot.slane %v997, 1
      %v1048 = vrot.slane %v998, 1
      %v1049 = vsel %vm645, %v1047, %v1048
      %v1050 = vrot.slane %v999, 1
      %v1051 = vsel %vm645, %v1048, %v1050
      %v1052 = vrot.slane %v1000, 1
      %v1053 = vrot.slane %v1001, 1
      %v1054 = vsel %vm645, %v1052, %v1053
      %v1055 = vrot.slane %v1002, 1
      %v1056 = vsel %vm645, %v1053, %v1055
      %v1057 = vrot.slane %v1003, 1
      %v1058 = vrot.slane %v1004, 1
      %v1059 = vsel %vm645, %v1057, %v1058
      %v1060 = vrot.slane %v1005, 1
      %v1061 = vsel %vm645, %v1058, %v1060
      %v1062 = vrot.slane %v1006, 1
      %v1063 = vrot.slane %v1007, 1
      %v1064 = vsel %vm645, %v1062, %v1063
      %v1065 = vrot.slane %v1008, 1
      %v1066 = vsel %vm645, %v1063, %v1065
      %v1067 = vrot.slane %v1009, 1
      %v1068 = vrot.slane %v1010, 1
      %v1069 = vsel %vm645, %v1067, %v1068
      %v1070 = vrot.slane %v1011, 1
      %v1071 = vsel %vm645, %v1068, %v1070
      %v1072 = vrot.slane %v1012, 1
      %v1073 = vrot.slane %v1013, 1
      %v1074 = vsel %vm645, %v1072, %v1073
      %v1075 = vrot.slane %v1014, 1
      %v1076 = vsel %vm645, %v1073, %v1075
      %v1077 = vrot.slane %v1015, 1
      %v1078 = vrot.slane %v1016, 1
      %v1079 = vsel %vm645, %v1077, %v1078
      %v1080 = vrot.slane %v1017, 1
      %v1081 = vsel %vm645, %v1078, %v1080
      %v1098 = vpack.c.bf16 %v995, %v994
      %v1099 = vpack.c.bf16 %v1046, %v1044
      %v1100 = vpack.c.bf16 %v998, %v997
      %v1101 = vpack.c.bf16 %v1051, %v1049
      %v1102 = vpack.c.bf16 %v1001, %v1000
      %v1103 = vpack.c.bf16 %v1056, %v1054
      %v1104 = vpack.c.bf16 %v1004, %v1003
      %v1105 = vpack.c.bf16 %v1061, %v1059
      %v1106 = vpack.c.bf16 %v1007, %v1006
      %v1107 = vpack.c.bf16 %v1066, %v1064
      %v1108 = vpack.c.bf16 %v1010, %v1009
      %v1109 = vpack.c.bf16 %v1071, %v1069
      %v1110 = vpack.c.bf16 %v1013, %v1012
      %v1111 = vpack.c.bf16 %v1076, %v1074
      %v1112 = vpack.c.bf16 %v1016, %v1015
      %v1113 = vpack.c.bf16 %v1081, %v1079
      %v1115 = vlaneseq
      %v1116 = vshrl.u32 %v1115, 7
      %v1117 = vsub.s32 0, %v1116
      %v1118 = vrot.slane %v612, %v1117
      %v1152 = vunpack.c.l.b16 %v580
      %v1153 = vunpack.c.l.b16 %v581
      %v1154 = vunpack.c.l.b16 %v582
      %v1155 = vunpack.c.l.b16 %v583
      %v1156 = vunpack.c.l.b16 %v584
      %v1157 = vunpack.c.l.b16 %v585
      %v1158 = vunpack.c.l.b16 %v586
      %v1159 = vunpack.c.l.b16 %v587
      %v1160 = vunpack.c.l.b16 %v588
      %v1161 = vunpack.c.l.b16 %v589
      %v1162 = vunpack.c.l.b16 %v590
      %v1163 = vunpack.c.l.b16 %v591
      %v1164 = vunpack.c.l.b16 %v592
      %v1165 = vunpack.c.l.b16 %v593
      %v1166 = vunpack.c.l.b16 %v594
      %v1167 = vunpack.c.l.b16 %v595
      %v1168 = vunpack.c.l.b16 %v596
      %v1169 = vunpack.c.l.b16 %v597
      %v1170 = vunpack.c.l.b16 %v598
      %v1171 = vunpack.c.l.b16 %v599
      %v1172 = vunpack.c.l.b16 %v600
      %v1173 = vunpack.c.l.b16 %v601
      %v1174 = vunpack.c.l.b16 %v602
      %v1175 = vunpack.c.l.b16 %v603
      %v1176 = vunpack.c.l.b16 %v604
      %v1177 = vunpack.c.l.b16 %v605
      %v1178 = vunpack.c.l.b16 %v606
      %v1179 = vunpack.c.l.b16 %v607
      %v1180 = vunpack.c.l.b16 %v608
      %v1181 = vunpack.c.l.b16 %v609
      %v1182 = vunpack.c.l.b16 %v610
      %v1183 = vunpack.c.l.b16 %v611
      %v1184 = vpack.c.b16 %v1153, %v1152
      %v1185 = vpack.c.b16 %v1155, %v1154
      %v1186 = vpack.c.b16 %v1157, %v1156
      %v1187 = vpack.c.b16 %v1159, %v1158
      %v1188 = vpack.c.b16 %v1161, %v1160
      %v1189 = vpack.c.b16 %v1163, %v1162
      %v1190 = vpack.c.b16 %v1165, %v1164
      %v1191 = vpack.c.b16 %v1167, %v1166
      %v1192 = vpack.c.b16 %v1169, %v1168
      %v1193 = vpack.c.b16 %v1171, %v1170
      %v1194 = vpack.c.b16 %v1173, %v1172
      %v1195 = vpack.c.b16 %v1175, %v1174
      %v1196 = vpack.c.b16 %v1177, %v1176
      %v1197 = vpack.c.b16 %v1179, %v1178
      %v1198 = vpack.c.b16 %v1181, %v1180
      %v1199 = vpack.c.b16 %v1183, %v1182
      %1216 = vmatprep.subr.bf16.mxu0 0
      %1217 = vmatpush1.bf16.msra.mxu0 %v1191
      %1218 = vmatprep.subr.bf16.mxu0 0
      %1219 = vmatpush1.bf16.msra.mxu0 %v1190
      %1220 = vmatprep.subr.bf16.mxu0 0
      %1221 = vmatpush1.bf16.msra.mxu0 %v1189
      %1222 = vmatprep.subr.bf16.mxu0 0
      %1223 = vmatpush1.bf16.msra.mxu0 %v1188
      %1224 = vmatprep.subr.bf16.mxu0 0
      %1225 = vmatpush1.bf16.msra.mxu0 %v1187
      %1226 = vmatprep.subr.bf16.mxu0 0
      %1227 = vmatpush1.bf16.msra.mxu0 %v1186
      %1228 = vmatprep.subr.bf16.mxu0 0
      %1229 = vmatpush1.bf16.msra.mxu0 %v1185
      %1230 = vmatprep.subr.bf16.mxu0 0
      %1231 = vmatpush1.bf16.msra.mxu0 %v1184
      %1232 = vmatprep.subr.bf16.mxu0 0
      %1233 = vmatpush2.bf16.msra.mxu0 %v1199
      %1234 = vmatprep.subr.bf16.mxu0 0
      %1235 = vmatpush2.bf16.msra.mxu0 %v1198
      %1236 = vmatprep.subr.bf16.mxu0 0
      %1237 = vmatpush2.bf16.msra.mxu0 %v1197
      %1238 = vmatprep.subr.bf16.mxu0 0
      %1239 = vmatpush2.bf16.msra.mxu0 %v1196
      %1240 = vmatprep.subr.bf16.mxu0 0
      %1241 = vmatpush2.bf16.msra.mxu0 %v1195
      %1242 = vmatprep.subr.bf16.mxu0 0
      %1243 = vmatpush2.bf16.msra.mxu0 %v1194
      %1244 = vmatprep.subr.bf16.mxu0 0
      %1245 = vmatpush2.bf16.msra.mxu0 %v1193
      %1246 = vmatprep.subr.bf16.mxu0 0
      %1247 = vmatpush2.bf16.msra.mxu0 %v1192
      %1248 = vmatprep.mubr.bf16.mxu0 %v1099
      %1249 = vmatmul.mubr.bf16.gmra.mxu0 %v1098
      %v1250 = vpop.f32.mrf.mxu0
      %v1251 = vadd.f32 %v1118, %v1250
      %v1252 = vpop.f32.mrf.mxu0
      %v1253 = vpop.f32.mrf.mxu0
      %v1254 = vadd.f32 %v1118, %v1253
      %v1255 = vpop.f32.mrf.mxu0
      %1256 = vmatprep.mubr.bf16.mxu0 %v1101
      %1257 = vmatmul.mubr.bf16.gmra.mxu0 %v1100
      %v1258 = vpop.f32.mrf.mxu0
      %v1259 = vadd.f32 %v1118, %v1258
      %v1260 = vpop.f32.mrf.mxu0
      %v1261 = vpop.f32.mrf.mxu0
      %v1262 = vadd.f32 %v1118, %v1261
      %v1263 = vpop.f32.mrf.mxu0
      %1264 = vmatprep.mubr.bf16.mxu0 %v1103
      %1265 = vmatmul.mubr.bf16.gmra.mxu0 %v1102
      %v1266 = vpop.f32.mrf.mxu0
      %v1267 = vadd.f32 %v1118, %v1266
      %v1268 = vpop.f32.mrf.mxu0
      %v1269 = vpop.f32.mrf.mxu0
      %v1270 = vadd.f32 %v1118, %v1269
      %v1271 = vpop.f32.mrf.mxu0
      %1272 = vmatprep.mubr.bf16.mxu0 %v1105
      %1273 = vmatmul.mubr.bf16.gmra.mxu0 %v1104
      %v1274 = vpop.f32.mrf.mxu0
      %v1275 = vadd.f32 %v1118, %v1274
      %v1276 = vpop.f32.mrf.mxu0
      %v1277 = vpop.f32.mrf.mxu0
      %v1278 = vadd.f32 %v1118, %v1277
      %v1279 = vpop.f32.mrf.mxu0
      %1280 = vmatprep.mubr.bf16.mxu0 %v1107
      %1281 = vmatmul.mubr.bf16.gmra.mxu0 %v1106
      %v1282 = vpop.f32.mrf.mxu0
      %v1283 = vadd.f32 %v1118, %v1282
      %v1284 = vpop.f32.mrf.mxu0
      %v1285 = vpop.f32.mrf.mxu0
      %v1286 = vadd.f32 %v1118, %v1285
      %v1287 = vpop.f32.mrf.mxu0
      %1288 = vmatprep.mubr.bf16.mxu0 %v1109
      %1289 = vmatmul.mubr.bf16.gmra.mxu0 %v1108
      %v1290 = vpop.f32.mrf.mxu0
      %v1291 = vadd.f32 %v1118, %v1290
      %v1292 = vpop.f32.mrf.mxu0
      %v1293 = vpop.f32.mrf.mxu0
      %v1294 = vadd.f32 %v1118, %v1293
      %v1295 = vpop.f32.mrf.mxu0
      %1296 = vmatprep.mubr.bf16.mxu0 %v1111
      %1297 = vmatmul.mubr.bf16.gmra.mxu0 %v1110
      %v1298 = vpop.f32.mrf.mxu0
      %v1299 = vadd.f32 %v1118, %v1298
      %v1300 = vpop.f32.mrf.mxu0
      %v1301 = vpop.f32.mrf.mxu0
      %v1302 = vadd.f32 %v1118, %v1301
      %v1303 = vpop.f32.mrf.mxu0
      %1304 = vmatprep.mubr.bf16.mxu0 %v1113
      %1305 = vmatmul.mubr.bf16.gmra.mxu0 %v1112
      %v1306 = vpop.f32.mrf.mxu0
      %v1307 = vadd.f32 %v1118, %v1306
      %v1308 = vpop.f32.mrf.mxu0
      %v1309 = vpop.f32.mrf.mxu0
      %v1310 = vadd.f32 %v1118, %v1309
      %v1311 = vpop.f32.mrf.mxu0
      %1312 = vdwg.mxu0
      %v1313 = vmax.f32 %v1251, 0.0
      %v1314 = vmax.f32 %v1254, 0.0
      %v1315 = vmax.f32 %v1259, 0.0
      %v1316 = vmax.f32 %v1262, 0.0
      %v1317 = vmax.f32 %v1267, 0.0
      %v1318 = vmax.f32 %v1270, 0.0
      %v1319 = vmax.f32 %v1275, 0.0
      %v1320 = vmax.f32 %v1278, 0.0
      %v1321 = vmax.f32 %v1283, 0.0
      %v1322 = vmax.f32 %v1286, 0.0
      %v1323 = vmax.f32 %v1291, 0.0
      %v1324 = vmax.f32 %v1294, 0.0
      %v1325 = vmax.f32 %v1299, 0.0
      %v1326 = vmax.f32 %v1302, 0.0
      %v1327 = vmax.f32 %v1307, 0.0
      %v1328 = vmax.f32 %v1310, 0.0
      %v1329 = vlaneseq
      %v1330 = vshrl.u32 %v1329, 7
      %v1331 = vadd.s32 %v1330, 8
      %vm1332 = vcmp.lt.s32.totalorder %v1330, 14
      %vm1333 = vcmp.lt.s32.totalorder %v1331, 14
      %v1334 = vsel %vm1332, %v1313, 0.0
      %v1335 = vsel %vm1333, %v1314, 0.0
      %v1336 = vsel %vm1332, %v1315, 0.0
      %v1337 = vsel %vm1333, %v1316, 0.0
      %v1338 = vsel %vm1332, %v1317, 0.0
      %v1339 = vsel %vm1333, %v1318, 0.0
      %v1340 = vsel %vm1332, %v1319, 0.0
      %v1341 = vsel %vm1333, %v1320, 0.0
      %v1342 = vsel %vm1332, %v1321, 0.0
      %v1343 = vsel %vm1333, %v1322, 0.0
      %v1344 = vsel %vm1332, %v1323, 0.0
      %v1345 = vsel %vm1333, %v1324, 0.0
      %v1346 = vsel %vm1332, %v1325, 0.0
      %v1347 = vsel %vm1333, %v1326, 0.0
      %v1348 = vsel %vm1332, %v1327, 0.0
      %v1349 = vsel %vm1333, %v1328, 0.0
      %v1350 = vmax.f32 %v1334, %v1335
      %v1351 = vrot.slane %v1350, 4
      %v1352 = vmax.f32 %v1350, %v1351
      %v1353 = vrot.slane %v1352, 2
      %v1354 = vmax.f32 %v1352, %v1353
      %v1355 = vrot.slane %v1354, 1
      %v1356 = vmax.f32 %v1354, %v1355
      %v1357 = vmax.f32 %v1336, %v1337
      %v1358 = vrot.slane %v1357, 4
      %v1359 = vmax.f32 %v1357, %v1358
      %v1360 = vrot.slane %v1359, 2
      %v1361 = vmax.f32 %v1359, %v1360
      %v1362 = vrot.slane %v1361, 1
      %v1363 = vmax.f32 %v1361, %v1362
      %v1364 = vmax.f32 %v1338, %v1339
      %v1365 = vrot.slane %v1364, 4
      %v1366 = vmax.f32 %v1364, %v1365
      %v1367 = vrot.slane %v1366, 2
      %v1368 = vmax.f32 %v1366, %v1367
      %v1369 = vrot.slane %v1368, 1
      %v1370 = vmax.f32 %v1368, %v1369
      %v1371 = vmax.f32 %v1340, %v1341
      %v1372 = vrot.slane %v1371, 4
      %v1373 = vmax.f32 %v1371, %v1372
      %v1374 = vrot.slane %v1373, 2
      %v1375 = vmax.f32 %v1373, %v1374
      %v1376 = vrot.slane %v1375, 1
      %v1377 = vmax.f32 %v1375, %v1376
      %v1378 = vmax.f32 %v1342, %v1343
      %v1379 = vrot.slane %v1378, 4
      %v1380 = vmax.f32 %v1378, %v1379
      %v1381 = vrot.slane %v1380, 2
      %v1382 = vmax.f32 %v1380, %v1381
      %v1383 = vrot.slane %v1382, 1
      %v1384 = vmax.f32 %v1382, %v1383
      %v1385 = vmax.f32 %v1344, %v1345
      %v1386 = vrot.slane %v1385, 4
      %v1387 = vmax.f32 %v1385, %v1386
      %v1388 = vrot.slane %v1387, 2
      %v1389 = vmax.f32 %v1387, %v1388
      %v1390 = vrot.slane %v1389, 1
      %v1391 = vmax.f32 %v1389, %v1390
      %v1392 = vmax.f32 %v1346, %v1347
      %v1393 = vrot.slane %v1392, 4
      %v1394 = vmax.f32 %v1392, %v1393
      %v1395 = vrot.slane %v1394, 2
      %v1396 = vmax.f32 %v1394, %v1395
      %v1397 = vrot.slane %v1396, 1
      %v1398 = vmax.f32 %v1396, %v1397
      %v1399 = vmax.f32 %v1348, %v1349
      %v1400 = vrot.slane %v1399, 4
      %v1401 = vmax.f32 %v1399, %v1400
      %v1402 = vrot.slane %v1401, 2
      %v1403 = vmax.f32 %v1401, %v1402
      %v1404 = vrot.slane %v1403, 1
      %v1405 = vmax.f32 %v1403, %v1404
      %v1406 = vld [vmem:[%s5] sm:$0xf]
      %v1407 = vld [vmem:[%s5 + $0x4] sm:$0xf]
      %v1408 = vld [vmem:[%s5 + $0x8] sm:$0xf]
      %v1409 = vld [vmem:[%s5 + $0xc] sm:$0xf]
      %v1410 = vld [vmem:[%s5 + $0x10] sm:$0xf]
      %v1411 = vld [vmem:[%s5 + $0x14] sm:$0xf]
      %v1412 = vld [vmem:[%s5 + $0x18] sm:$0xf]
      %v1413 = vld [vmem:[%s5 + $0x1c] sm:$0xf]
      %v1414 = vld [vmem:[%s5 + $0x20] sm:$0xf]
      %v1415 = vld [vmem:[%s5 + $0x24] sm:$0xf]
      %v1416 = vld [vmem:[%s5 + $0x28] sm:$0xf]
      %v1417 = vld [vmem:[%s5 + $0x2c] sm:$0xf]
      %v1418 = vld [vmem:[%s5 + $0x30] sm:$0xf]
      %v1419 = vld [vmem:[%s5 + $0x34] sm:$0xf]
      %v1420 = vld [vmem:[%s5 + $0x38] sm:$0xf]
      %v1421 = vld [vmem:[%s5 + $0x3c] sm:$0xf]
      %v1422 = vld [vmem:[%s5 + $0x40] sm:$0xf]
      %v1423 = vld [vmem:[%s5 + $0x44] sm:$0xf]
      %v1424 = vld [vmem:[%s5 + $0x48] sm:$0xf]
      %v1425 = vld [vmem:[%s5 + $0x4c] sm:$0xf]
      %v1426 = vld [vmem:[%s5 + $0x50] sm:$0xf]
      %v1427 = vld [vmem:[%s5 + $0x54] sm:$0xf]
      %v1428 = vld [vmem:[%s5 + $0x58] sm:$0xf]
      %v1429 = vld [vmem:[%s5 + $0x5c] sm:$0xf]
      %v1430 = vld [vmem:[%s6] sm:$0x1]
      %v1431 = vld [vmem:[%s7] sm:$0xf]
      %v1432 = vld [vmem:[%s7 + $0x4] sm:$0xf]
      %v1433 = vld [vmem:[%s7 + $0x8] sm:$0xf]
      %v1434 = vld [vmem:[%s7 + $0xc] sm:$0xf]
      %v1435 = vld [vmem:[%s7 + $0x10] sm:$0xf]
      %v1436 = vld [vmem:[%s7 + $0x14] sm:$0xf]
      %v1437 = vld [vmem:[%s7 + $0x18] sm:$0xf]
      %v1438 = vld [vmem:[%s7 + $0x1c] sm:$0xf]
      %v1439 = vld [vmem:[%s7 + $0x20] sm:$0xf]
      %v1440 = vld [vmem:[%s7 + $0x24] sm:$0xf]
      %v1441 = vld [vmem:[%s7 + $0x28] sm:$0xf]
      %v1442 = vld [vmem:[%s7 + $0x2c] sm:$0xf]
      %v1443 = vld [vmem:[%s7 + $0x30] sm:$0xf]
      %v1444 = vld [vmem:[%s7 + $0x34] sm:$0xf]
      %v1445 = vld [vmem:[%s7 + $0x38] sm:$0xf]
      %v1446 = vld [vmem:[%s7 + $0x3c] sm:$0xf]
      %v1447 = vld [vmem:[%s7 + $0x40] sm:$0xf]
      %v1448 = vld [vmem:[%s7 + $0x44] sm:$0xf]
      %v1449 = vld [vmem:[%s7 + $0x48] sm:$0xf]
      %v1450 = vld [vmem:[%s7 + $0x4c] sm:$0xf]
      %v1451 = vld [vmem:[%s7 + $0x50] sm:$0xf]
      %v1452 = vld [vmem:[%s7 + $0x54] sm:$0xf]
      %v1453 = vld [vmem:[%s7 + $0x58] sm:$0xf]
      %v1454 = vld [vmem:[%s7 + $0x5c] sm:$0xf]
      %v1455 = vld [vmem:[%s7 + $0x60] sm:$0xf]
      %v1456 = vld [vmem:[%s7 + $0x64] sm:$0xf]
      %v1457 = vld [vmem:[%s7 + $0x68] sm:$0xf]
      %v1458 = vld [vmem:[%s7 + $0x6c] sm:$0xf]
      %v1459 = vld [vmem:[%s7 + $0x70] sm:$0xf]
      %v1460 = vld [vmem:[%s7 + $0x74] sm:$0xf]
      %v1461 = vld [vmem:[%s7 + $0x78] sm:$0xf]
      %v1462 = vld [vmem:[%s7 + $0x7c] sm:$0xf]
      %v1463 = vld [vmem:[%s7 + $0x80] sm:$0xf]
      %v1464 = vld [vmem:[%s7 + $0x84] sm:$0xf]
      %v1465 = vld [vmem:[%s7 + $0x88] sm:$0xf]
      %v1466 = vld [vmem:[%s7 + $0x8c] sm:$0xf]
      %v1467 = vld [vmem:[%s7 + $0x90] sm:$0xf]
      %v1468 = vld [vmem:[%s7 + $0x94] sm:$0xf]
      %v1469 = vld [vmem:[%s7 + $0x98] sm:$0xf]
      %v1470 = vld [vmem:[%s7 + $0x9c] sm:$0xf]
      %v1471 = vld [vmem:[%s7 + $0xa0] sm:$0xf]
      %v1472 = vld [vmem:[%s7 + $0xa4] sm:$0xf]
      %v1473 = vld [vmem:[%s7 + $0xa8] sm:$0xf]
      %v1474 = vld [vmem:[%s7 + $0xac] sm:$0xf]
      %v1475 = vld [vmem:[%s7 + $0xb0] sm:$0xf]
      %v1476 = vld [vmem:[%s7 + $0xb4] sm:$0xf]
      %v1477 = vld [vmem:[%s7 + $0xb8] sm:$0xf]
      %v1478 = vld [vmem:[%s7 + $0xbc] sm:$0xf]
      %v1479 = vld [vmem:[%s8] sm:$0x1]
      %vm1480 = vcmask 1045504
      %v1481 = vrot.slane %v531, 2
      %v1482 = vrot.slane %v532, 2
      %v1483 = vsel %vm1480, %v1481, %v1482
      %v1484 = vrot.slane %v533, 2
      %v1485 = vsel %vm1480, %v1482, %v1484
      %v1486 = vrot.slane %v534, 2
      %v1487 = vsel %vm1480, %v1484, %v1486
      %v1488 = vrot.slane %v535, 2
      %v1489 = vrot.slane %v536, 2
      %v1490 = vsel %vm1480, %v1488, %v1489
      %v1491 = vrot.slane %v537, 2
      %v1492 = vsel %vm1480, %v1489, %v1491
      %v1493 = vrot.slane %v538, 2
      %v1494 = vsel %vm1480, %v1491, %v1493
      %v1495 = vrot.slane %v539, 2
      %v1496 = vrot.slane %v540, 2
      %v1497 = vsel %vm1480, %v1495, %v1496
      %v1498 = vrot.slane %v541, 2
      %v1499 = vsel %vm1480, %v1496, %v1498
      %v1500 = vrot.slane %v542, 2
      %v1501 = vsel %vm1480, %v1498, %v1500
      %v1502 = vrot.slane %v543, 2
      %v1503 = vrot.slane %v544, 2
      %v1504 = vsel %vm1480, %v1502, %v1503
      %v1505 = vrot.slane %v545, 2
      %v1506 = vsel %vm1480, %v1503, %v1505
      %v1507 = vrot.slane %v546, 2
      %v1508 = vsel %vm1480, %v1505, %v1507
      %v1509 = vrot.slane %v547, 2
      %v1510 = vrot.slane %v548, 2
      %v1511 = vsel %vm1480, %v1509, %v1510
      %v1512 = vrot.slane %v549, 2
      %v1513 = vsel %vm1480, %v1510, %v1512
      %v1514 = vrot.slane %v550, 2
      %v1515 = vsel %vm1480, %v1512, %v1514
      %v1516 = vrot.slane %v551, 2
      %v1517 = vrot.slane %v552, 2
      %v1518 = vsel %vm1480, %v1516, %v1517
      %v1519 = vrot.slane %v553, 2
      %v1520 = vsel %vm1480, %v1517, %v1519
      %v1521 = vrot.slane %v554, 2
      %v1522 = vsel %vm1480, %v1519, %v1521
      %v1523 = vrot.slane %v555, 2
      %v1524 = vrot.slane %v556, 2
      %v1525 = vsel %vm1480, %v1523, %v1524
      %v1526 = vrot.slane %v557, 2
      %v1527 = vsel %vm1480, %v1524, %v1526
      %v1528 = vrot.slane %v558, 2
      %v1529 = vsel %vm1480, %v1526, %v1528
      %v1530 = vrot.slane %v559, 2
      %v1531 = vrot.slane %v560, 2
      %v1532 = vsel %vm1480, %v1530, %v1531
      %v1533 = vrot.slane %v561, 2
      %v1534 = vsel %vm1480, %v1531, %v1533
      %v1535 = vrot.slane %v562, 2
      %v1536 = vsel %vm1480, %v1533, %v1535
      %v1561 = vpack.c.bf16 %v1485, %v1483
      %v1562 = vpack.c.bf16 %v1490, %v1487
      %v1563 = vpack.c.bf16 %v1494, %v1492
      %v1564 = vpack.c.bf16 %v1499, %v1497
      %v1565 = vpack.c.bf16 %v1504, %v1501
      %v1566 = vpack.c.bf16 %v1508, %v1506
      %v1567 = vpack.c.bf16 %v1513, %v1511
      %v1568 = vpack.c.bf16 %v1518, %v1515
      %v1569 = vpack.c.bf16 %v1522, %v1520
      %v1570 = vpack.c.bf16 %v1527, %v1525
      %v1571 = vpack.c.bf16 %v1532, %v1529
      %v1572 = vpack.c.bf16 %v1536, %v1534
      %v1574 = vlaneseq
      %v1575 = vshrl.u32 %v1574, 7
      %v1576 = vsub.s32 0, %v1575
      %v1577 = vrot.slane %v1430, %v1576
      %v1603 = vunpack.c.l.b16 %v1406
      %v1604 = vunpack.c.l.b16 %v1407
      %v1605 = vunpack.c.l.b16 %v1408
      %v1606 = vunpack.c.l.b16 %v1409
      %v1607 = vunpack.c.l.b16 %v1410
      %v1608 = vunpack.c.l.b16 %v1411
      %v1609 = vunpack.c.l.b16 %v1412
      %v1610 = vunpack.c.l.b16 %v1413
      %v1611 = vunpack.c.l.b16 %v1414
      %v1612 = vunpack.c.l.b16 %v1415
      %v1613 = vunpack.c.l.b16 %v1416
      %v1614 = vunpack.c.l.b16 %v1417
      %v1615 = vunpack.c.l.b16 %v1418
      %v1616 = vunpack.c.l.b16 %v1419
      %v1617 = vunpack.c.l.b16 %v1420
      %v1618 = vunpack.c.l.b16 %v1421
      %v1619 = vunpack.c.l.b16 %v1422
      %v1620 = vunpack.c.l.b16 %v1423
      %v1621 = vunpack.c.l.b16 %v1424
      %v1622 = vunpack.c.l.b16 %v1425
      %v1623 = vunpack.c.l.b16 %v1426
      %v1624 = vunpack.c.l.b16 %v1427
      %v1625 = vunpack.c.l.b16 %v1428
      %v1626 = vunpack.c.l.b16 %v1429
      %v1627 = vpack.c.b16 %v1604, %v1603
      %v1628 = vpack.c.b16 %v1606, %v1605
      %v1629 = vpack.c.b16 %v1608, %v1607
      %v1630 = vpack.c.b16 %v1610, %v1609
      %v1631 = vpack.c.b16 %v1612, %v1611
      %v1632 = vpack.c.b16 %v1614, %v1613
      %v1633 = vpack.c.b16 %v1616, %v1615
      %v1634 = vpack.c.b16 %v1618, %v1617
      %v1635 = vpack.c.b16 %v1620, %v1619
      %v1636 = vpack.c.b16 %v1622, %v1621
      %v1637 = vpack.c.b16 %v1624, %v1623
      %v1638 = vpack.c.b16 %v1626, %v1625
      %v1652 = vsel %vm774, %v1561, 0
      %v1655 = vsel %vm774, %v1562, 0
      %v1658 = vsel %vm774, %v1563, 0
      %v1661 = vsel %vm774, %v1564, 0
      %v1664 = vsel %vm774, %v1565, 0
      %v1667 = vsel %vm774, %v1566, 0
      %v1670 = vsel %vm774, %v1567, 0
      %v1673 = vsel %vm774, %v1568, 0
      %v1676 = vsel %vm774, %v1569, 0
      %v1679 = vsel %vm774, %v1570, 0
      %v1682 = vsel %vm774, %v1571, 0
      %v1685 = vsel %vm774, %v1572, 0
      %1687 = vmatprep.subr.bf16.mxu0 0
      %1688 = vmatpush1.bf16.msra.mxu0 %v1634
      %1689 = vmatprep.subr.bf16.mxu0 0
      %1690 = vmatpush1.bf16.msra.mxu0 %v1633
      %1691 = vmatprep.subr.bf16.mxu0 0
      %1692 = vmatpush1.bf16.msra.mxu0 %v1632
      %1693 = vmatprep.subr.bf16.mxu0 0
      %1694 = vmatpush1.bf16.msra.mxu0 %v1631
      %1695 = vmatprep.subr.bf16.mxu0 0
      %1696 = vmatpush1.bf16.msra.mxu0 %v1630
      %1697 = vmatprep.subr.bf16.mxu0 0
      %1698 = vmatpush1.bf16.msra.mxu0 %v1629
      %1699 = vmatprep.subr.bf16.mxu0 0
      %1700 = vmatpush1.bf16.msra.mxu0 %v1628
      %1701 = vmatprep.subr.bf16.mxu0 0
      %1702 = vmatpush1.bf16.msra.mxu0 %v1627
      %1703 = vmatprep.subr.bf16.mxu0 0
      %1704 = vmatpush2.bf16.msra.mxu0 0
      %1705 = vmatprep.subr.bf16.mxu0 0
      %1706 = vmatpush2.bf16.msra.mxu0 0
      %1707 = vmatprep.subr.bf16.mxu0 0
      %1708 = vmatpush2.bf16.msra.mxu0 0
      %1709 = vmatprep.subr.bf16.mxu0 0
      %1710 = vmatpush2.bf16.msra.mxu0 0
      %1711 = vmatprep.subr.bf16.mxu0 0
      %1712 = vmatpush2.bf16.msra.mxu0 %v1638
      %1713 = vmatprep.subr.bf16.mxu0 0
      %1714 = vmatpush2.bf16.msra.mxu0 %v1637
      %1715 = vmatprep.subr.bf16.mxu0 0
      %1716 = vmatpush2.bf16.msra.mxu0 %v1636
      %1717 = vmatprep.subr.bf16.mxu0 0
      %1718 = vmatpush2.bf16.msra.mxu0 %v1635
      %1719 = vmatprep.mubr.bf16.mxu0 %v1652
      %1720 = vmatmul.mubr.bf16.gmra.mxu0 %v799
      %v1721 = vpop.f32.mrf.mxu0
      %v1722 = vadd.f32 %v1577, %v1721
      %v1723 = vpop.f32.mrf.mxu0
      %v1724 = vpop.f32.mrf.mxu0
      %v1725 = vadd.f32 %v1577, %v1724
      %v1726 = vpop.f32.mrf.mxu0
      %1727 = vmatprep.mubr.bf16.mxu0 %v1655
      %1728 = vmatmul.mubr.bf16.gmra.mxu0 %v800
      %v1729 = vpop.f32.mrf.mxu0
      %v1730 = vadd.f32 %v1577, %v1729
      %v1731 = vpop.f32.mrf.mxu0
      %v1732 = vpop.f32.mrf.mxu0
      %v1733 = vadd.f32 %v1577, %v1732
      %v1734 = vpop.f32.mrf.mxu0
      %1735 = vmatprep.mubr.bf16.mxu0 %v1658
      %1736 = vmatmul.mubr.bf16.gmra.mxu0 %v801
      %v1737 = vpop.f32.mrf.mxu0
      %v1738 = vadd.f32 %v1577, %v1737
      %v1739 = vpop.f32.mrf.mxu0
      %v1740 = vpop.f32.mrf.mxu0
      %v1741 = vadd.f32 %v1577, %v1740
      %v1742 = vpop.f32.mrf.mxu0
      %1743 = vmatprep.mubr.bf16.mxu0 %v1661
      %1744 = vmatmul.mubr.bf16.gmra.mxu0 %v802
      %v1745 = vpop.f32.mrf.mxu0
      %v1746 = vadd.f32 %v1577, %v1745
      %v1747 = vpop.f32.mrf.mxu0
      %v1748 = vpop.f32.mrf.mxu0
      %v1749 = vadd.f32 %v1577, %v1748
      %v1750 = vpop.f32.mrf.mxu0
      %1751 = vmatprep.mubr.bf16.mxu0 %v1664
      %1752 = vmatmul.mubr.bf16.gmra.mxu0 %v803
      %v1753 = vpop.f32.mrf.mxu0
      %v1754 = vadd.f32 %v1577, %v1753
      %v1755 = vpop.f32.mrf.mxu0
      %v1756 = vpop.f32.mrf.mxu0
      %v1757 = vadd.f32 %v1577, %v1756
      %v1758 = vpop.f32.mrf.mxu0
      %1759 = vmatprep.mubr.bf16.mxu0 %v1667
      %1760 = vmatmul.mubr.bf16.gmra.mxu0 %v804
      %v1761 = vpop.f32.mrf.mxu0
      %v1762 = vadd.f32 %v1577, %v1761
      %v1763 = vpop.f32.mrf.mxu0
      %v1764 = vpop.f32.mrf.mxu0
      %v1765 = vadd.f32 %v1577, %v1764
      %v1766 = vpop.f32.mrf.mxu0
      %1767 = vmatprep.mubr.bf16.mxu0 %v1670
      %1768 = vmatmul.mubr.bf16.gmra.mxu0 %v805
      %v1769 = vpop.f32.mrf.mxu0
      %v1770 = vadd.f32 %v1577, %v1769
      %v1771 = vpop.f32.mrf.mxu0
      %v1772 = vpop.f32.mrf.mxu0
      %v1773 = vadd.f32 %v1577, %v1772
      %v1774 = vpop.f32.mrf.mxu0
      %1775 = vmatprep.mubr.bf16.mxu0 %v1673
      %1776 = vmatmul.mubr.bf16.gmra.mxu0 %v806
      %v1777 = vpop.f32.mrf.mxu0
      %v1778 = vadd.f32 %v1577, %v1777
      %v1779 = vpop.f32.mrf.mxu0
      %v1780 = vpop.f32.mrf.mxu0
      %v1781 = vadd.f32 %v1577, %v1780
      %v1782 = vpop.f32.mrf.mxu0
      %1783 = vmatprep.mubr.bf16.mxu0 %v1676
      %1784 = vmatmul.mubr.bf16.gmra.mxu0 %v807
      %v1785 = vpop.f32.mrf.mxu0
      %v1786 = vadd.f32 %v1577, %v1785
      %v1787 = vpop.f32.mrf.mxu0
      %v1788 = vpop.f32.mrf.mxu0
      %v1789 = vadd.f32 %v1577, %v1788
      %v1790 = vpop.f32.mrf.mxu0
      %1791 = vmatprep.mubr.bf16.mxu0 %v1679
      %1792 = vmatmul.mubr.bf16.gmra.mxu0 %v808
      %v1793 = vpop.f32.mrf.mxu0
      %v1794 = vadd.f32 %v1577, %v1793
      %v1795 = vpop.f32.mrf.mxu0
      %v1796 = vpop.f32.mrf.mxu0
      %v1797 = vadd.f32 %v1577, %v1796
      %v1798 = vpop.f32.mrf.mxu0
      %1799 = vmatprep.mubr.bf16.mxu0 %v1682
      %1800 = vmatmul.mubr.bf16.gmra.mxu0 %v809
      %v1801 = vpop.f32.mrf.mxu0
      %v1802 = vadd.f32 %v1577, %v1801
      %v1803 = vpop.f32.mrf.mxu0
      %v1804 = vpop.f32.mrf.mxu0
      %v1805 = vadd.f32 %v1577, %v1804
      %v1806 = vpop.f32.mrf.mxu0
      %1807 = vmatprep.mubr.bf16.mxu0 %v1685
      %1808 = vmatmul.mubr.bf16.gmra.mxu0 %v810
      %v1809 = vpop.f32.mrf.mxu0
      %v1810 = vadd.f32 %v1577, %v1809
      %v1811 = vpop.f32.mrf.mxu0
      %v1812 = vpop.f32.mrf.mxu0
      %v1813 = vadd.f32 %v1577, %v1812
      %v1814 = vpop.f32.mrf.mxu0
      %1815 = vdwg.mxu0
      %v1816 = vmax.f32 %v1722, 0.0
      %v1817 = vmax.f32 %v1725, 0.0
      %v1818 = vmax.f32 %v1730, 0.0
      %v1819 = vmax.f32 %v1733, 0.0
      %v1820 = vmax.f32 %v1738, 0.0
      %v1821 = vmax.f32 %v1741, 0.0
      %v1822 = vmax.f32 %v1746, 0.0
      %v1823 = vmax.f32 %v1749, 0.0
      %v1824 = vmax.f32 %v1754, 0.0
      %v1825 = vmax.f32 %v1757, 0.0
      %v1826 = vmax.f32 %v1762, 0.0
      %v1827 = vmax.f32 %v1765, 0.0
      %v1828 = vmax.f32 %v1770, 0.0
      %v1829 = vmax.f32 %v1773, 0.0
      %v1830 = vmax.f32 %v1778, 0.0
      %v1831 = vmax.f32 %v1781, 0.0
      %v1832 = vmax.f32 %v1786, 0.0
      %v1833 = vmax.f32 %v1789, 0.0
      %v1834 = vmax.f32 %v1794, 0.0
      %v1835 = vmax.f32 %v1797, 0.0
      %v1836 = vmax.f32 %v1802, 0.0
      %v1837 = vmax.f32 %v1805, 0.0
      %v1838 = vmax.f32 %v1810, 0.0
      %v1839 = vmax.f32 %v1813, 0.0
      %v1864 = vrot.slane %v1816, 1
      %v1865 = vrot.slane %v1817, 1
      %v1866 = vsel %vm645, %v1864, %v1865
      %v1867 = vrot.slane %v1818, 1
      %v1868 = vsel %vm645, %v1865, %v1867
      %v1869 = vrot.slane %v1819, 1
      %v1870 = vrot.slane %v1820, 1
      %v1871 = vsel %vm645, %v1869, %v1870
      %v1872 = vrot.slane %v1821, 1
      %v1873 = vsel %vm645, %v1870, %v1872
      %v1874 = vrot.slane %v1822, 1
      %v1875 = vrot.slane %v1823, 1
      %v1876 = vsel %vm645, %v1874, %v1875
      %v1877 = vrot.slane %v1824, 1
      %v1878 = vsel %vm645, %v1875, %v1877
      %v1879 = vrot.slane %v1825, 1
      %v1880 = vrot.slane %v1826, 1
      %v1881 = vsel %vm645, %v1879, %v1880
      %v1882 = vrot.slane %v1827, 1
      %v1883 = vsel %vm645, %v1880, %v1882
      %v1884 = vrot.slane %v1828, 1
      %v1885 = vrot.slane %v1829, 1
      %v1886 = vsel %vm645, %v1884, %v1885
      %v1887 = vrot.slane %v1830, 1
      %v1888 = vsel %vm645, %v1885, %v1887
      %v1889 = vrot.slane %v1831, 1
      %v1890 = vrot.slane %v1832, 1
      %v1891 = vsel %vm645, %v1889, %v1890
      %v1892 = vrot.slane %v1833, 1
      %v1893 = vsel %vm645, %v1890, %v1892
      %v1894 = vrot.slane %v1834, 1
      %v1895 = vrot.slane %v1835, 1
      %v1896 = vsel %vm645, %v1894, %v1895
      %v1897 = vrot.slane %v1836, 1
      %v1898 = vsel %vm645, %v1895, %v1897
      %v1899 = vrot.slane %v1837, 1
      %v1900 = vrot.slane %v1838, 1
      %v1901 = vsel %vm645, %v1899, %v1900
      %v1902 = vrot.slane %v1839, 1
      %v1903 = vsel %vm645, %v1900, %v1902
      %v1920 = vrot.slane %v1816, 2
      %v1921 = vrot.slane %v1817, 2
      %v1922 = vsel %vm1480, %v1920, %v1921
      %v1923 = vrot.slane %v1818, 2
      %v1924 = vsel %vm1480, %v1921, %v1923
      %v1925 = vrot.slane %v1819, 2
      %v1926 = vrot.slane %v1820, 2
      %v1927 = vsel %vm1480, %v1925, %v1926
      %v1928 = vrot.slane %v1821, 2
      %v1929 = vsel %vm1480, %v1926, %v1928
      %v1930 = vrot.slane %v1822, 2
      %v1931 = vrot.slane %v1823, 2
      %v1932 = vsel %vm1480, %v1930, %v1931
      %v1933 = vrot.slane %v1824, 2
      %v1934 = vsel %vm1480, %v1931, %v1933
      %v1935 = vrot.slane %v1825, 2
      %v1936 = vrot.slane %v1826, 2
      %v1937 = vsel %vm1480, %v1935, %v1936
      %v1938 = vrot.slane %v1827, 2
      %v1939 = vsel %vm1480, %v1936, %v1938
      %v1940 = vrot.slane %v1828, 2
      %v1941 = vrot.slane %v1829, 2
      %v1942 = vsel %vm1480, %v1940, %v1941
      %v1943 = vrot.slane %v1830, 2
      %v1944 = vsel %vm1480, %v1941, %v1943
      %v1945 = vrot.slane %v1831, 2
      %v1946 = vrot.slane %v1832, 2
      %v1947 = vsel %vm1480, %v1945, %v1946
      %v1948 = vrot.slane %v1833, 2
      %v1949 = vsel %vm1480, %v1946, %v1948
      %v1950 = vrot.slane %v1834, 2
      %v1951 = vrot.slane %v1835, 2
      %v1952 = vsel %vm1480, %v1950, %v1951
      %v1953 = vrot.slane %v1836, 2
      %v1954 = vsel %vm1480, %v1951, %v1953
      %v1955 = vrot.slane %v1837, 2
      %v1956 = vrot.slane %v1838, 2
      %v1957 = vsel %vm1480, %v1955, %v1956
      %v1958 = vrot.slane %v1839, 2
      %v1959 = vsel %vm1480, %v1956, %v1958
      %v1976 = vpack.c.bf16 %v1817, %v1816
      %v1977 = vpack.c.bf16 %v1868, %v1866
      %v1978 = vpack.c.bf16 %v1924, %v1922
      %v1979 = vpack.c.bf16 %v1820, %v1819
      %v1980 = vpack.c.bf16 %v1873, %v1871
      %v1981 = vpack.c.bf16 %v1929, %v1927
      %v1982 = vpack.c.bf16 %v1823, %v1822
      %v1983 = vpack.c.bf16 %v1878, %v1876
      %v1984 = vpack.c.bf16 %v1934, %v1932
      %v1985 = vpack.c.bf16 %v1826, %v1825
      %v1986 = vpack.c.bf16 %v1883, %v1881
      %v1987 = vpack.c.bf16 %v1939, %v1937
      %v1988 = vpack.c.bf16 %v1829, %v1828
      %v1989 = vpack.c.bf16 %v1888, %v1886
      %v1990 = vpack.c.bf16 %v1944, %v1942
      %v1991 = vpack.c.bf16 %v1832, %v1831
      %v1992 = vpack.c.bf16 %v1893, %v1891
      %v1993 = vpack.c.bf16 %v1949, %v1947
      %v1994 = vpack.c.bf16 %v1835, %v1834
      %v1995 = vpack.c.bf16 %v1898, %v1896
      %v1996 = vpack.c.bf16 %v1954, %v1952
      %v1997 = vpack.c.bf16 %v1838, %v1837
      %v1998 = vpack.c.bf16 %v1903, %v1901
      %v1999 = vpack.c.bf16 %v1959, %v1957
      %v2001 = vlaneseq
      %v2002 = vshrl.u32 %v2001, 7
      %v2003 = vsub.s32 0, %v2002
      %v2004 = vrot.slane %v1479, %v2003
      %v2054 = vunpack.c.l.b16 %v1431
      %v2055 = vunpack.c.l.b16 %v1432
      %v2056 = vunpack.c.l.b16 %v1433
      %v2057 = vunpack.c.l.b16 %v1434
      %v2058 = vunpack.c.l.b16 %v1435
      %v2059 = vunpack.c.l.b16 %v1436
      %v2060 = vunpack.c.l.b16 %v1437
      %v2061 = vunpack.c.l.b16 %v1438
      %v2062 = vunpack.c.l.b16 %v1439
      %v2063 = vunpack.c.l.b16 %v1440
      %v2064 = vunpack.c.l.b16 %v1441
      %v2065 = vunpack.c.l.b16 %v1442
      %v2066 = vunpack.c.l.b16 %v1443
      %v2067 = vunpack.c.l.b16 %v1444
      %v2068 = vunpack.c.l.b16 %v1445
      %v2069 = vunpack.c.l.b16 %v1446
      %v2070 = vunpack.c.l.b16 %v1447
      %v2071 = vunpack.c.l.b16 %v1448
      %v2072 = vunpack.c.l.b16 %v1449
      %v2073 = vunpack.c.l.b16 %v1450
      %v2074 = vunpack.c.l.b16 %v1451
      %v2075 = vunpack.c.l.b16 %v1452
      %v2076 = vunpack.c.l.b16 %v1453
      %v2077 = vunpack.c.l.b16 %v1454
      %v2078 = vunpack.c.l.b16 %v1455
      %v2079 = vunpack.c.l.b16 %v1456
      %v2080 = vunpack.c.l.b16 %v1457
      %v2081 = vunpack.c.l.b16 %v1458
      %v2082 = vunpack.c.l.b16 %v1459
      %v2083 = vunpack.c.l.b16 %v1460
      %v2084 = vunpack.c.l.b16 %v1461
      %v2085 = vunpack.c.l.b16 %v1462
      %v2086 = vunpack.c.l.b16 %v1463
      %v2087 = vunpack.c.l.b16 %v1464
      %v2088 = vunpack.c.l.b16 %v1465
      %v2089 = vunpack.c.l.b16 %v1466
      %v2090 = vunpack.c.l.b16 %v1467
      %v2091 = vunpack.c.l.b16 %v1468
      %v2092 = vunpack.c.l.b16 %v1469
      %v2093 = vunpack.c.l.b16 %v1470
      %v2094 = vunpack.c.l.b16 %v1471
      %v2095 = vunpack.c.l.b16 %v1472
      %v2096 = vunpack.c.l.b16 %v1473
      %v2097 = vunpack.c.l.b16 %v1474
      %v2098 = vunpack.c.l.b16 %v1475
      %v2099 = vunpack.c.l.b16 %v1476
      %v2100 = vunpack.c.l.b16 %v1477
      %v2101 = vunpack.c.l.b16 %v1478
      %v2102 = vpack.c.b16 %v2055, %v2054
      %v2103 = vpack.c.b16 %v2057, %v2056
      %v2104 = vpack.c.b16 %v2059, %v2058
      %v2105 = vpack.c.b16 %v2061, %v2060
      %v2106 = vpack.c.b16 %v2063, %v2062
      %v2107 = vpack.c.b16 %v2065, %v2064
      %v2108 = vpack.c.b16 %v2067, %v2066
      %v2109 = vpack.c.b16 %v2069, %v2068
      %v2110 = vpack.c.b16 %v2071, %v2070
      %v2111 = vpack.c.b16 %v2073, %v2072
      %v2112 = vpack.c.b16 %v2075, %v2074
      %v2113 = vpack.c.b16 %v2077, %v2076
      %v2114 = vpack.c.b16 %v2079, %v2078
      %v2115 = vpack.c.b16 %v2081, %v2080
      %v2116 = vpack.c.b16 %v2083, %v2082
      %v2117 = vpack.c.b16 %v2085, %v2084
      %v2118 = vpack.c.b16 %v2087, %v2086
      %v2119 = vpack.c.b16 %v2089, %v2088
      %v2120 = vpack.c.b16 %v2091, %v2090
      %v2121 = vpack.c.b16 %v2093, %v2092
      %v2122 = vpack.c.b16 %v2095, %v2094
      %v2123 = vpack.c.b16 %v2097, %v2096
      %v2124 = vpack.c.b16 %v2099, %v2098
      %v2125 = vpack.c.b16 %v2101, %v2100
      %2150 = vmatprep.subr.bf16.mxu0 0
      %2151 = vmatpush1.bf16.msra.mxu0 %v2109
      %2152 = vmatprep.subr.bf16.mxu0 0
      %2153 = vmatpush1.bf16.msra.mxu0 %v2108
      %2154 = vmatprep.subr.bf16.mxu0 0
      %2155 = vmatpush1.bf16.msra.mxu0 %v2107
      %2156 = vmatprep.subr.bf16.mxu0 0
      %2157 = vmatpush1.bf16.msra.mxu0 %v2106
      %2158 = vmatprep.subr.bf16.mxu0 0
      %2159 = vmatpush1.bf16.msra.mxu0 %v2105
      %2160 = vmatprep.subr.bf16.mxu0 0
      %2161 = vmatpush1.bf16.msra.mxu0 %v2104
      %2162 = vmatprep.subr.bf16.mxu0 0
      %2163 = vmatpush1.bf16.msra.mxu0 %v2103
      %2164 = vmatprep.subr.bf16.mxu0 0
      %2165 = vmatpush1.bf16.msra.mxu0 %v2102
      %2166 = vmatprep.subr.bf16.mxu0 0
      %2167 = vmatpush2.bf16.msra.mxu0 %v2117
      %2168 = vmatprep.subr.bf16.mxu0 0
      %2169 = vmatpush2.bf16.msra.mxu0 %v2116
      %2170 = vmatprep.subr.bf16.mxu0 0
      %2171 = vmatpush2.bf16.msra.mxu0 %v2115
      %2172 = vmatprep.subr.bf16.mxu0 0
      %2173 = vmatpush2.bf16.msra.mxu0 %v2114
      %2174 = vmatprep.subr.bf16.mxu0 0
      %2175 = vmatpush2.bf16.msra.mxu0 %v2113
      %2176 = vmatprep.subr.bf16.mxu0 0
      %2177 = vmatpush2.bf16.msra.mxu0 %v2112
      %2178 = vmatprep.subr.bf16.mxu0 0
      %2179 = vmatpush2.bf16.msra.mxu0 %v2111
      %2180 = vmatprep.subr.bf16.mxu0 0
      %2181 = vmatpush2.bf16.msra.mxu0 %v2110
      %2182 = vmatprep.mubr.bf16.mxu0 %v1977
      %2183 = vmatmul.mubr.bf16.gmra.mxu0 %v1976
      %v2184 = vpop.f32.mrf.mxu0
      %v2185 = vadd.f32 %v2004, %v2184
      %v2186 = vpop.f32.mrf.mxu0
      %v2187 = vpop.f32.mrf.mxu0
      %v2188 = vadd.f32 %v2004, %v2187
      %v2189 = vpop.f32.mrf.mxu0
      %2190 = vmatprep.mubr.bf16.mxu0 %v1980
      %2191 = vmatmul.mubr.bf16.gmra.mxu0 %v1979
      %v2192 = vpop.f32.mrf.mxu0
      %v2193 = vadd.f32 %v2004, %v2192
      %v2194 = vpop.f32.mrf.mxu0
      %v2195 = vpop.f32.mrf.mxu0
      %v2196 = vadd.f32 %v2004, %v2195
      %v2197 = vpop.f32.mrf.mxu0
      %2198 = vmatprep.mubr.bf16.mxu0 %v1983
      %2199 = vmatmul.mubr.bf16.gmra.mxu0 %v1982
      %v2200 = vpop.f32.mrf.mxu0
      %v2201 = vadd.f32 %v2004, %v2200
      %v2202 = vpop.f32.mrf.mxu0
      %v2203 = vpop.f32.mrf.mxu0
      %v2204 = vadd.f32 %v2004, %v2203
      %v2205 = vpop.f32.mrf.mxu0
      %2206 = vmatprep.mubr.bf16.mxu0 %v1986
      %2207 = vmatmul.mubr.bf16.gmra.mxu0 %v1985
      %v2208 = vpop.f32.mrf.mxu0
      %v2209 = vadd.f32 %v2004, %v2208
      %v2210 = vpop.f32.mrf.mxu0
      %v2211 = vpop.f32.mrf.mxu0
      %v2212 = vadd.f32 %v2004, %v2211
      %v2213 = vpop.f32.mrf.mxu0
      %2214 = vmatprep.mubr.bf16.mxu0 %v1989
      %2215 = vmatmul.mubr.bf16.gmra.mxu0 %v1988
      %v2216 = vpop.f32.mrf.mxu0
      %v2217 = vadd.f32 %v2004, %v2216
      %v2218 = vpop.f32.mrf.mxu0
      %v2219 = vpop.f32.mrf.mxu0
      %v2220 = vadd.f32 %v2004, %v2219
      %v2221 = vpop.f32.mrf.mxu0
      %2222 = vmatprep.mubr.bf16.mxu0 %v1992
      %2223 = vmatmul.mubr.bf16.gmra.mxu0 %v1991
      %v2224 = vpop.f32.mrf.mxu0
      %v2225 = vadd.f32 %v2004, %v2224
      %v2226 = vpop.f32.mrf.mxu0
      %v2227 = vpop.f32.mrf.mxu0
      %v2228 = vadd.f32 %v2004, %v2227
      %v2229 = vpop.f32.mrf.mxu0
      %2230 = vmatprep.mubr.bf16.mxu0 %v1995
      %2231 = vmatmul.mubr.bf16.gmra.mxu0 %v1994
      %v2232 = vpop.f32.mrf.mxu0
      %v2233 = vadd.f32 %v2004, %v2232
      %v2234 = vpop.f32.mrf.mxu0
      %v2235 = vpop.f32.mrf.mxu0
      %v2236 = vadd.f32 %v2004, %v2235
      %v2237 = vpop.f32.mrf.mxu0
      %2238 = vmatprep.mubr.bf16.mxu0 %v1998
      %2239 = vmatmul.mubr.bf16.gmra.mxu0 %v1997
      %v2240 = vpop.f32.mrf.mxu0
      %v2241 = vadd.f32 %v2004, %v2240
      %v2242 = vpop.f32.mrf.mxu0
      %v2243 = vpop.f32.mrf.mxu0
      %v2244 = vadd.f32 %v2004, %v2243
      %v2245 = vpop.f32.mrf.mxu0
      %2246 = vdwg.mxu0
      %2247 = vmatprep.subr.bf16.mxu0 0
      %2248 = vmatpush1.bf16.msra.mxu0 %v2125
      %2249 = vmatprep.subr.bf16.mxu0 0
      %2250 = vmatpush1.bf16.msra.mxu0 %v2124
      %2251 = vmatprep.subr.bf16.mxu0 0
      %2252 = vmatpush1.bf16.msra.mxu0 %v2123
      %2253 = vmatprep.subr.bf16.mxu0 0
      %2254 = vmatpush1.bf16.msra.mxu0 %v2122
      %2255 = vmatprep.subr.bf16.mxu0 0
      %2256 = vmatpush1.bf16.msra.mxu0 %v2121
      %2257 = vmatprep.subr.bf16.mxu0 0
      %2258 = vmatpush1.bf16.msra.mxu0 %v2120
      %2259 = vmatprep.subr.bf16.mxu0 0
      %2260 = vmatpush1.bf16.msra.mxu0 %v2119
      %2261 = vmatprep.subr.bf16.mxu0 0
      %2262 = vmatpush1.bf16.msra.mxu0 %v2118
      %2263 = vmatprep.subr.bf16.mxu0 0
      %2264 = vmatpush2.bf16.msra.mxu0 0
      %2265 = vmatprep.subr.bf16.mxu0 0
      %2266 = vmatpush2.bf16.msra.mxu0 0
      %2267 = vmatprep.subr.bf16.mxu0 0
      %2268 = vmatpush2.bf16.msra.mxu0 0
      %2269 = vmatprep.subr.bf16.mxu0 0
      %2270 = vmatpush2.bf16.msra.mxu0 0
      %2271 = vmatprep.subr.bf16.mxu0 0
      %2272 = vmatpush2.bf16.msra.mxu0 0
      %2273 = vmatprep.subr.bf16.mxu0 0
      %2274 = vmatpush2.bf16.msra.mxu0 0
      %2275 = vmatprep.subr.bf16.mxu0 0
      %2276 = vmatpush2.bf16.msra.mxu0 0
      %2277 = vmatprep.subr.bf16.mxu0 0
      %2278 = vmatpush2.bf16.msra.mxu0 0
      %2279 = vmatprep.mubr.bf16.mxu0 0
      %2280 = vmatmul.mubr.bf16.gmra.mxu0 %v1978
      %v2281 = vpop.f32.mrf.mxu0
      %v2282 = vadd.f32 %v2185, %v2281
      %v2283 = vpop.f32.mrf.mxu0
      %v2284 = vpop.f32.mrf.mxu0
      %v2285 = vadd.f32 %v2188, %v2284
      %v2286 = vpop.f32.mrf.mxu0
      %2287 = vmatprep.mubr.bf16.mxu0 0
      %2288 = vmatmul.mubr.bf16.gmra.mxu0 %v1981
      %v2289 = vpop.f32.mrf.mxu0
      %v2290 = vadd.f32 %v2193, %v2289
      %v2291 = vpop.f32.mrf.mxu0
      %v2292 = vpop.f32.mrf.mxu0
      %v2293 = vadd.f32 %v2196, %v2292
      %v2294 = vpop.f32.mrf.mxu0
      %2295 = vmatprep.mubr.bf16.mxu0 0
      %2296 = vmatmul.mubr.bf16.gmra.mxu0 %v1984
      %v2297 = vpop.f32.mrf.mxu0
      %v2298 = vadd.f32 %v2201, %v2297
      %v2299 = vpop.f32.mrf.mxu0
      %v2300 = vpop.f32.mrf.mxu0
      %v2301 = vadd.f32 %v2204, %v2300
      %v2302 = vpop.f32.mrf.mxu0
      %2303 = vmatprep.mubr.bf16.mxu0 0
      %2304 = vmatmul.mubr.bf16.gmra.mxu0 %v1987
      %v2305 = vpop.f32.mrf.mxu0
      %v2306 = vadd.f32 %v2209, %v2305
      %v2307 = vpop.f32.mrf.mxu0
      %v2308 = vpop.f32.mrf.mxu0
      %v2309 = vadd.f32 %v2212, %v2308
      %v2310 = vpop.f32.mrf.mxu0
      %2311 = vmatprep.mubr.bf16.mxu0 0
      %2312 = vmatmul.mubr.bf16.gmra.mxu0 %v1990
      %v2313 = vpop.f32.mrf.mxu0
      %v2314 = vadd.f32 %v2217, %v2313
      %v2315 = vpop.f32.mrf.mxu0
      %v2316 = vpop.f32.mrf.mxu0
      %v2317 = vadd.f32 %v2220, %v2316
      %v2318 = vpop.f32.mrf.mxu0
      %2319 = vmatprep.mubr.bf16.mxu0 0
      %2320 = vmatmul.mubr.bf16.gmra.mxu0 %v1993
      %v2321 = vpop.f32.mrf.mxu0
      %v2322 = vadd.f32 %v2225, %v2321
      %v2323 = vpop.f32.mrf.mxu0
      %v2324 = vpop.f32.mrf.mxu0
      %v2325 = vadd.f32 %v2228, %v2324
      %v2326 = vpop.f32.mrf.mxu0
      %2327 = vmatprep.mubr.bf16.mxu0 0
      %2328 = vmatmul.mubr.bf16.gmra.mxu0 %v1996
      %v2329 = vpop.f32.mrf.mxu0
      %v2330 = vadd.f32 %v2233, %v2329
      %v2331 = vpop.f32.mrf.mxu0
      %v2332 = vpop.f32.mrf.mxu0
      %v2333 = vadd.f32 %v2236, %v2332
      %v2334 = vpop.f32.mrf.mxu0
      %2335 = vmatprep.mubr.bf16.mxu0 0
      %2336 = vmatmul.mubr.bf16.gmra.mxu0 %v1999
      %v2337 = vpop.f32.mrf.mxu0
      %v2338 = vadd.f32 %v2241, %v2337
      %v2339 = vpop.f32.mrf.mxu0
      %v2340 = vpop.f32.mrf.mxu0
      %v2341 = vadd.f32 %v2244, %v2340
      %v2342 = vpop.f32.mrf.mxu0
      %2343 = vdwg.mxu0
      %v2344 = vmax.f32 %v2282, 0.0
      %v2345 = vmax.f32 %v2285, 0.0
      %v2346 = vmax.f32 %v2290, 0.0
      %v2347 = vmax.f32 %v2293, 0.0
      %v2348 = vmax.f32 %v2298, 0.0
      %v2349 = vmax.f32 %v2301, 0.0
      %v2350 = vmax.f32 %v2306, 0.0
      %v2351 = vmax.f32 %v2309, 0.0
      %v2352 = vmax.f32 %v2314, 0.0
      %v2353 = vmax.f32 %v2317, 0.0
      %v2354 = vmax.f32 %v2322, 0.0
      %v2355 = vmax.f32 %v2325, 0.0
      %v2356 = vmax.f32 %v2330, 0.0
      %v2357 = vmax.f32 %v2333, 0.0
      %v2358 = vmax.f32 %v2338, 0.0
      %v2359 = vmax.f32 %v2341, 0.0
      %vm2360 = vcmp.lt.s32.totalorder %v1330, 12
      %vm2361 = vcmp.lt.s32.totalorder %v1331, 12
      %v2362 = vsel %vm2360, %v2344, 0.0
      %v2363 = vsel %vm2361, %v2345, 0.0
      %v2364 = vsel %vm2360, %v2346, 0.0
      %v2365 = vsel %vm2361, %v2347, 0.0
      %v2366 = vsel %vm2360, %v2348, 0.0
      %v2367 = vsel %vm2361, %v2349, 0.0
      %v2368 = vsel %vm2360, %v2350, 0.0
      %v2369 = vsel %vm2361, %v2351, 0.0
      %v2370 = vsel %vm2360, %v2352, 0.0
      %v2371 = vsel %vm2361, %v2353, 0.0
      %v2372 = vsel %vm2360, %v2354, 0.0
      %v2373 = vsel %vm2361, %v2355, 0.0
      %v2374 = vsel %vm2360, %v2356, 0.0
      %v2375 = vsel %vm2361, %v2357, 0.0
      %v2376 = vsel %vm2360, %v2358, 0.0
      %v2377 = vsel %vm2361, %v2359, 0.0
      %v2378 = vmax.f32 %v2362, %v2363
      %v2379 = vrot.slane %v2378, 4
      %v2380 = vmax.f32 %v2378, %v2379
      %v2381 = vrot.slane %v2380, 2
      %v2382 = vmax.f32 %v2380, %v2381
      %v2383 = vrot.slane %v2382, 1
      %v2384 = vmax.f32 %v2382, %v2383
      %v2385 = vmax.f32 %v2364, %v2365
      %v2386 = vrot.slane %v2385, 4
      %v2387 = vmax.f32 %v2385, %v2386
      %v2388 = vrot.slane %v2387, 2
      %v2389 = vmax.f32 %v2387, %v2388
      %v2390 = vrot.slane %v2389, 1
      %v2391 = vmax.f32 %v2389, %v2390
      %v2392 = vmax.f32 %v2366, %v2367
      %v2393 = vrot.slane %v2392, 4
      %v2394 = vmax.f32 %v2392, %v2393
      %v2395 = vrot.slane %v2394, 2
      %v2396 = vmax.f32 %v2394, %v2395
      %v2397 = vrot.slane %v2396, 1
      %v2398 = vmax.f32 %v2396, %v2397
      %v2399 = vmax.f32 %v2368, %v2369
      %v2400 = vrot.slane %v2399, 4
      %v2401 = vmax.f32 %v2399, %v2400
      %v2402 = vrot.slane %v2401, 2
      %v2403 = vmax.f32 %v2401, %v2402
      %v2404 = vrot.slane %v2403, 1
      %v2405 = vmax.f32 %v2403, %v2404
      %v2406 = vmax.f32 %v2370, %v2371
      %v2407 = vrot.slane %v2406, 4
      %v2408 = vmax.f32 %v2406, %v2407
      %v2409 = vrot.slane %v2408, 2
      %v2410 = vmax.f32 %v2408, %v2409
      %v2411 = vrot.slane %v2410, 1
      %v2412 = vmax.f32 %v2410, %v2411
      %v2413 = vmax.f32 %v2372, %v2373
      %v2414 = vrot.slane %v2413, 4
      %v2415 = vmax.f32 %v2413, %v2414
      %v2416 = vrot.slane %v2415, 2
      %v2417 = vmax.f32 %v2415, %v2416
      %v2418 = vrot.slane %v2417, 1
      %v2419 = vmax.f32 %v2417, %v2418
      %v2420 = vmax.f32 %v2374, %v2375
      %v2421 = vrot.slane %v2420, 4
      %v2422 = vmax.f32 %v2420, %v2421
      %v2423 = vrot.slane %v2422, 2
      %v2424 = vmax.f32 %v2422, %v2423
      %v2425 = vrot.slane %v2424, 1
      %v2426 = vmax.f32 %v2424, %v2425
      %v2427 = vmax.f32 %v2376, %v2377
      %v2428 = vrot.slane %v2427, 4
      %v2429 = vmax.f32 %v2427, %v2428
      %v2430 = vrot.slane %v2429, 2
      %v2431 = vmax.f32 %v2429, %v2430
      %v2432 = vrot.slane %v2431, 1
      %v2433 = vmax.f32 %v2431, %v2432
      %v2434 = vld [vmem:[%s9] sm:$0xf]
      %v2435 = vld [vmem:[%s9 + $0x4] sm:$0xf]
      %v2436 = vld [vmem:[%s9 + $0x8] sm:$0xf]
      %v2437 = vld [vmem:[%s9 + $0xc] sm:$0xf]
      %v2438 = vld [vmem:[%s9 + $0x10] sm:$0xf]
      %v2439 = vld [vmem:[%s9 + $0x14] sm:$0xf]
      %v2440 = vld [vmem:[%s9 + $0x18] sm:$0xf]
      %v2441 = vld [vmem:[%s9 + $0x1c] sm:$0xf]
      %v2442 = vld [vmem:[%s9 + $0x20] sm:$0xf]
      %v2443 = vld [vmem:[%s9 + $0x24] sm:$0xf]
      %v2444 = vld [vmem:[%s9 + $0x28] sm:$0xf]
      %v2445 = vld [vmem:[%s9 + $0x2c] sm:$0xf]
      %v2446 = vld [vmem:[%s9 + $0x30] sm:$0xf]
      %v2447 = vld [vmem:[%s9 + $0x34] sm:$0xf]
      %v2448 = vld [vmem:[%s9 + $0x38] sm:$0xf]
      %v2449 = vld [vmem:[%s9 + $0x3c] sm:$0xf]
      %v2450 = vld [vmem:[%s9 + $0x40] sm:$0xf]
      %v2451 = vld [vmem:[%s9 + $0x44] sm:$0xf]
      %v2452 = vld [vmem:[%s9 + $0x48] sm:$0xf]
      %v2453 = vld [vmem:[%s9 + $0x4c] sm:$0xf]
      %v2454 = vld [vmem:[%s9 + $0x50] sm:$0xf]
      %v2455 = vld [vmem:[%s9 + $0x54] sm:$0xf]
      %v2456 = vld [vmem:[%s9 + $0x58] sm:$0xf]
      %v2457 = vld [vmem:[%s9 + $0x5c] sm:$0xf]
      %v2458 = vld [vmem:[%s9 + $0x60] sm:$0xf]
      %v2459 = vld [vmem:[%s9 + $0x64] sm:$0xf]
      %v2460 = vld [vmem:[%s9 + $0x68] sm:$0xf]
      %v2461 = vld [vmem:[%s9 + $0x6c] sm:$0xf]
      %v2462 = vld [vmem:[%s9 + $0x70] sm:$0xf]
      %v2463 = vld [vmem:[%s9 + $0x74] sm:$0xf]
      %v2464 = vld [vmem:[%s9 + $0x78] sm:$0xf]
      %v2465 = vld [vmem:[%s9 + $0x7c] sm:$0xf]
      %v2466 = vld [vmem:[%s10] sm:$0x1]
      %v2467 = vld [vmem:[%s11] sm:$0xf]
      %v2468 = vld [vmem:[%s11 + $0x4] sm:$0xf]
      %v2469 = vld [vmem:[%s11 + $0x8] sm:$0xf]
      %v2470 = vld [vmem:[%s11 + $0xc] sm:$0xf]
      %v2471 = vld [vmem:[%s11 + $0x10] sm:$0xf]
      %v2472 = vld [vmem:[%s11 + $0x14] sm:$0xf]
      %v2473 = vld [vmem:[%s11 + $0x18] sm:$0xf]
      %v2474 = vld [vmem:[%s11 + $0x1c] sm:$0xf]
      %v2475 = vld [vmem:[%s11 + $0x20] sm:$0xf]
      %v2476 = vld [vmem:[%s11 + $0x24] sm:$0xf]
      %v2477 = vld [vmem:[%s11 + $0x28] sm:$0xf]
      %v2478 = vld [vmem:[%s11 + $0x2c] sm:$0xf]
      %v2479 = vld [vmem:[%s11 + $0x30] sm:$0xf]
      %v2480 = vld [vmem:[%s11 + $0x34] sm:$0xf]
      %v2481 = vld [vmem:[%s11 + $0x38] sm:$0xf]
      %v2482 = vld [vmem:[%s11 + $0x3c] sm:$0xf]
      %v2483 = vld [vmem:[%s11 + $0x40] sm:$0xf]
      %v2484 = vld [vmem:[%s11 + $0x44] sm:$0xf]
      %v2485 = vld [vmem:[%s11 + $0x48] sm:$0xf]
      %v2486 = vld [vmem:[%s11 + $0x4c] sm:$0xf]
      %v2487 = vld [vmem:[%s11 + $0x50] sm:$0xf]
      %v2488 = vld [vmem:[%s11 + $0x54] sm:$0xf]
      %v2489 = vld [vmem:[%s11 + $0x58] sm:$0xf]
      %v2490 = vld [vmem:[%s11 + $0x5c] sm:$0xf]
      %v2491 = vld [vmem:[%s11 + $0x60] sm:$0xf]
      %v2492 = vld [vmem:[%s11 + $0x64] sm:$0xf]
      %v2493 = vld [vmem:[%s11 + $0x68] sm:$0xf]
      %v2494 = vld [vmem:[%s11 + $0x6c] sm:$0xf]
      %v2495 = vld [vmem:[%s11 + $0x70] sm:$0xf]
      %v2496 = vld [vmem:[%s11 + $0x74] sm:$0xf]
      %v2497 = vld [vmem:[%s11 + $0x78] sm:$0xf]
      %v2498 = vld [vmem:[%s11 + $0x7c] sm:$0xf]
      %v2499 = vld [vmem:[%s11 + $0x80] sm:$0xf]
      %v2500 = vld [vmem:[%s11 + $0x84] sm:$0xf]
      %v2501 = vld [vmem:[%s11 + $0x88] sm:$0xf]
      %v2502 = vld [vmem:[%s11 + $0x8c] sm:$0xf]
      %v2503 = vld [vmem:[%s11 + $0x90] sm:$0xf]
      %v2504 = vld [vmem:[%s11 + $0x94] sm:$0xf]
      %v2505 = vld [vmem:[%s11 + $0x98] sm:$0xf]
      %v2506 = vld [vmem:[%s11 + $0x9c] sm:$0xf]
      %v2507 = vld [vmem:[%s11 + $0xa0] sm:$0xf]
      %v2508 = vld [vmem:[%s11 + $0xa4] sm:$0xf]
      %v2509 = vld [vmem:[%s11 + $0xa8] sm:$0xf]
      %v2510 = vld [vmem:[%s11 + $0xac] sm:$0xf]
      %v2511 = vld [vmem:[%s11 + $0xb0] sm:$0xf]
      %v2512 = vld [vmem:[%s11 + $0xb4] sm:$0xf]
      %v2513 = vld [vmem:[%s11 + $0xb8] sm:$0xf]
      %v2514 = vld [vmem:[%s11 + $0xbc] sm:$0xf]
      %v2515 = vld [vmem:[%s11 + $0xc0] sm:$0xf]
      %v2516 = vld [vmem:[%s11 + $0xc4] sm:$0xf]
      %v2517 = vld [vmem:[%s11 + $0xc8] sm:$0xf]
      %v2518 = vld [vmem:[%s11 + $0xcc] sm:$0xf]
      %v2519 = vld [vmem:[%s11 + $0xd0] sm:$0xf]
      %v2520 = vld [vmem:[%s11 + $0xd4] sm:$0xf]
      %v2521 = vld [vmem:[%s11 + $0xd8] sm:$0xf]
      %v2522 = vld [vmem:[%s11 + $0xdc] sm:$0xf]
      %v2523 = vld [vmem:[%s11 + $0xe0] sm:$0xf]
      %v2524 = vld [vmem:[%s11 + $0xe4] sm:$0xf]
      %v2525 = vld [vmem:[%s11 + $0xe8] sm:$0xf]
      %v2526 = vld [vmem:[%s11 + $0xec] sm:$0xf]
      %v2527 = vld [vmem:[%s11 + $0xf0] sm:$0xf]
      %v2528 = vld [vmem:[%s11 + $0xf4] sm:$0xf]
      %v2529 = vld [vmem:[%s11 + $0xf8] sm:$0xf]
      %v2530 = vld [vmem:[%s11 + $0xfc] sm:$0xf]
      %v2531 = vld [vmem:[%s12] sm:$0x1]
      %vm2532 = vcmask 1044480
      %v2533 = vrot.slane %v531, 3
      %v2534 = vrot.slane %v532, 3
      %v2535 = vsel %vm2532, %v2533, %v2534
      %v2536 = vrot.slane %v533, 3
      %v2537 = vsel %vm2532, %v2534, %v2536
      %v2538 = vrot.slane %v534, 3
      %v2539 = vsel %vm2532, %v2536, %v2538
      %v2540 = vrot.slane %v535, 3
      %v2541 = vrot.slane %v536, 3
      %v2542 = vsel %vm2532, %v2540, %v2541
      %v2543 = vrot.slane %v537, 3
      %v2544 = vsel %vm2532, %v2541, %v2543
      %v2545 = vrot.slane %v538, 3
      %v2546 = vsel %vm2532, %v2543, %v2545
      %v2547 = vrot.slane %v539, 3
      %v2548 = vrot.slane %v540, 3
      %v2549 = vsel %vm2532, %v2547, %v2548
      %v2550 = vrot.slane %v541, 3
      %v2551 = vsel %vm2532, %v2548, %v2550
      %v2552 = vrot.slane %v542, 3
      %v2553 = vsel %vm2532, %v2550, %v2552
      %v2554 = vrot.slane %v543, 3
      %v2555 = vrot.slane %v544, 3
      %v2556 = vsel %vm2532, %v2554, %v2555
      %v2557 = vrot.slane %v545, 3
      %v2558 = vsel %vm2532, %v2555, %v2557
      %v2559 = vrot.slane %v546, 3
      %v2560 = vsel %vm2532, %v2557, %v2559
      %v2561 = vrot.slane %v547, 3
      %v2562 = vrot.slane %v548, 3
      %v2563 = vsel %vm2532, %v2561, %v2562
      %v2564 = vrot.slane %v549, 3
      %v2565 = vsel %vm2532, %v2562, %v2564
      %v2566 = vrot.slane %v550, 3
      %v2567 = vsel %vm2532, %v2564, %v2566
      %v2568 = vrot.slane %v551, 3
      %v2569 = vrot.slane %v552, 3
      %v2570 = vsel %vm2532, %v2568, %v2569
      %v2571 = vrot.slane %v553, 3
      %v2572 = vsel %vm2532, %v2569, %v2571
      %v2573 = vrot.slane %v554, 3
      %v2574 = vsel %vm2532, %v2571, %v2573
      %v2575 = vrot.slane %v555, 3
      %v2576 = vrot.slane %v556, 3
      %v2577 = vsel %vm2532, %v2575, %v2576
      %v2578 = vrot.slane %v557, 3
      %v2579 = vsel %vm2532, %v2576, %v2578
      %v2580 = vrot.slane %v558, 3
      %v2581 = vsel %vm2532, %v2578, %v2580
      %v2582 = vrot.slane %v559, 3
      %v2583 = vrot.slane %v560, 3
      %v2584 = vsel %vm2532, %v2582, %v2583
      %v2585 = vrot.slane %v561, 3
      %v2586 = vsel %vm2532, %v2583, %v2585
      %v2587 = vrot.slane %v562, 3
      %v2588 = vsel %vm2532, %v2585, %v2587
      %2589 = vrot.lane.b32.xlu0 %v2535, 64
      %v2590 = vpop.permute.xlu0 %2589
      %2591 = vrot.lane.b32.xlu0 %v2537, 64
      %v2592 = vpop.permute.xlu0 %2591
      %2593 = vrot.lane.b32.xlu0 %v2539, 64
      %v2594 = vpop.permute.xlu0 %2593
      %2595 = vrot.lane.b32.xlu0 %v2542, 64
      %v2596 = vpop.permute.xlu0 %2595
      %2597 = vrot.lane.b32.xlu0 %v2544, 64
      %v2598 = vpop.permute.xlu0 %2597
      %2599 = vrot.lane.b32.xlu0 %v2546, 64
      %v2600 = vpop.permute.xlu0 %2599
      %2601 = vrot.lane.b32.xlu0 %v2549, 64
      %v2602 = vpop.permute.xlu0 %2601
      %2603 = vrot.lane.b32.xlu0 %v2551, 64
      %v2604 = vpop.permute.xlu0 %2603
      %2605 = vrot.lane.b32.xlu0 %v2553, 64
      %v2606 = vpop.permute.xlu0 %2605
      %2607 = vrot.lane.b32.xlu0 %v2556, 64
      %v2608 = vpop.permute.xlu0 %2607
      %2609 = vrot.lane.b32.xlu0 %v2558, 64
      %v2610 = vpop.permute.xlu0 %2609
      %2611 = vrot.lane.b32.xlu0 %v2560, 64
      %v2612 = vpop.permute.xlu0 %2611
      %2613 = vrot.lane.b32.xlu0 %v2563, 64
      %v2614 = vpop.permute.xlu0 %2613
      %2615 = vrot.lane.b32.xlu0 %v2565, 64
      %v2616 = vpop.permute.xlu0 %2615
      %2617 = vrot.lane.b32.xlu0 %v2567, 64
      %v2618 = vpop.permute.xlu0 %2617
      %2619 = vrot.lane.b32.xlu0 %v2570, 64
      %v2620 = vpop.permute.xlu0 %2619
      %2621 = vrot.lane.b32.xlu0 %v2572, 64
      %v2622 = vpop.permute.xlu0 %2621
      %2623 = vrot.lane.b32.xlu0 %v2574, 64
      %v2624 = vpop.permute.xlu0 %2623
      %2625 = vrot.lane.b32.xlu0 %v2577, 64
      %v2626 = vpop.permute.xlu0 %2625
      %2627 = vrot.lane.b32.xlu0 %v2579, 64
      %v2628 = vpop.permute.xlu0 %2627
      %2629 = vrot.lane.b32.xlu0 %v2581, 64
      %v2630 = vpop.permute.xlu0 %2629
      %2631 = vrot.lane.b32.xlu0 %v2584, 64
      %v2632 = vpop.permute.xlu0 %2631
      %2633 = vrot.lane.b32.xlu0 %v2586, 64
      %v2634 = vpop.permute.xlu0 %2633
      %2635 = vrot.lane.b32.xlu0 %v2588, 64
      %v2636 = vpop.permute.xlu0 %2635
      %v2661 = vsel %vm774, %v1483, %v2590
      %v2662 = vsel %vm774, %v1485, %v2592
      %v2663 = vsel %vm774, %v1487, %v2594
      %v2664 = vsel %vm774, %v1490, %v2596
      %v2665 = vsel %vm774, %v1492, %v2598
      %v2666 = vsel %vm774, %v1494, %v2600
      %v2667 = vsel %vm774, %v1497, %v2602
      %v2668 = vsel %vm774, %v1499, %v2604
      %v2669 = vsel %vm774, %v1501, %v2606
      %v2670 = vsel %vm774, %v1504, %v2608
      %v2671 = vsel %vm774, %v1506, %v2610
      %v2672 = vsel %vm774, %v1508, %v2612
      %v2673 = vsel %vm774, %v1511, %v2614
      %v2674 = vsel %vm774, %v1513, %v2616
      %v2675 = vsel %vm774, %v1515, %v2618
      %v2676 = vsel %vm774, %v1518, %v2620
      %v2677 = vsel %vm774, %v1520, %v2622
      %v2678 = vsel %vm774, %v1522, %v2624
      %v2679 = vsel %vm774, %v1525, %v2626
      %v2680 = vsel %vm774, %v1527, %v2628
      %v2681 = vsel %vm774, %v1529, %v2630
      %v2682 = vsel %vm774, %v1532, %v2632
      %v2683 = vsel %vm774, %v1534, %v2634
      %v2684 = vsel %vm774, %v1536, %v2636
      %v2685 = vpack.c.bf16 %v2662, %v2661
      %v2686 = vpack.c.bf16 %v2664, %v2663
      %v2687 = vpack.c.bf16 %v2666, %v2665
      %v2688 = vpack.c.bf16 %v2668, %v2667
      %v2689 = vpack.c.bf16 %v2670, %v2669
      %v2690 = vpack.c.bf16 %v2672, %v2671
      %v2691 = vpack.c.bf16 %v2674, %v2673
      %v2692 = vpack.c.bf16 %v2676, %v2675
      %v2693 = vpack.c.bf16 %v2678, %v2677
      %v2694 = vpack.c.bf16 %v2680, %v2679
      %v2695 = vpack.c.bf16 %v2682, %v2681
      %v2696 = vpack.c.bf16 %v2684, %v2683
      %v2698 = vlaneseq
      %v2699 = vshrl.u32 %v2698, 7
      %v2700 = vsub.s32 0, %v2699
      %v2701 = vrot.slane %v2466, %v2700
      %v2735 = vunpack.c.l.b16 %v2434
      %v2736 = vunpack.c.l.b16 %v2435
      %v2737 = vunpack.c.l.b16 %v2436
      %v2738 = vunpack.c.l.b16 %v2437
      %v2739 = vunpack.c.l.b16 %v2438
      %v2740 = vunpack.c.l.b16 %v2439
      %v2741 = vunpack.c.l.b16 %v2440
      %v2742 = vunpack.c.l.b16 %v2441
      %v2743 = vunpack.c.l.b16 %v2442
      %v2744 = vunpack.c.l.b16 %v2443
      %v2745 = vunpack.c.l.b16 %v2444
      %v2746 = vunpack.c.l.b16 %v2445
      %v2747 = vunpack.c.l.b16 %v2446
      %v2748 = vunpack.c.l.b16 %v2447
      %v2749 = vunpack.c.l.b16 %v2448
      %v2750 = vunpack.c.l.b16 %v2449
      %v2751 = vunpack.c.l.b16 %v2450
      %v2752 = vunpack.c.l.b16 %v2451
      %v2753 = vunpack.c.l.b16 %v2452
      %v2754 = vunpack.c.l.b16 %v2453
      %v2755 = vunpack.c.l.b16 %v2454
      %v2756 = vunpack.c.l.b16 %v2455
      %v2757 = vunpack.c.l.b16 %v2456
      %v2758 = vunpack.c.l.b16 %v2457
      %v2759 = vunpack.c.l.b16 %v2458
      %v2760 = vunpack.c.l.b16 %v2459
      %v2761 = vunpack.c.l.b16 %v2460
      %v2762 = vunpack.c.l.b16 %v2461
      %v2763 = vunpack.c.l.b16 %v2462
      %v2764 = vunpack.c.l.b16 %v2463
      %v2765 = vunpack.c.l.b16 %v2464
      %v2766 = vunpack.c.l.b16 %v2465
      %v2767 = vpack.c.b16 %v2736, %v2735
      %v2768 = vpack.c.b16 %v2738, %v2737
      %v2769 = vpack.c.b16 %v2740, %v2739
      %v2770 = vpack.c.b16 %v2742, %v2741
      %v2771 = vpack.c.b16 %v2744, %v2743
      %v2772 = vpack.c.b16 %v2746, %v2745
      %v2773 = vpack.c.b16 %v2748, %v2747
      %v2774 = vpack.c.b16 %v2750, %v2749
      %v2775 = vpack.c.b16 %v2752, %v2751
      %v2776 = vpack.c.b16 %v2754, %v2753
      %v2777 = vpack.c.b16 %v2756, %v2755
      %v2778 = vpack.c.b16 %v2758, %v2757
      %v2779 = vpack.c.b16 %v2760, %v2759
      %v2780 = vpack.c.b16 %v2762, %v2761
      %v2781 = vpack.c.b16 %v2764, %v2763
      %v2782 = vpack.c.b16 %v2766, %v2765
      %2799 = vmatprep.subr.bf16.mxu0 0
      %2800 = vmatpush1.bf16.msra.mxu0 %v2774
      %2801 = vmatprep.subr.bf16.mxu0 0
      %2802 = vmatpush1.bf16.msra.mxu0 %v2773
      %2803 = vmatprep.subr.bf16.mxu0 0
      %2804 = vmatpush1.bf16.msra.mxu0 %v2772
      %2805 = vmatprep.subr.bf16.mxu0 0
      %2806 = vmatpush1.bf16.msra.mxu0 %v2771
      %2807 = vmatprep.subr.bf16.mxu0 0
      %2808 = vmatpush1.bf16.msra.mxu0 %v2770
      %2809 = vmatprep.subr.bf16.mxu0 0
      %2810 = vmatpush1.bf16.msra.mxu0 %v2769
      %2811 = vmatprep.subr.bf16.mxu0 0
      %2812 = vmatpush1.bf16.msra.mxu0 %v2768
      %2813 = vmatprep.subr.bf16.mxu0 0
      %2814 = vmatpush1.bf16.msra.mxu0 %v2767
      %2815 = vmatprep.subr.bf16.mxu0 0
      %2816 = vmatpush2.bf16.msra.mxu0 %v2782
      %2817 = vmatprep.subr.bf16.mxu0 0
      %2818 = vmatpush2.bf16.msra.mxu0 %v2781
      %2819 = vmatprep.subr.bf16.mxu0 0
      %2820 = vmatpush2.bf16.msra.mxu0 %v2780
      %2821 = vmatprep.subr.bf16.mxu0 0
      %2822 = vmatpush2.bf16.msra.mxu0 %v2779
      %2823 = vmatprep.subr.bf16.mxu0 0
      %2824 = vmatpush2.bf16.msra.mxu0 %v2778
      %2825 = vmatprep.subr.bf16.mxu0 0
      %2826 = vmatpush2.bf16.msra.mxu0 %v2777
      %2827 = vmatprep.subr.bf16.mxu0 0
      %2828 = vmatpush2.bf16.msra.mxu0 %v2776
      %2829 = vmatprep.subr.bf16.mxu0 0
      %2830 = vmatpush2.bf16.msra.mxu0 %v2775
      %2831 = vmatprep.mubr.bf16.mxu0 %v2685
      %2832 = vmatmul.mubr.bf16.gmra.mxu0 %v799
      %v2833 = vpop.f32.mrf.mxu0
      %v2834 = vadd.f32 %v2701, %v2833
      %v2835 = vpop.f32.mrf.mxu0
      %v2836 = vpop.f32.mrf.mxu0
      %v2837 = vadd.f32 %v2701, %v2836
      %v2838 = vpop.f32.mrf.mxu0
      %2839 = vmatprep.mubr.bf16.mxu0 %v2686
      %2840 = vmatmul.mubr.bf16.gmra.mxu0 %v800
      %v2841 = vpop.f32.mrf.mxu0
      %v2842 = vadd.f32 %v2701, %v2841
      %v2843 = vpop.f32.mrf.mxu0
      %v2844 = vpop.f32.mrf.mxu0
      %v2845 = vadd.f32 %v2701, %v2844
      %v2846 = vpop.f32.mrf.mxu0
      %2847 = vmatprep.mubr.bf16.mxu0 %v2687
      %2848 = vmatmul.mubr.bf16.gmra.mxu0 %v801
      %v2849 = vpop.f32.mrf.mxu0
      %v2850 = vadd.f32 %v2701, %v2849
      %v2851 = vpop.f32.mrf.mxu0
      %v2852 = vpop.f32.mrf.mxu0
      %v2853 = vadd.f32 %v2701, %v2852
      %v2854 = vpop.f32.mrf.mxu0
      %2855 = vmatprep.mubr.bf16.mxu0 %v2688
      %2856 = vmatmul.mubr.bf16.gmra.mxu0 %v802
      %v2857 = vpop.f32.mrf.mxu0
      %v2858 = vadd.f32 %v2701, %v2857
      %v2859 = vpop.f32.mrf.mxu0
      %v2860 = vpop.f32.mrf.mxu0
      %v2861 = vadd.f32 %v2701, %v2860
      %v2862 = vpop.f32.mrf.mxu0
      %2863 = vmatprep.mubr.bf16.mxu0 %v2689
      %2864 = vmatmul.mubr.bf16.gmra.mxu0 %v803
      %v2865 = vpop.f32.mrf.mxu0
      %v2866 = vadd.f32 %v2701, %v2865
      %v2867 = vpop.f32.mrf.mxu0
      %v2868 = vpop.f32.mrf.mxu0
      %v2869 = vadd.f32 %v2701, %v2868
      %v2870 = vpop.f32.mrf.mxu0
      %2871 = vmatprep.mubr.bf16.mxu0 %v2690
      %2872 = vmatmul.mubr.bf16.gmra.mxu0 %v804
      %v2873 = vpop.f32.mrf.mxu0
      %v2874 = vadd.f32 %v2701, %v2873
      %v2875 = vpop.f32.mrf.mxu0
      %v2876 = vpop.f32.mrf.mxu0
      %v2877 = vadd.f32 %v2701, %v2876
      %v2878 = vpop.f32.mrf.mxu0
      %2879 = vmatprep.mubr.bf16.mxu0 %v2691
      %2880 = vmatmul.mubr.bf16.gmra.mxu0 %v805
      %v2881 = vpop.f32.mrf.mxu0
      %v2882 = vadd.f32 %v2701, %v2881
      %v2883 = vpop.f32.mrf.mxu0
      %v2884 = vpop.f32.mrf.mxu0
      %v2885 = vadd.f32 %v2701, %v2884
      %v2886 = vpop.f32.mrf.mxu0
      %2887 = vmatprep.mubr.bf16.mxu0 %v2692
      %2888 = vmatmul.mubr.bf16.gmra.mxu0 %v806
      %v2889 = vpop.f32.mrf.mxu0
      %v2890 = vadd.f32 %v2701, %v2889
      %v2891 = vpop.f32.mrf.mxu0
      %v2892 = vpop.f32.mrf.mxu0
      %v2893 = vadd.f32 %v2701, %v2892
      %v2894 = vpop.f32.mrf.mxu0
      %2895 = vmatprep.mubr.bf16.mxu0 %v2693
      %2896 = vmatmul.mubr.bf16.gmra.mxu0 %v807
      %v2897 = vpop.f32.mrf.mxu0
      %v2898 = vadd.f32 %v2701, %v2897
      %v2899 = vpop.f32.mrf.mxu0
      %v2900 = vpop.f32.mrf.mxu0
      %v2901 = vadd.f32 %v2701, %v2900
      %v2902 = vpop.f32.mrf.mxu0
      %2903 = vmatprep.mubr.bf16.mxu0 %v2694
      %2904 = vmatmul.mubr.bf16.gmra.mxu0 %v808
      %v2905 = vpop.f32.mrf.mxu0
      %v2906 = vadd.f32 %v2701, %v2905
      %v2907 = vpop.f32.mrf.mxu0
      %v2908 = vpop.f32.mrf.mxu0
      %v2909 = vadd.f32 %v2701, %v2908
      %v2910 = vpop.f32.mrf.mxu0
      %2911 = vmatprep.mubr.bf16.mxu0 %v2695
      %2912 = vmatmul.mubr.bf16.gmra.mxu0 %v809
      %v2913 = vpop.f32.mrf.mxu0
      %v2914 = vadd.f32 %v2701, %v2913
      %v2915 = vpop.f32.mrf.mxu0
      %v2916 = vpop.f32.mrf.mxu0
      %v2917 = vadd.f32 %v2701, %v2916
      %v2918 = vpop.f32.mrf.mxu0
      %2919 = vmatprep.mubr.bf16.mxu0 %v2696
      %2920 = vmatmul.mubr.bf16.gmra.mxu0 %v810
      %v2921 = vpop.f32.mrf.mxu0
      %v2922 = vadd.f32 %v2701, %v2921
      %v2923 = vpop.f32.mrf.mxu0
      %v2924 = vpop.f32.mrf.mxu0
      %v2925 = vadd.f32 %v2701, %v2924
      %v2926 = vpop.f32.mrf.mxu0
      %2927 = vdwg.mxu0
      %v2928 = vmax.f32 %v2834, 0.0
      %v2929 = vmax.f32 %v2837, 0.0
      %v2930 = vmax.f32 %v2842, 0.0
      %v2931 = vmax.f32 %v2845, 0.0
      %v2932 = vmax.f32 %v2850, 0.0
      %v2933 = vmax.f32 %v2853, 0.0
      %v2934 = vmax.f32 %v2858, 0.0
      %v2935 = vmax.f32 %v2861, 0.0
      %v2936 = vmax.f32 %v2866, 0.0
      %v2937 = vmax.f32 %v2869, 0.0
      %v2938 = vmax.f32 %v2874, 0.0
      %v2939 = vmax.f32 %v2877, 0.0
      %v2940 = vmax.f32 %v2882, 0.0
      %v2941 = vmax.f32 %v2885, 0.0
      %v2942 = vmax.f32 %v2890, 0.0
      %v2943 = vmax.f32 %v2893, 0.0
      %v2944 = vmax.f32 %v2898, 0.0
      %v2945 = vmax.f32 %v2901, 0.0
      %v2946 = vmax.f32 %v2906, 0.0
      %v2947 = vmax.f32 %v2909, 0.0
      %v2948 = vmax.f32 %v2914, 0.0
      %v2949 = vmax.f32 %v2917, 0.0
      %v2950 = vmax.f32 %v2922, 0.0
      %v2951 = vmax.f32 %v2925, 0.0
      %v2976 = vrot.slane %v2928, 1
      %v2977 = vrot.slane %v2929, 1
      %v2978 = vsel %vm645, %v2976, %v2977
      %v2979 = vrot.slane %v2930, 1
      %v2980 = vsel %vm645, %v2977, %v2979
      %v2981 = vrot.slane %v2931, 1
      %v2982 = vrot.slane %v2932, 1
      %v2983 = vsel %vm645, %v2981, %v2982
      %v2984 = vrot.slane %v2933, 1
      %v2985 = vsel %vm645, %v2982, %v2984
      %v2986 = vrot.slane %v2934, 1
      %v2987 = vrot.slane %v2935, 1
      %v2988 = vsel %vm645, %v2986, %v2987
      %v2989 = vrot.slane %v2936, 1
      %v2990 = vsel %vm645, %v2987, %v2989
      %v2991 = vrot.slane %v2937, 1
      %v2992 = vrot.slane %v2938, 1
      %v2993 = vsel %vm645, %v2991, %v2992
      %v2994 = vrot.slane %v2939, 1
      %v2995 = vsel %vm645, %v2992, %v2994
      %v2996 = vrot.slane %v2940, 1
      %v2997 = vrot.slane %v2941, 1
      %v2998 = vsel %vm645, %v2996, %v2997
      %v2999 = vrot.slane %v2942, 1
      %v3000 = vsel %vm645, %v2997, %v2999
      %v3001 = vrot.slane %v2943, 1
      %v3002 = vrot.slane %v2944, 1
      %v3003 = vsel %vm645, %v3001, %v3002
      %v3004 = vrot.slane %v2945, 1
      %v3005 = vsel %vm645, %v3002, %v3004
      %v3006 = vrot.slane %v2946, 1
      %v3007 = vrot.slane %v2947, 1
      %v3008 = vsel %vm645, %v3006, %v3007
      %v3009 = vrot.slane %v2948, 1
      %v3010 = vsel %vm645, %v3007, %v3009
      %v3011 = vrot.slane %v2949, 1
      %v3012 = vrot.slane %v2950, 1
      %v3013 = vsel %vm645, %v3011, %v3012
      %v3014 = vrot.slane %v2951, 1
      %v3015 = vsel %vm645, %v3012, %v3014
      %v3032 = vrot.slane %v2928, 2
      %v3033 = vrot.slane %v2929, 2
      %v3034 = vsel %vm1480, %v3032, %v3033
      %v3035 = vrot.slane %v2930, 2
      %v3036 = vsel %vm1480, %v3033, %v3035
      %v3037 = vrot.slane %v2931, 2
      %v3038 = vrot.slane %v2932, 2
      %v3039 = vsel %vm1480, %v3037, %v3038
      %v3040 = vrot.slane %v2933, 2
      %v3041 = vsel %vm1480, %v3038, %v3040
      %v3042 = vrot.slane %v2934, 2
      %v3043 = vrot.slane %v2935, 2
      %v3044 = vsel %vm1480, %v3042, %v3043
      %v3045 = vrot.slane %v2936, 2
      %v3046 = vsel %vm1480, %v3043, %v3045
      %v3047 = vrot.slane %v2937, 2
      %v3048 = vrot.slane %v2938, 2
      %v3049 = vsel %vm1480, %v3047, %v3048
      %v3050 = vrot.slane %v2939, 2
      %v3051 = vsel %vm1480, %v3048, %v3050
      %v3052 = vrot.slane %v2940, 2
      %v3053 = vrot.slane %v2941, 2
      %v3054 = vsel %vm1480, %v3052, %v3053
      %v3055 = vrot.slane %v2942, 2
      %v3056 = vsel %vm1480, %v3053, %v3055
      %v3057 = vrot.slane %v2943, 2
      %v3058 = vrot.slane %v2944, 2
      %v3059 = vsel %vm1480, %v3057, %v3058
      %v3060 = vrot.slane %v2945, 2
      %v3061 = vsel %vm1480, %v3058, %v3060
      %v3062 = vrot.slane %v2946, 2
      %v3063 = vrot.slane %v2947, 2
      %v3064 = vsel %vm1480, %v3062, %v3063
      %v3065 = vrot.slane %v2948, 2
      %v3066 = vsel %vm1480, %v3063, %v3065
      %v3067 = vrot.slane %v2949, 2
      %v3068 = vrot.slane %v2950, 2
      %v3069 = vsel %vm1480, %v3067, %v3068
      %v3070 = vrot.slane %v2951, 2
      %v3071 = vsel %vm1480, %v3068, %v3070
      %v3088 = vrot.slane %v2928, 3
      %v3089 = vrot.slane %v2929, 3
      %v3090 = vsel %vm2532, %v3088, %v3089
      %v3091 = vrot.slane %v2930, 3
      %v3092 = vsel %vm2532, %v3089, %v3091
      %v3093 = vrot.slane %v2931, 3
      %v3094 = vrot.slane %v2932, 3
      %v3095 = vsel %vm2532, %v3093, %v3094
      %v3096 = vrot.slane %v2933, 3
      %v3097 = vsel %vm2532, %v3094, %v3096
      %v3098 = vrot.slane %v2934, 3
      %v3099 = vrot.slane %v2935, 3
      %v3100 = vsel %vm2532, %v3098, %v3099
      %v3101 = vrot.slane %v2936, 3
      %v3102 = vsel %vm2532, %v3099, %v3101
      %v3103 = vrot.slane %v2937, 3
      %v3104 = vrot.slane %v2938, 3
      %v3105 = vsel %vm2532, %v3103, %v3104
      %v3106 = vrot.slane %v2939, 3
      %v3107 = vsel %vm2532, %v3104, %v3106
      %v3108 = vrot.slane %v2940, 3
      %v3109 = vrot.slane %v2941, 3
      %v3110 = vsel %vm2532, %v3108, %v3109
      %v3111 = vrot.slane %v2942, 3
      %v3112 = vsel %vm2532, %v3109, %v3111
      %v3113 = vrot.slane %v2943, 3
      %v3114 = vrot.slane %v2944, 3
      %v3115 = vsel %vm2532, %v3113, %v3114
      %v3116 = vrot.slane %v2945, 3
      %v3117 = vsel %vm2532, %v3114, %v3116
      %v3118 = vrot.slane %v2946, 3
      %v3119 = vrot.slane %v2947, 3
      %v3120 = vsel %vm2532, %v3118, %v3119
      %v3121 = vrot.slane %v2948, 3
      %v3122 = vsel %vm2532, %v3119, %v3121
      %v3123 = vrot.slane %v2949, 3
      %v3124 = vrot.slane %v2950, 3
      %v3125 = vsel %vm2532, %v3123, %v3124
      %v3126 = vrot.slane %v2951, 3
      %v3127 = vsel %vm2532, %v3124, %v3126
      %v3144 = vpack.c.bf16 %v2929, %v2928
      %v3145 = vpack.c.bf16 %v2980, %v2978
      %v3146 = vpack.c.bf16 %v3036, %v3034
      %v3147 = vpack.c.bf16 %v3092, %v3090
      %v3148 = vpack.c.bf16 %v2932, %v2931
      %v3149 = vpack.c.bf16 %v2985, %v2983
      %v3150 = vpack.c.bf16 %v3041, %v3039
      %v3151 = vpack.c.bf16 %v3097, %v3095
      %v3152 = vpack.c.bf16 %v2935, %v2934
      %v3153 = vpack.c.bf16 %v2990, %v2988
      %v3154 = vpack.c.bf16 %v3046, %v3044
      %v3155 = vpack.c.bf16 %v3102, %v3100
      %v3156 = vpack.c.bf16 %v2938, %v2937
      %v3157 = vpack.c.bf16 %v2995, %v2993
      %v3158 = vpack.c.bf16 %v3051, %v3049
      %v3159 = vpack.c.bf16 %v3107, %v3105
      %v3160 = vpack.c.bf16 %v2941, %v2940
      %v3161 = vpack.c.bf16 %v3000, %v2998
      %v3162 = vpack.c.bf16 %v3056, %v3054
      %v3163 = vpack.c.bf16 %v3112, %v3110
      %v3164 = vpack.c.bf16 %v2944, %v2943
      %v3165 = vpack.c.bf16 %v3005, %v3003
      %v3166 = vpack.c.bf16 %v3061, %v3059
      %v3167 = vpack.c.bf16 %v3117, %v3115
      %v3168 = vpack.c.bf16 %v2947, %v2946
      %v3169 = vpack.c.bf16 %v3010, %v3008
      %v3170 = vpack.c.bf16 %v3066, %v3064
      %v3171 = vpack.c.bf16 %v3122, %v3120
      %v3172 = vpack.c.bf16 %v2950, %v2949
      %v3173 = vpack.c.bf16 %v3015, %v3013
      %v3174 = vpack.c.bf16 %v3071, %v3069
      %v3175 = vpack.c.bf16 %v3127, %v3125
      %v3177 = vlaneseq
      %v3178 = vshrl.u32 %v3177, 7
      %v3179 = vsub.s32 0, %v3178
      %v3180 = vrot.slane %v2531, %v3179
      %v3246 = vunpack.c.l.b16 %v2467
      %v3247 = vunpack.c.l.b16 %v2468
      %v3248 = vunpack.c.l.b16 %v2469
      %v3249 = vunpack.c.l.b16 %v2470
      %v3250 = vunpack.c.l.b16 %v2471
      %v3251 = vunpack.c.l.b16 %v2472
      %v3252 = vunpack.c.l.b16 %v2473
      %v3253 = vunpack.c.l.b16 %v2474
      %v3254 = vunpack.c.l.b16 %v2475
      %v3255 = vunpack.c.l.b16 %v2476
      %v3256 = vunpack.c.l.b16 %v2477
      %v3257 = vunpack.c.l.b16 %v2478
      %v3258 = vunpack.c.l.b16 %v2479
      %v3259 = vunpack.c.l.b16 %v2480
      %v3260 = vunpack.c.l.b16 %v2481
      %v3261 = vunpack.c.l.b16 %v2482
      %v3262 = vunpack.c.l.b16 %v2483
      %v3263 = vunpack.c.l.b16 %v2484
      %v3264 = vunpack.c.l.b16 %v2485
      %v3265 = vunpack.c.l.b16 %v2486
      %v3266 = vunpack.c.l.b16 %v2487
      %v3267 = vunpack.c.l.b16 %v2488
      %v3268 = vunpack.c.l.b16 %v2489
      %v3269 = vunpack.c.l.b16 %v2490
      %v3270 = vunpack.c.l.b16 %v2491
      %v3271 = vunpack.c.l.b16 %v2492
      %v3272 = vunpack.c.l.b16 %v2493
      %v3273 = vunpack.c.l.b16 %v2494
      %v3274 = vunpack.c.l.b16 %v2495
      %v3275 = vunpack.c.l.b16 %v2496
      %v3276 = vunpack.c.l.b16 %v2497
      %v3277 = vunpack.c.l.b16 %v2498
      %v3278 = vunpack.c.l.b16 %v2499
      %v3279 = vunpack.c.l.b16 %v2500
      %v3280 = vunpack.c.l.b16 %v2501
      %v3281 = vunpack.c.l.b16 %v2502
      %v3282 = vunpack.c.l.b16 %v2503
      %v3283 = vunpack.c.l.b16 %v2504
      %v3284 = vunpack.c.l.b16 %v2505
      %v3285 = vunpack.c.l.b16 %v2506
      %v3286 = vunpack.c.l.b16 %v2507
      %v3287 = vunpack.c.l.b16 %v2508
      %v3288 = vunpack.c.l.b16 %v2509
      %v3289 = vunpack.c.l.b16 %v2510
      %v3290 = vunpack.c.l.b16 %v2511
      %v3291 = vunpack.c.l.b16 %v2512
      %v3292 = vunpack.c.l.b16 %v2513
      %v3293 = vunpack.c.l.b16 %v2514
      %v3294 = vunpack.c.l.b16 %v2515
      %v3295 = vunpack.c.l.b16 %v2516
      %v3296 = vunpack.c.l.b16 %v2517
      %v3297 = vunpack.c.l.b16 %v2518
      %v3298 = vunpack.c.l.b16 %v2519
      %v3299 = vunpack.c.l.b16 %v2520
      %v3300 = vunpack.c.l.b16 %v2521
      %v3301 = vunpack.c.l.b16 %v2522
      %v3302 = vunpack.c.l.b16 %v2523
      %v3303 = vunpack.c.l.b16 %v2524
      %v3304 = vunpack.c.l.b16 %v2525
      %v3305 = vunpack.c.l.b16 %v2526
      %v3306 = vunpack.c.l.b16 %v2527
      %v3307 = vunpack.c.l.b16 %v2528
      %v3308 = vunpack.c.l.b16 %v2529
      %v3309 = vunpack.c.l.b16 %v2530
      %v3310 = vpack.c.b16 %v3247, %v3246
      %v3311 = vpack.c.b16 %v3249, %v3248
      %v3312 = vpack.c.b16 %v3251, %v3250
      %v3313 = vpack.c.b16 %v3253, %v3252
      %v3314 = vpack.c.b16 %v3255, %v3254
      %v3315 = vpack.c.b16 %v3257, %v3256
      %v3316 = vpack.c.b16 %v3259, %v3258
      %v3317 = vpack.c.b16 %v3261, %v3260
      %v3318 = vpack.c.b16 %v3263, %v3262
      %v3319 = vpack.c.b16 %v3265, %v3264
      %v3320 = vpack.c.b16 %v3267, %v3266
      %v3321 = vpack.c.b16 %v3269, %v3268
      %v3322 = vpack.c.b16 %v3271, %v3270
      %v3323 = vpack.c.b16 %v3273, %v3272
      %v3324 = vpack.c.b16 %v3275, %v3274
      %v3325 = vpack.c.b16 %v3277, %v3276
      %v3326 = vpack.c.b16 %v3279, %v3278
      %v3327 = vpack.c.b16 %v3281, %v3280
      %v3328 = vpack.c.b16 %v3283, %v3282
      %v3329 = vpack.c.b16 %v3285, %v3284
      %v3330 = vpack.c.b16 %v3287, %v3286
      %v3331 = vpack.c.b16 %v3289, %v3288
      %v3332 = vpack.c.b16 %v3291, %v3290
      %v3333 = vpack.c.b16 %v3293, %v3292
      %v3334 = vpack.c.b16 %v3295, %v3294
      %v3335 = vpack.c.b16 %v3297, %v3296
      %v3336 = vpack.c.b16 %v3299, %v3298
      %v3337 = vpack.c.b16 %v3301, %v3300
      %v3338 = vpack.c.b16 %v3303, %v3302
      %v3339 = vpack.c.b16 %v3305, %v3304
      %v3340 = vpack.c.b16 %v3307, %v3306
      %v3341 = vpack.c.b16 %v3309, %v3308
      %3374 = vmatprep.subr.bf16.mxu0 0
      %3375 = vmatpush1.bf16.msra.mxu0 %v3317
      %3376 = vmatprep.subr.bf16.mxu0 0
      %3377 = vmatpush1.bf16.msra.mxu0 %v3316
      %3378 = vmatprep.subr.bf16.mxu0 0
      %3379 = vmatpush1.bf16.msra.mxu0 %v3315
      %3380 = vmatprep.subr.bf16.mxu0 0
      %3381 = vmatpush1.bf16.msra.mxu0 %v3314
      %3382 = vmatprep.subr.bf16.mxu0 0
      %3383 = vmatpush1.bf16.msra.mxu0 %v3313
      %3384 = vmatprep.subr.bf16.mxu0 0
      %3385 = vmatpush1.bf16.msra.mxu0 %v3312
      %3386 = vmatprep.subr.bf16.mxu0 0
      %3387 = vmatpush1.bf16.msra.mxu0 %v3311
      %3388 = vmatprep.subr.bf16.mxu0 0
      %3389 = vmatpush1.bf16.msra.mxu0 %v3310
      %3390 = vmatprep.subr.bf16.mxu0 0
      %3391 = vmatpush2.bf16.msra.mxu0 %v3325
      %3392 = vmatprep.subr.bf16.mxu0 0
      %3393 = vmatpush2.bf16.msra.mxu0 %v3324
      %3394 = vmatprep.subr.bf16.mxu0 0
      %3395 = vmatpush2.bf16.msra.mxu0 %v3323
      %3396 = vmatprep.subr.bf16.mxu0 0
      %3397 = vmatpush2.bf16.msra.mxu0 %v3322
      %3398 = vmatprep.subr.bf16.mxu0 0
      %3399 = vmatpush2.bf16.msra.mxu0 %v3321
      %3400 = vmatprep.subr.bf16.mxu0 0
      %3401 = vmatpush2.bf16.msra.mxu0 %v3320
      %3402 = vmatprep.subr.bf16.mxu0 0
      %3403 = vmatpush2.bf16.msra.mxu0 %v3319
      %3404 = vmatprep.subr.bf16.mxu0 0
      %3405 = vmatpush2.bf16.msra.mxu0 %v3318
      %3406 = vmatprep.mubr.bf16.mxu0 %v3145
      %3407 = vmatmul.mubr.bf16.gmra.mxu0 %v3144
      %v3408 = vpop.f32.mrf.mxu0
      %v3409 = vadd.f32 %v3180, %v3408
      %v3410 = vpop.f32.mrf.mxu0
      %v3411 = vpop.f32.mrf.mxu0
      %v3412 = vadd.f32 %v3180, %v3411
      %v3413 = vpop.f32.mrf.mxu0
      %3414 = vmatprep.mubr.bf16.mxu0 %v3149
      %3415 = vmatmul.mubr.bf16.gmra.mxu0 %v3148
      %v3416 = vpop.f32.mrf.mxu0
      %v3417 = vadd.f32 %v3180, %v3416
      %v3418 = vpop.f32.mrf.mxu0
      %v3419 = vpop.f32.mrf.mxu0
      %v3420 = vadd.f32 %v3180, %v3419
      %v3421 = vpop.f32.mrf.mxu0
      %3422 = vmatprep.mubr.bf16.mxu0 %v3153
      %3423 = vmatmul.mubr.bf16.gmra.mxu0 %v3152
      %v3424 = vpop.f32.mrf.mxu0
      %v3425 = vadd.f32 %v3180, %v3424
      %v3426 = vpop.f32.mrf.mxu0
      %v3427 = vpop.f32.mrf.mxu0
      %v3428 = vadd.f32 %v3180, %v3427
      %v3429 = vpop.f32.mrf.mxu0
      %3430 = vmatprep.mubr.bf16.mxu0 %v3157
      %3431 = vmatmul.mubr.bf16.gmra.mxu0 %v3156
      %v3432 = vpop.f32.mrf.mxu0
      %v3433 = vadd.f32 %v3180, %v3432
      %v3434 = vpop.f32.mrf.mxu0
      %v3435 = vpop.f32.mrf.mxu0
      %v3436 = vadd.f32 %v3180, %v3435
      %v3437 = vpop.f32.mrf.mxu0
      %3438 = vmatprep.mubr.bf16.mxu0 %v3161
      %3439 = vmatmul.mubr.bf16.gmra.mxu0 %v3160
      %v3440 = vpop.f32.mrf.mxu0
      %v3441 = vadd.f32 %v3180, %v3440
      %v3442 = vpop.f32.mrf.mxu0
      %v3443 = vpop.f32.mrf.mxu0
      %v3444 = vadd.f32 %v3180, %v3443
      %v3445 = vpop.f32.mrf.mxu0
      %3446 = vmatprep.mubr.bf16.mxu0 %v3165
      %3447 = vmatmul.mubr.bf16.gmra.mxu0 %v3164
      %v3448 = vpop.f32.mrf.mxu0
      %v3449 = vadd.f32 %v3180, %v3448
      %v3450 = vpop.f32.mrf.mxu0
      %v3451 = vpop.f32.mrf.mxu0
      %v3452 = vadd.f32 %v3180, %v3451
      %v3453 = vpop.f32.mrf.mxu0
      %3454 = vmatprep.mubr.bf16.mxu0 %v3169
      %3455 = vmatmul.mubr.bf16.gmra.mxu0 %v3168
      %v3456 = vpop.f32.mrf.mxu0
      %v3457 = vadd.f32 %v3180, %v3456
      %v3458 = vpop.f32.mrf.mxu0
      %v3459 = vpop.f32.mrf.mxu0
      %v3460 = vadd.f32 %v3180, %v3459
      %v3461 = vpop.f32.mrf.mxu0
      %3462 = vmatprep.mubr.bf16.mxu0 %v3173
      %3463 = vmatmul.mubr.bf16.gmra.mxu0 %v3172
      %v3464 = vpop.f32.mrf.mxu0
      %v3465 = vadd.f32 %v3180, %v3464
      %v3466 = vpop.f32.mrf.mxu0
      %v3467 = vpop.f32.mrf.mxu0
      %v3468 = vadd.f32 %v3180, %v3467
      %v3469 = vpop.f32.mrf.mxu0
      %3470 = vdwg.mxu0
      %3471 = vmatprep.subr.bf16.mxu0 0
      %3472 = vmatpush1.bf16.msra.mxu0 %v3333
      %3473 = vmatprep.subr.bf16.mxu0 0
      %3474 = vmatpush1.bf16.msra.mxu0 %v3332
      %3475 = vmatprep.subr.bf16.mxu0 0
      %3476 = vmatpush1.bf16.msra.mxu0 %v3331
      %3477 = vmatprep.subr.bf16.mxu0 0
      %3478 = vmatpush1.bf16.msra.mxu0 %v3330
      %3479 = vmatprep.subr.bf16.mxu0 0
      %3480 = vmatpush1.bf16.msra.mxu0 %v3329
      %3481 = vmatprep.subr.bf16.mxu0 0
      %3482 = vmatpush1.bf16.msra.mxu0 %v3328
      %3483 = vmatprep.subr.bf16.mxu0 0
      %3484 = vmatpush1.bf16.msra.mxu0 %v3327
      %3485 = vmatprep.subr.bf16.mxu0 0
      %3486 = vmatpush1.bf16.msra.mxu0 %v3326
      %3487 = vmatprep.subr.bf16.mxu0 0
      %3488 = vmatpush2.bf16.msra.mxu0 %v3341
      %3489 = vmatprep.subr.bf16.mxu0 0
      %3490 = vmatpush2.bf16.msra.mxu0 %v3340
      %3491 = vmatprep.subr.bf16.mxu0 0
      %3492 = vmatpush2.bf16.msra.mxu0 %v3339
      %3493 = vmatprep.subr.bf16.mxu0 0
      %3494 = vmatpush2.bf16.msra.mxu0 %v3338
      %3495 = vmatprep.subr.bf16.mxu0 0
      %3496 = vmatpush2.bf16.msra.mxu0 %v3337
      %3497 = vmatprep.subr.bf16.mxu0 0
      %3498 = vmatpush2.bf16.msra.mxu0 %v3336
      %3499 = vmatprep.subr.bf16.mxu0 0
      %3500 = vmatpush2.bf16.msra.mxu0 %v3335
      %3501 = vmatprep.subr.bf16.mxu0 0
      %3502 = vmatpush2.bf16.msra.mxu0 %v3334
      %3503 = vmatprep.mubr.bf16.mxu0 %v3147
      %3504 = vmatmul.mubr.bf16.gmra.mxu0 %v3146
      %v3505 = vpop.f32.mrf.mxu0
      %v3506 = vadd.f32 %v3409, %v3505
      %v3507 = vpop.f32.mrf.mxu0
      %v3508 = vpop.f32.mrf.mxu0
      %v3509 = vadd.f32 %v3412, %v3508
      %v3510 = vpop.f32.mrf.mxu0
      %3511 = vmatprep.mubr.bf16.mxu0 %v3151
      %3512 = vmatmul.mubr.bf16.gmra.mxu0 %v3150
      %v3513 = vpop.f32.mrf.mxu0
      %v3514 = vadd.f32 %v3417, %v3513
      %v3515 = vpop.f32.mrf.mxu0
      %v3516 = vpop.f32.mrf.mxu0
      %v3517 = vadd.f32 %v3420, %v3516
      %v3518 = vpop.f32.mrf.mxu0
      %3519 = vmatprep.mubr.bf16.mxu0 %v3155
      %3520 = vmatmul.mubr.bf16.gmra.mxu0 %v3154
      %v3521 = vpop.f32.mrf.mxu0
      %v3522 = vadd.f32 %v3425, %v3521
      %v3523 = vpop.f32.mrf.mxu0
      %v3524 = vpop.f32.mrf.mxu0
      %v3525 = vadd.f32 %v3428, %v3524
      %v3526 = vpop.f32.mrf.mxu0
      %3527 = vmatprep.mubr.bf16.mxu0 %v3159
      %3528 = vmatmul.mubr.bf16.gmra.mxu0 %v3158
      %v3529 = vpop.f32.mrf.mxu0
      %v3530 = vadd.f32 %v3433, %v3529
      %v3531 = vpop.f32.mrf.mxu0
      %v3532 = vpop.f32.mrf.mxu0
      %v3533 = vadd.f32 %v3436, %v3532
      %v3534 = vpop.f32.mrf.mxu0
      %3535 = vmatprep.mubr.bf16.mxu0 %v3163
      %3536 = vmatmul.mubr.bf16.gmra.mxu0 %v3162
      %v3537 = vpop.f32.mrf.mxu0
      %v3538 = vadd.f32 %v3441, %v3537
      %v3539 = vpop.f32.mrf.mxu0
      %v3540 = vpop.f32.mrf.mxu0
      %v3541 = vadd.f32 %v3444, %v3540
      %v3542 = vpop.f32.mrf.mxu0
      %3543 = vmatprep.mubr.bf16.mxu0 %v3167
      %3544 = vmatmul.mubr.bf16.gmra.mxu0 %v3166
      %v3545 = vpop.f32.mrf.mxu0
      %v3546 = vadd.f32 %v3449, %v3545
      %v3547 = vpop.f32.mrf.mxu0
      %v3548 = vpop.f32.mrf.mxu0
      %v3549 = vadd.f32 %v3452, %v3548
      %v3550 = vpop.f32.mrf.mxu0
      %3551 = vmatprep.mubr.bf16.mxu0 %v3171
      %3552 = vmatmul.mubr.bf16.gmra.mxu0 %v3170
      %v3553 = vpop.f32.mrf.mxu0
      %v3554 = vadd.f32 %v3457, %v3553
      %v3555 = vpop.f32.mrf.mxu0
      %v3556 = vpop.f32.mrf.mxu0
      %v3557 = vadd.f32 %v3460, %v3556
      %v3558 = vpop.f32.mrf.mxu0
      %3559 = vmatprep.mubr.bf16.mxu0 %v3175
      %3560 = vmatmul.mubr.bf16.gmra.mxu0 %v3174
      %v3561 = vpop.f32.mrf.mxu0
      %v3562 = vadd.f32 %v3465, %v3561
      %v3563 = vpop.f32.mrf.mxu0
      %v3564 = vpop.f32.mrf.mxu0
      %v3565 = vadd.f32 %v3468, %v3564
      %v3566 = vpop.f32.mrf.mxu0
      %3567 = vdwg.mxu0
      %v3568 = vmax.f32 %v3506, 0.0
      %v3569 = vmax.f32 %v3509, 0.0
      %v3570 = vmax.f32 %v3514, 0.0
      %v3571 = vmax.f32 %v3517, 0.0
      %v3572 = vmax.f32 %v3522, 0.0
      %v3573 = vmax.f32 %v3525, 0.0
      %v3574 = vmax.f32 %v3530, 0.0
      %v3575 = vmax.f32 %v3533, 0.0
      %v3576 = vmax.f32 %v3538, 0.0
      %v3577 = vmax.f32 %v3541, 0.0
      %v3578 = vmax.f32 %v3546, 0.0
      %v3579 = vmax.f32 %v3549, 0.0
      %v3580 = vmax.f32 %v3554, 0.0
      %v3581 = vmax.f32 %v3557, 0.0
      %v3582 = vmax.f32 %v3562, 0.0
      %v3583 = vmax.f32 %v3565, 0.0
      %vm3584 = vcmp.lt.s32.totalorder %v1330, 10
      %vm3585 = vcmp.lt.s32.totalorder %v1331, 10
      %v3586 = vsel %vm3584, %v3568, 0.0
      %v3587 = vsel %vm3585, %v3569, 0.0
      %v3588 = vsel %vm3584, %v3570, 0.0
      %v3589 = vsel %vm3585, %v3571, 0.0
      %v3590 = vsel %vm3584, %v3572, 0.0
      %v3591 = vsel %vm3585, %v3573, 0.0
      %v3592 = vsel %vm3584, %v3574, 0.0
      %v3593 = vsel %vm3585, %v3575, 0.0
      %v3594 = vsel %vm3584, %v3576, 0.0
      %v3595 = vsel %vm3585, %v3577, 0.0
      %v3596 = vsel %vm3584, %v3578, 0.0
      %v3597 = vsel %vm3585, %v3579, 0.0
      %v3598 = vsel %vm3584, %v3580, 0.0
      %v3599 = vsel %vm3585, %v3581, 0.0
      %v3600 = vsel %vm3584, %v3582, 0.0
      %v3601 = vsel %vm3585, %v3583, 0.0
      %v3602 = vmax.f32 %v3586, %v3587
      %v3603 = vrot.slane %v3602, 4
      %v3604 = vmax.f32 %v3602, %v3603
      %v3605 = vrot.slane %v3604, 2
      %v3606 = vmax.f32 %v3604, %v3605
      %v3607 = vrot.slane %v3606, 1
      %v3608 = vmax.f32 %v3606, %v3607
      %v3609 = vmax.f32 %v3588, %v3589
      %v3610 = vrot.slane %v3609, 4
      %v3611 = vmax.f32 %v3609, %v3610
      %v3612 = vrot.slane %v3611, 2
      %v3613 = vmax.f32 %v3611, %v3612
      %v3614 = vrot.slane %v3613, 1
      %v3615 = vmax.f32 %v3613, %v3614
      %v3616 = vmax.f32 %v3590, %v3591
      %v3617 = vrot.slane %v3616, 4
      %v3618 = vmax.f32 %v3616, %v3617
      %v3619 = vrot.slane %v3618, 2
      %v3620 = vmax.f32 %v3618, %v3619
      %v3621 = vrot.slane %v3620, 1
      %v3622 = vmax.f32 %v3620, %v3621
      %v3623 = vmax.f32 %v3592, %v3593
      %v3624 = vrot.slane %v3623, 4
      %v3625 = vmax.f32 %v3623, %v3624
      %v3626 = vrot.slane %v3625, 2
      %v3627 = vmax.f32 %v3625, %v3626
      %v3628 = vrot.slane %v3627, 1
      %v3629 = vmax.f32 %v3627, %v3628
      %v3630 = vmax.f32 %v3594, %v3595
      %v3631 = vrot.slane %v3630, 4
      %v3632 = vmax.f32 %v3630, %v3631
      %v3633 = vrot.slane %v3632, 2
      %v3634 = vmax.f32 %v3632, %v3633
      %v3635 = vrot.slane %v3634, 1
      %v3636 = vmax.f32 %v3634, %v3635
      %v3637 = vmax.f32 %v3596, %v3597
      %v3638 = vrot.slane %v3637, 4
      %v3639 = vmax.f32 %v3637, %v3638
      %v3640 = vrot.slane %v3639, 2
      %v3641 = vmax.f32 %v3639, %v3640
      %v3642 = vrot.slane %v3641, 1
      %v3643 = vmax.f32 %v3641, %v3642
      %v3644 = vmax.f32 %v3598, %v3599
      %v3645 = vrot.slane %v3644, 4
      %v3646 = vmax.f32 %v3644, %v3645
      %v3647 = vrot.slane %v3646, 2
      %v3648 = vmax.f32 %v3646, %v3647
      %v3649 = vrot.slane %v3648, 1
      %v3650 = vmax.f32 %v3648, %v3649
      %v3651 = vmax.f32 %v3600, %v3601
      %v3652 = vrot.slane %v3651, 4
      %v3653 = vmax.f32 %v3651, %v3652
      %v3654 = vrot.slane %v3653, 2
      %v3655 = vmax.f32 %v3653, %v3654
      %v3656 = vrot.slane %v3655, 1
      %v3657 = vmax.f32 %v3655, %v3656
      %vm3666 = vcmask 1041409
      %v3667 = vsel %vm3666, %v1363, %v1356
      %vm3668 = vcmask 1042434
      %v3669 = vsel %vm3668, %v1370, %v3667
      %vm3670 = vcmask 1043459
      %v3671 = vsel %vm3670, %v1377, %v3669
      %vm3672 = vcmask 1044484
      %v3673 = vsel %vm3672, %v1384, %v3671
      %vm3674 = vcmask 1045509
      %v3675 = vsel %vm3674, %v1391, %v3673
      %vm3676 = vcmask 1046534
      %v3677 = vsel %vm3676, %v1398, %v3675
      %vm3678 = vcmask 1047559
      %v3679 = vsel %vm3678, %v1405, %v3677
      %v3689 = vsel %vm3666, %v2391, %v2384
      %v3690 = vsel %vm3668, %v2398, %v3689
      %v3691 = vsel %vm3670, %v2405, %v3690
      %v3692 = vsel %vm3672, %v2412, %v3691
      %v3693 = vsel %vm3674, %v2419, %v3692
      %v3694 = vsel %vm3676, %v2426, %v3693
      %v3695 = vsel %vm3678, %v2433, %v3694
      %v3705 = vsel %vm3666, %v3615, %v3608
      %v3706 = vsel %vm3668, %v3622, %v3705
      %v3707 = vsel %vm3670, %v3629, %v3706
      %v3708 = vsel %vm3672, %v3636, %v3707
      %v3709 = vsel %vm3674, %v3643, %v3708
      %v3710 = vsel %vm3676, %v3650, %v3709
      %v3711 = vsel %vm3678, %v3657, %v3710
      %v3713 = vpack.c.bf16 %v3679, %v3679
      %v3714 = vpack.c.bf16 %v3695, %v3695
      %v3715 = vpack.c.bf16 %v3711, %v3711
      %v3716 = vld [vmem:[%s13] sm:$0xf]
      %v3717 = vld [vmem:[%s13 + $0x4] sm:$0xf]
      %v3718 = vld [vmem:[%s13 + $0x8] sm:$0xf]
      %v3719 = vld [vmem:[%s13 + $0xc] sm:$0xf]
      %v3720 = vld [vmem:[%s13 + $0x10] sm:$0xf]
      %v3721 = vld [vmem:[%s13 + $0x14] sm:$0xf]
      %v3722 = vld [vmem:[%s13 + $0x18] sm:$0xf]
      %v3723 = vld [vmem:[%s13 + $0x1c] sm:$0xf]
      %v3724 = vld [vmem:[%s13 + $0x20] sm:$0xf]
      %v3725 = vld [vmem:[%s13 + $0x24] sm:$0xf]
      %v3726 = vld [vmem:[%s13 + $0x28] sm:$0xf]
      %v3727 = vld [vmem:[%s13 + $0x2c] sm:$0xf]
      %v3728 = vld [vmem:[%s13 + $0x30] sm:$0xf]
      %v3729 = vld [vmem:[%s13 + $0x34] sm:$0xf]
      %v3730 = vld [vmem:[%s13 + $0x38] sm:$0xf]
      %v3731 = vld [vmem:[%s13 + $0x3c] sm:$0xf]
      %v3732 = vld [vmem:[%s13 + $0x40] sm:$0xf]
      %v3733 = vld [vmem:[%s13 + $0x44] sm:$0xf]
      %v3734 = vld [vmem:[%s13 + $0x48] sm:$0xf]
      %v3735 = vld [vmem:[%s13 + $0x4c] sm:$0xf]
      %v3736 = vld [vmem:[%s13 + $0x50] sm:$0xf]
      %v3737 = vld [vmem:[%s13 + $0x54] sm:$0xf]
      %v3738 = vld [vmem:[%s13 + $0x58] sm:$0xf]
      %v3739 = vld [vmem:[%s13 + $0x5c] sm:$0xf]
      %v3740 = vld [vmem:[%s13 + $0x60] sm:$0xf]
      %v3741 = vld [vmem:[%s13 + $0x64] sm:$0xf]
      %v3742 = vld [vmem:[%s13 + $0x68] sm:$0xf]
      %v3743 = vld [vmem:[%s13 + $0x6c] sm:$0xf]
      %v3744 = vld [vmem:[%s13 + $0x70] sm:$0xf]
      %v3745 = vld [vmem:[%s13 + $0x74] sm:$0xf]
      %v3746 = vld [vmem:[%s13 + $0x78] sm:$0xf]
      %v3747 = vld [vmem:[%s13 + $0x7c] sm:$0xf]
      %v3748 = vld [vmem:[%s13 + $0x80] sm:$0xf]
      %v3749 = vld [vmem:[%s13 + $0x84] sm:$0xf]
      %v3750 = vld [vmem:[%s13 + $0x88] sm:$0xf]
      %v3751 = vld [vmem:[%s13 + $0x8c] sm:$0xf]
      %v3752 = vld [vmem:[%s13 + $0x90] sm:$0xf]
      %v3753 = vld [vmem:[%s13 + $0x94] sm:$0xf]
      %v3754 = vld [vmem:[%s13 + $0x98] sm:$0xf]
      %v3755 = vld [vmem:[%s13 + $0x9c] sm:$0xf]
      %v3756 = vld [vmem:[%s13 + $0xa0] sm:$0xf]
      %v3757 = vld [vmem:[%s13 + $0xa4] sm:$0xf]
      %v3758 = vld [vmem:[%s13 + $0xa8] sm:$0xf]
      %v3759 = vld [vmem:[%s13 + $0xac] sm:$0xf]
      %v3760 = vld [vmem:[%s13 + $0xb0] sm:$0xf]
      %v3761 = vld [vmem:[%s13 + $0xb4] sm:$0xf]
      %v3762 = vld [vmem:[%s13 + $0xb8] sm:$0xf]
      %v3763 = vld [vmem:[%s13 + $0xbc] sm:$0xf]
      %v3764 = vld [vmem:[%s14] sm:$0x1]
      %v3766 = vlaneseq
      %v3767 = vshrl.u32 %v3766, 7
      %v3768 = vsub.s32 0, %v3767
      %v3769 = vrot.slane %v3764, %v3768
      %v3819 = vunpack.c.l.b16 %v3716
      %v3820 = vunpack.c.l.b16 %v3717
      %v3821 = vunpack.c.l.b16 %v3718
      %v3822 = vunpack.c.l.b16 %v3719
      %v3823 = vunpack.c.l.b16 %v3720
      %v3824 = vunpack.c.l.b16 %v3721
      %v3825 = vunpack.c.l.b16 %v3722
      %v3826 = vunpack.c.l.b16 %v3723
      %v3827 = vunpack.c.l.b16 %v3724
      %v3828 = vunpack.c.l.b16 %v3725
      %v3829 = vunpack.c.l.b16 %v3726
      %v3830 = vunpack.c.l.b16 %v3727
      %v3831 = vunpack.c.l.b16 %v3728
      %v3832 = vunpack.c.l.b16 %v3729
      %v3833 = vunpack.c.l.b16 %v3730
      %v3834 = vunpack.c.l.b16 %v3731
      %v3835 = vunpack.c.l.b16 %v3732
      %v3836 = vunpack.c.l.b16 %v3733
      %v3837 = vunpack.c.l.b16 %v3734
      %v3838 = vunpack.c.l.b16 %v3735
      %v3839 = vunpack.c.l.b16 %v3736
      %v3840 = vunpack.c.l.b16 %v3737
      %v3841 = vunpack.c.l.b16 %v3738
      %v3842 = vunpack.c.l.b16 %v3739
      %v3843 = vunpack.c.l.b16 %v3740
      %v3844 = vunpack.c.l.b16 %v3741
      %v3845 = vunpack.c.l.b16 %v3742
      %v3846 = vunpack.c.l.b16 %v3743
      %v3847 = vunpack.c.l.b16 %v3744
      %v3848 = vunpack.c.l.b16 %v3745
      %v3849 = vunpack.c.l.b16 %v3746
      %v3850 = vunpack.c.l.b16 %v3747
      %v3851 = vunpack.c.l.b16 %v3748
      %v3852 = vunpack.c.l.b16 %v3749
      %v3853 = vunpack.c.l.b16 %v3750
      %v3854 = vunpack.c.l.b16 %v3751
      %v3855 = vunpack.c.l.b16 %v3752
      %v3856 = vunpack.c.l.b16 %v3753
      %v3857 = vunpack.c.l.b16 %v3754
      %v3858 = vunpack.c.l.b16 %v3755
      %v3859 = vunpack.c.l.b16 %v3756
      %v3860 = vunpack.c.l.b16 %v3757
      %v3861 = vunpack.c.l.b16 %v3758
      %v3862 = vunpack.c.l.b16 %v3759
      %v3863 = vunpack.c.l.b16 %v3760
      %v3864 = vunpack.c.l.b16 %v3761
      %v3865 = vunpack.c.l.b16 %v3762
      %v3866 = vunpack.c.l.b16 %v3763
      %v3867 = vpack.c.b16 %v3820, %v3819
      %v3868 = vpack.c.b16 %v3822, %v3821
      %v3869 = vpack.c.b16 %v3824, %v3823
      %v3870 = vpack.c.b16 %v3826, %v3825
      %v3871 = vpack.c.b16 %v3828, %v3827
      %v3872 = vpack.c.b16 %v3830, %v3829
      %v3873 = vpack.c.b16 %v3832, %v3831
      %v3874 = vpack.c.b16 %v3834, %v3833
      %v3875 = vpack.c.b16 %v3836, %v3835
      %v3876 = vpack.c.b16 %v3838, %v3837
      %v3877 = vpack.c.b16 %v3840, %v3839
      %v3878 = vpack.c.b16 %v3842, %v3841
      %v3879 = vpack.c.b16 %v3844, %v3843
      %v3880 = vpack.c.b16 %v3846, %v3845
      %v3881 = vpack.c.b16 %v3848, %v3847
      %v3882 = vpack.c.b16 %v3850, %v3849
      %v3883 = vpack.c.b16 %v3852, %v3851
      %v3884 = vpack.c.b16 %v3854, %v3853
      %v3885 = vpack.c.b16 %v3856, %v3855
      %v3886 = vpack.c.b16 %v3858, %v3857
      %v3887 = vpack.c.b16 %v3860, %v3859
      %v3888 = vpack.c.b16 %v3862, %v3861
      %v3889 = vpack.c.b16 %v3864, %v3863
      %v3890 = vpack.c.b16 %v3866, %v3865
      %3915 = vmatprep.subr.bf16.mxu0 0
      %3916 = vmatpush1.bf16.msra.mxu0 %v3874
      %3917 = vmatprep.subr.bf16.mxu0 0
      %3918 = vmatpush1.bf16.msra.mxu0 %v3873
      %3919 = vmatprep.subr.bf16.mxu0 0
      %3920 = vmatpush1.bf16.msra.mxu0 %v3872
      %3921 = vmatprep.subr.bf16.mxu0 0
      %3922 = vmatpush1.bf16.msra.mxu0 %v3871
      %3923 = vmatprep.subr.bf16.mxu0 0
      %3924 = vmatpush1.bf16.msra.mxu0 %v3870
      %3925 = vmatprep.subr.bf16.mxu0 0
      %3926 = vmatpush1.bf16.msra.mxu0 %v3869
      %3927 = vmatprep.subr.bf16.mxu0 0
      %3928 = vmatpush1.bf16.msra.mxu0 %v3868
      %3929 = vmatprep.subr.bf16.mxu0 0
      %3930 = vmatpush1.bf16.msra.mxu0 %v3867
      %3931 = vmatprep.subr.bf16.mxu0 0
      %3932 = vmatpush2.bf16.msra.mxu0 %v3882
      %3933 = vmatprep.subr.bf16.mxu0 0
      %3934 = vmatpush2.bf16.msra.mxu0 %v3881
      %3935 = vmatprep.subr.bf16.mxu0 0
      %3936 = vmatpush2.bf16.msra.mxu0 %v3880
      %3937 = vmatprep.subr.bf16.mxu0 0
      %3938 = vmatpush2.bf16.msra.mxu0 %v3879
      %3939 = vmatprep.subr.bf16.mxu0 0
      %3940 = vmatpush2.bf16.msra.mxu0 %v3878
      %3941 = vmatprep.subr.bf16.mxu0 0
      %3942 = vmatpush2.bf16.msra.mxu0 %v3877
      %3943 = vmatprep.subr.bf16.mxu0 0
      %3944 = vmatpush2.bf16.msra.mxu0 %v3876
      %3945 = vmatprep.subr.bf16.mxu0 0
      %3946 = vmatpush2.bf16.msra.mxu0 %v3875
      %3947 = vmatprep.mubr.bf16.mxu0 %v3714
      %3948 = vmatmul.mubr.bf16.gmra.mxu0 %v3713
      %v3949 = vpop.f32.mrf.mxu0
      %v3950 = vadd.f32 %v3769, %v3949
      %v3951 = vpop.f32.mrf.mxu0
      %v3952 = vpop.f32.mrf.mxu0
      %v3953 = vpop.f32.mrf.mxu0
      %3954 = vdwg.mxu0
      %3955 = vmatprep.subr.bf16.mxu0 0
      %3956 = vmatpush1.bf16.msra.mxu0 %v3890
      %3957 = vmatprep.subr.bf16.mxu0 0
      %3958 = vmatpush1.bf16.msra.mxu0 %v3889
      %3959 = vmatprep.subr.bf16.mxu0 0
      %3960 = vmatpush1.bf16.msra.mxu0 %v3888
      %3961 = vmatprep.subr.bf16.mxu0 0
      %3962 = vmatpush1.bf16.msra.mxu0 %v3887
      %3963 = vmatprep.subr.bf16.mxu0 0
      %3964 = vmatpush1.bf16.msra.mxu0 %v3886
      %3965 = vmatprep.subr.bf16.mxu0 0
      %3966 = vmatpush1.bf16.msra.mxu0 %v3885
      %3967 = vmatprep.subr.bf16.mxu0 0
      %3968 = vmatpush1.bf16.msra.mxu0 %v3884
      %3969 = vmatprep.subr.bf16.mxu0 0
      %3970 = vmatpush1.bf16.msra.mxu0 %v3883
      %3971 = vmatprep.subr.bf16.mxu0 0
      %3972 = vmatpush2.bf16.msra.mxu0 0
      %3973 = vmatprep.subr.bf16.mxu0 0
      %3974 = vmatpush2.bf16.msra.mxu0 0
      %3975 = vmatprep.subr.bf16.mxu0 0
      %3976 = vmatpush2.bf16.msra.mxu0 0
      %3977 = vmatprep.subr.bf16.mxu0 0
      %3978 = vmatpush2.bf16.msra.mxu0 0
      %3979 = vmatprep.subr.bf16.mxu0 0
      %3980 = vmatpush2.bf16.msra.mxu0 0
      %3981 = vmatprep.subr.bf16.mxu0 0
      %3982 = vmatpush2.bf16.msra.mxu0 0
      %3983 = vmatprep.subr.bf16.mxu0 0
      %3984 = vmatpush2.bf16.msra.mxu0 0
      %3985 = vmatprep.subr.bf16.mxu0 0
      %3986 = vmatpush2.bf16.msra.mxu0 0
      %3987 = vmatprep.mubr.bf16.mxu0 0
      %3988 = vmatmul.mubr.bf16.gmra.mxu0 %v3715
      %v3989 = vpop.f32.mrf.mxu0
      %v3990 = vadd.f32 %v3950, %v3989
      %v3991 = vpop.f32.mrf.mxu0
      %v3992 = vpop.f32.mrf.mxu0
      %v3993 = vpop.f32.mrf.mxu0
      %3994 = vdwg.mxu0
      %3995 = vst [vmem:[%s497] sm:$0xff] %v3990
      %p3996 = scmp.lt.s32.totalorder %s26, 1
      %s3997 = scalar_select %p3996, %s26, 1
      %s3998 = smul.addr %s3997, 8
      %s3999 = scalar_lea.vmem %s15, %s3998
      // Predicated region
      $region81: #{fasttext_cnn_forward.1} parent=79 // pred_check
        %p4000 = pneg %p364
      $region82: #{fasttext_cnn_forward.1} parent=79 // pred_check_branch
        %4002 = sbr.rel (%p4000) target = $region84
      $region83: #{fasttext_cnn_forward.1} parent=79 // pred_region
        _
      $region84: #{fasttext_cnn_forward.1} parent=79 // pred_fallthru
        _
    $region80: #{fasttext_cnn_forward.1} parent=5 // pred_fallthru
      _
    %p4003 = scmp.le.s32.totalorder 2, %s21
    // Predicated region
    $region85: #{fasttext_cnn_forward.1} parent=5 // pred_check
      %p4004 = pneg %p4003
    $region86: #{fasttext_cnn_forward.1} parent=5 // pred_check_branch
      %4006 = sbr.rel (%p4004) target = $region88
    $region87: #{fasttext_cnn_forward.1} parent=5 // pred_region
      %s4007 = ssub.s32 %s21, 2
      // Predicated region
      $region89: #{fasttext_cnn_forward.1} parent=87 // pred_check
        %p4008 = pneg %p370
      $region90: #{fasttext_cnn_forward.1} parent=87 // pred_check_branch
        %4010 = sbr.rel (%p4008) target = $region92
      $region91: #{fasttext_cnn_forward.1} parent=87 // pred_region
        %p4011 = scmp.lt.s32.totalorder %s27, 1
        %s4012 = scalar_select %p4011, %s27, 1
        %s4013 = smul.addr %s4012, 8
        %s4014 = scalar_lea.vmem %s15, %s4013
      $region92: #{fasttext_cnn_forward.1} parent=87 // pred_fallthru
        _
    $region88: #{fasttext_cnn_forward.1} parent=5 // pred_fallthru
      _
  $region6: #{fasttext_cnn_forward.1} parent=0 // loop_footer
    %s25 = sadd.s32 1, %s21
  $region7: #{fasttext_cnn_forward.1} parent=0 // loop_footer_branch
    %20 = sbr.rel target = $region3
  $region8: #{fasttext_cnn_forward.1} parent=0 // loop_exit
    _

</llo_original>
